<compile_context>
chip_gen: v7x
topology: tpu7x:2x2x1
jax: 0.10.0
libtpu: 0.0.40
codegen_flags: <defaults>
</compile_context>

<pallas_src>
import functools

import jax
import jax.numpy as jnp
from jax import lax
from jax.experimental import pallas as pl
from jax.experimental.pallas import tpu as pltpu

EPS = 1e-5


def _round_up(x, m):
    return ((x + m - 1) // m) * m


# ---------------------------------------------------------------------------
# Kernel A: 1x1 conv (channel matmul) + per-tile BN statistics (sum, sum-of-squares)
# ---------------------------------------------------------------------------
def _conv_stats_kernel(x_ref, w_ref, y_ref, s_ref):
    y = jnp.dot(x_ref[...], w_ref[...], preferred_element_type=jnp.float32)
    y_ref[...] = y
    s_ref[0] = jnp.concatenate(
        [jnp.sum(y, axis=0, keepdims=True),
         jnp.sum(y * y, axis=0, keepdims=True)], axis=0)


def conv1x1_stats(x2d, w, tm=512):
    M, Cin = x2d.shape
    Cout = w.shape[1]
    Mp = _round_up(M, tm)
    if Mp != M:
        # zero rows contribute 0 to both stats (no conv bias), so counts stay exact
        x2d = jnp.pad(x2d, ((0, Mp - M), (0, 0)))
    gm = Mp // tm
    y, stats = pl.pallas_call(
        _conv_stats_kernel,
        out_shape=(jax.ShapeDtypeStruct((Mp, Cout), jnp.float32),
                   jax.ShapeDtypeStruct((gm, 2, Cout), jnp.float32)),
        grid=(gm,),
        in_specs=[pl.BlockSpec((tm, Cin), lambda i: (i, 0)),
                  pl.BlockSpec((Cin, Cout), lambda i: (0, 0))],
        out_specs=(pl.BlockSpec((tm, Cout), lambda i: (i, 0)),
                   pl.BlockSpec((1, 2, Cout), lambda i: (i, 0, 0))),
        compiler_params=pltpu.CompilerParams(dimension_semantics=("parallel",)),
    )(x2d, w)
    return y[:M], jnp.sum(stats, axis=0)


# ---------------------------------------------------------------------------
# Kernel C: fused [BN+ReLU on load] -> 1x1 conv + per-tile BN statistics
# ---------------------------------------------------------------------------
def _bnrelu_conv_stats_kernel(x_ref, sc_ref, sh_ref, w_ref, y_ref, s_ref, *,
                              m_valid, tm):
    i = pl.program_id(0)
    a = jnp.maximum(x_ref[...] * sc_ref[0, :] + sh_ref[0, :], 0.0)
    rows = i * tm + lax.broadcasted_iota(jnp.int32, (tm, 1), 0)
    a = a * (rows < m_valid).astype(a.dtype)        # padded rows must not enter stats
    y = jnp.dot(a, w_ref[...], preferred_element_type=jnp.float32)
    y_ref[...] = y
    s_ref[0] = jnp.concatenate(
        [jnp.sum(y, axis=0, keepdims=True),
         jnp.sum(y * y, axis=0, keepdims=True)], axis=0)


def bnrelu_conv1x1_stats(x2d, scale, shift, w, tm=512):
    M, Cin = x2d.shape
    Cout = w.shape[1]
    Mp = _round_up(M, tm)
    if Mp != M:
        x2d = jnp.pad(x2d, ((0, Mp - M), (0, 0)))
    gm = Mp // tm
    y, stats = pl.pallas_call(
        functools.partial(_bnrelu_conv_stats_kernel, m_valid=M, tm=tm),
        out_shape=(jax.ShapeDtypeStruct((Mp, Cout), jnp.float32),
                   jax.ShapeDtypeStruct((gm, 2, Cout), jnp.float32)),
        grid=(gm,),
        in_specs=[pl.BlockSpec((tm, Cin), lambda i: (i, 0)),
                  pl.BlockSpec((1, Cin), lambda i: (0, 0)),
                  pl.BlockSpec((1, Cin), lambda i: (0, 0)),
                  pl.BlockSpec((Cin, Cout), lambda i: (0, 0))],
        out_specs=(pl.BlockSpec((tm, Cout), lambda i: (i, 0)),
                   pl.BlockSpec((1, 2, Cout), lambda i: (i, 0, 0))),
        compiler_params=pltpu.CompilerParams(dimension_semantics=("parallel",)),
    )(x2d, scale.reshape(1, Cin), shift.reshape(1, Cin), w)
    return y, jnp.sum(stats, axis=0)        # y is returned still row-padded to Mp


# ---------------------------------------------------------------------------
# Kernel D: BN+ReLU apply (tiled elementwise, parallel grid)
# ---------------------------------------------------------------------------
def _bn_relu_apply_kernel(x_ref, sc_ref, sh_ref, o_ref):
    o_ref[...] = jnp.maximum(x_ref[...] * sc_ref[0, :] + sh_ref[0, :], 0.0)


def bn_relu_apply(x2d, scale, shift, tm=512):
    M, C = x2d.shape
    Mp = _round_up(M, tm)
    if Mp != M:
        x2d = jnp.pad(x2d, ((0, Mp - M), (0, 0)))
    gm = Mp // tm
    y = pl.pallas_call(
        _bn_relu_apply_kernel,
        out_shape=jax.ShapeDtypeStruct((Mp, C), jnp.float32),
        grid=(gm,),
        in_specs=[pl.BlockSpec((tm, C), lambda i: (i, 0)),
                  pl.BlockSpec((1, C), lambda i: (0, 0)),
                  pl.BlockSpec((1, C), lambda i: (0, 0))],
        out_specs=pl.BlockSpec((tm, C), lambda i: (i, 0)),
        compiler_params=pltpu.CompilerParams(dimension_semantics=("parallel",)),
    )(x2d, scale.reshape(1, C), shift.reshape(1, C))
    return y[:M]


# ---------------------------------------------------------------------------
# Kernel B: fused [BN+ReLU on load] -> 4-phase ConvTranspose2d(k3,s2,p1,op1)
#           + per-tile BN statistics.  Works on the UN-dilated input; each grid
#           step consumes TILE_H input rows (+1 halo row) and produces the four
#           output parity planes for 2*TILE_H output rows, phase-packed along
#           channels: [ (0,0) | (0,1) | (1,0) | (1,1) ].
# ---------------------------------------------------------------------------
def _deconv4_kernel(x_ref, halo_ref, sc_ref, sh_ref, w_ref, y_ref, s_ref, *,
                    tile_h, h_valid, width, cin, co4):
    th = pl.program_id(1)
    sc = sc_ref[...].reshape(1, 1, cin)
    sh = sh_ref[...].reshape(1, 1, cin)

    # previous layer's BN+ReLU applied on load; rows >= H are padding -> force 0
    cur = jnp.maximum(x_ref[0] * sc + sh, 0.0)                       # (tile_h, W, Cin)
    row_g = th * tile_h + lax.broadcasted_iota(jnp.int32, (tile_h, 1, 1), 0)
    cur = cur * (row_g < h_valid).astype(jnp.float32)
    halo = jnp.maximum(halo_ref[0] * sc + sh, 0.0)                   # (1, W, Cin)
    halo = halo * ((th + 1) * tile_h < h_valid).astype(jnp.float32)

    nxt = jnp.concatenate([cur[1:], halo], axis=0)                   # x[r+1, s]
    zcol = jnp.zeros((tile_h, 1, cin), jnp.float32)
    x01 = jnp.concatenate([cur[:, 1:], zcol], axis=1)                # x[r,   s+1]
    x11 = jnp.concatenate([nxt[:, 1:], zcol], axis=1)                # x[r+1, s+1]

    acc = jnp.zeros((tile_h * width, co4), jnp.float32)
    for k, tap in enumerate((cur, x01, nxt, x11)):                   # tap order matches w_ref
        acc = acc + jnp.dot(tap.reshape(tile_h * width, cin), w_ref[k],
                            preferred_element_type=jnp.float32)
    y_ref[0] = acc.reshape(tile_h, width, co4)
    s_ref[0, 0] = jnp.concatenate(
        [jnp.sum(acc, axis=0, keepdims=True),
         jnp.sum(acc * acc, axis=0, keepdims=True)], axis=0)


def deconv4_phase(x_img, w_taps, scale, shift, tile_h=8):
    """x_img: (N, H, W, Cin) raw conv1 output; w_taps: (4, Cin, 4*Cout)."""
    N, H, W, Cin = x_img.shape
    co4 = w_taps.shape[2]
    n_th = -(-H // tile_h)
    hp = n_th * tile_h
    xe = jnp.pad(x_img, ((0, 0), (0, hp - H + 1), (0, 0), (0, 0)))
    halo = xe[:, tile_h::tile_h]                                     # (N, n_th, W, Cin)
    x_main = xe[:, :hp]                                              # (N, hp,  W, Cin)
    y, stats = pl.pallas_call(
        functools.partial(_deconv4_kernel, tile_h=tile_h, h_valid=H,
                          width=W, cin=Cin, co4=co4),
        out_shape=(jax.ShapeDtypeStruct((N, hp, W, co4), jnp.float32),
                   jax.ShapeDtypeStruct((N, n_th, 2, co4), jnp.float32)),
        grid=(N, n_th),
        in_specs=[
            pl.BlockSpec((1, tile_h, W, Cin), lambda n, t: (n, t, 0, 0)),
            pl.BlockSpec((1, 1, W, Cin), lambda n, t: (n, t, 0, 0)),
            pl.BlockSpec((1, Cin), lambda n, t: (0, 0)),
            pl.BlockSpec((1, Cin), lambda n, t: (0, 0)),
            pl.BlockSpec((4, Cin, co4), lambda n, t: (0, 0, 0)),
        ],
        out_specs=(pl.BlockSpec((1, tile_h, W, co4), lambda n, t: (n, t, 0, 0)),
                   pl.BlockSpec((1, 1, 2, co4), lambda n, t: (n, t, 0, 0))),
        compiler_params=pltpu.CompilerParams(
            dimension_semantics=("parallel", "parallel")),
    )(x_main, halo, scale.reshape(1, Cin), shift.reshape(1, Cin), w_taps)
    return y[:, :H], jnp.sum(stats, axis=(0, 1))          # (N,H,W,4*Co), (2, 4*Co)


def build_deconv_tap_weights(wt):
    """PyTorch ConvTranspose2d weight (Cin, Cout, 3, 3) -> (4 taps, Cin, 4*Cout).

    Taps index x[r,s], x[r,s+1], x[r+1,s], x[r+1,s+1]; the 4*Cout columns hold the
    output parity phases [(dy,dx)=(0,0) | (0,1) | (1,0) | (1,1)].
    """
    cin, cout = wt.shape[0], wt.shape[1]
    wc = jnp.transpose(wt[:, :, ::-1, ::-1], (2, 3, 0, 1))   # equivalent fwd-conv taps
    z = jnp.zeros((cin, cout), wt.dtype)
    tap0 = jnp.concatenate([wc[1, 1], wc[1, 0], wc[0, 1], wc[0, 0]], axis=1)
    tap1 = jnp.concatenate([z,        wc[1, 2], z,        wc[0, 2]], axis=1)
    tap2 = jnp.concatenate([z,        z,        wc[2, 1], wc[2, 0]], axis=1)
    tap3 = jnp.concatenate([z,        z,        z,        wc[2, 2]], axis=1)
    return jnp.stack([tap0, tap1, tap2, tap3], axis=0)


def finalize_bn(sums, count, gamma, beta):
    mean = sums[0] / count
    var = jnp.maximum(sums[1] / count - mean * mean, 0.0)   # biased batch variance
    scale = gamma * lax.rsqrt(var + EPS)
    shift = beta - mean * scale
    return scale, shift


# ---------------------------------------------------------------------------
# Parameters + full forward
# ---------------------------------------------------------------------------
def init_params(key, in_channels, out_channels):
    mid = in_channels // 4
    k = jax.random.split(key, 6)
    p = {}
    p["w1"] = 0.1 * jax.random.normal(k[0], (in_channels, mid), jnp.float32)
    p["b1"] = 0.1 * jax.random.normal(k[1], (mid,), jnp.float32)
    p["g1"] = jnp.ones((mid,), jnp.float32)
    p["be1"] = jnp.zeros((mid,), jnp.float32)
    p["wt"] = 0.1 * jax.random.normal(k[2], (mid, mid, 3, 3), jnp.float32)  # (Cin,Cout,3,3)
    p["bt"] = 0.1 * jax.random.normal(k[3], (mid,), jnp.float32)
    p["gt"] = jnp.ones((mid,), jnp.float32)
    p["bet"] = jnp.zeros((mid,), jnp.float32)
    p["w2"] = 0.1 * jax.random.normal(k[4], (mid, out_channels), jnp.float32)
    p["b2"] = 0.1 * jax.random.normal(k[5], (out_channels,), jnp.float32)
    p["g2"] = jnp.ones((out_channels,), jnp.float32)
    p["be2"] = jnp.zeros((out_channels,), jnp.float32)
    return p


def deconv_block(x_nchw, p, tm=512, tile_h=8):
    N, Cin, H, W = x_nchw.shape
    Cmid = p["w1"].shape[1]
    Cout = p["w2"].shape[1]
    x2d = jnp.transpose(x_nchw, (0, 2, 3, 1)).reshape(N * H * W, Cin)

    # conv1 (1x1; bias cancelled by BN) + batch stats
    y1, s1 = conv1x1_stats(x2d, p["w1"], tm=tm)
    scale1, shift1 = finalize_bn(s1, N * H * W, p["g1"], p["be1"])

    # [BN1+ReLU on load] -> 4-phase transposed conv + batch stats
    w_taps = build_deconv_tap_weights(p["wt"])
    y2, s2 = deconv4_phase(y1.reshape(N, H, W, Cmid), w_taps, scale1, shift1,
                           tile_h=tile_h)
    s2 = jnp.sum(s2.reshape(2, 4, Cmid), axis=1)             # merge the 4 phases
    scale_t, shift_t = finalize_bn(s2, 4 * N * H * W, p["gt"], p["bet"])

    # [BNt+ReLU on load] -> conv2 (1x1) + batch stats.  The phase-packed (N,H,W,4*Cmid)
    # tensor is viewed as (N*H*W*4, Cmid): every row is one output pixel, so the 1x1
    # conv and both BNs are plain per-row ops in this layout.
    M2 = N * H * W * 4
    y3, s3 = bnrelu_conv1x1_stats(y2.reshape(M2, Cmid), scale_t, shift_t, p["w2"], tm=tm)
    scale2, shift2 = finalize_bn(s3, M2, p["g2"], p["be2"])

    # final BN2 + ReLU apply
    y4 = bn_relu_apply(y3, scale2, shift2, tm=tm)[:M2]

    # (N,H,W,dy,dx,C) -> NCHW (N,C,2H,2W): the parity interleave is folded into the
    # single final transpose done by XLA.
    y4 = y4.reshape(N, H, W, 2, 2, Cout)
    return jnp.transpose(y4, (0, 5, 1, 3, 2, 4)).reshape(N, Cout, 2 * H, 2 * W)


# ---------------------------------------------------------------------------
# Pure-JAX reference (faithful to the PyTorch module, incl. conv biases)
# ---------------------------------------------------------------------------
def _bn_relu_ref(x, g, b):
    mean = x.mean(axis=(0, 1, 2), keepdims=True)
    var = ((x - mean) ** 2).mean(axis=(0, 1, 2), keepdims=True)
    return jnp.maximum((x - mean) * lax.rsqrt(var + EPS) * g + b, 0.0)


def deconv_block_ref(x_nchw, p):
    x = jnp.transpose(x_nchw, (0, 2, 3, 1))
    y = jnp.einsum("nhwc,cd->nhwd", x, p["w1"]) + p["b1"]
    y = _bn_relu_ref(y, p["g1"], p["be1"])
    w_conv = jnp.transpose(p["wt"][:, :, ::-1, ::-1], (2, 3, 0, 1))   # HWIO
    y = lax.conv_general_dilated(
        y, w_conv, window_strides=(1, 1), padding=((1, 2), (1, 2)),
        lhs_dilation=(2, 2), dimension_numbers=("NHWC", "HWIO", "NHWC")) + p["bt"]
    y = _bn_relu_ref(y, p["gt"], p["bet"])
    y = jnp.einsum("nhwc,cd->nhwd", y, p["w2"]) + p["b2"]
    y = _bn_relu_ref(y, p["g2"], p["be2"])
    return jnp.transpose(y, (0, 3, 1, 2))


if __name__ == "__main__":
    key = jax.random.PRNGKey(0)
    kx, kp = jax.random.split(key)
    in_channels, out_channels = 16, 8
    N, H, W = 2, 16, 16

    x = jax.random.normal(kx, (N, in_channels, H, W), jnp.float32)
    params = init_params(kp, in_channels, out_channels)

    fwd = jax.jit(deconv_block)
    out = jax.block_until_ready(fwd(x, params))
    assert out.shape == (N, out_channels, 2 * H, 2 * W), out.shape

    ref = deconv_block_ref(x, params)
    err = float(jnp.max(jnp.abs(out - ref)))
    assert jnp.allclose(out, ref, atol=2e-3, rtol=2e-3), err

    print("KERNEL_OK")
</pallas_src>

<mosaic_0001>
module attributes {stable_mosaic.version = 11 : i64} {
  func.func @_conv_stats_kernel(%arg0: i32, %arg1: memref<512x16xf32, #tpu.memory_space<vmem>>, %arg2: memref<16x4xf32, #tpu.memory_space<vmem>>, %arg3: memref<512x4xf32, #tpu.memory_space<vmem>>, %arg4: memref<1x2x4xf32, #tpu.memory_space<vmem>>) attributes {dimension_semantics = [#tpu.dimension_semantics<parallel>], iteration_bounds = array<i64: 1>, scalar_prefetch = 0 : i64, scratch_operands = 0 : i64, tpu.core_type = #tpu.core_type<tc>, window_params = [{transform_indices = @transform_0, window_bounds = array<i64: 512, 16>}, {pipeline_mode = #tpu.pipeline_mode<synchronous>, transform_indices = @transform_1, window_bounds = array<i64: 16, 4>}, {transform_indices = @transform_2, window_bounds = array<i64: 512, 4>}, {transform_indices = @transform_3, window_bounds = array<i64: 1, 2, 4>}]} {
    %c0 = arith.constant 0 : index
    %c0_0 = arith.constant 0 : index
    %0 = vector.load %arg1[%c0, %c0_0] : memref<512x16xf32, #tpu.memory_space<vmem>>, vector<512x16xf32>
    %c0_1 = arith.constant 0 : index
    %c0_2 = arith.constant 0 : index
    %1 = vector.load %arg2[%c0_1, %c0_2] : memref<16x4xf32, #tpu.memory_space<vmem>>, vector<16x4xf32>
    %cst = arith.constant dense<0.000000e+00> : vector<512x4xf32>
    %2 = tpu.matmul %0, %1, %cst {dimension_numbers = #tpu.dot_dimension_numbers<[1], [0], [0], [1], [0, 0, 1, 1], [], []>} : vector<512x16xf32>, vector<16x4xf32>, vector<512x4xf32> -> vector<512x4xf32>
    %c0_3 = arith.constant 0 : index
    %c0_4 = arith.constant 0 : index
    %3 = vector.load %arg3[%c0_3, %c0_4] : memref<512x4xf32, #tpu.memory_space<vmem>>, vector<512x4xf32>
    tpu.vector_store %arg3[%c0_3, %c0_4], %2 {strides = array<i32>} : memref<512x4xf32, #tpu.memory_space<vmem>>, vector<512x4xf32>,
    %cst_5 = arith.constant dense<0.000000e+00> : vector<4xf32>
    %4 = vector.multi_reduction <add>, %2, %cst_5 [0] : vector<512x4xf32> to vector<4xf32>
    %5 = vector.shape_cast %4 : vector<4xf32> to vector<1x4xf32>
    %6 = arith.mulf %2, %2 : vector<512x4xf32>
    %cst_6 = arith.constant dense<0.000000e+00> : vector<4xf32>
    %7 = vector.multi_reduction <add>, %6, %cst_6 [0] : vector<512x4xf32> to vector<4xf32>
    %8 = vector.shape_cast %7 : vector<4xf32> to vector<1x4xf32>
    %9 = tpu.concatenate %5, %8 in 0 : vector<1x4xf32>, vector<1x4xf32> -> vector<2x4xf32>
    %c0_7 = arith.constant 0 : index
    %c0_8 = arith.constant 0 : index
    %c0_9 = arith.constant 0 : index
    %10 = vector.load %arg4[%c0_7, %c0_8, %c0_9] : memref<1x2x4xf32, #tpu.memory_space<vmem>>, vector<1x2x4xf32>
    %11 = vector.shape_cast %10 : vector<1x2x4xf32> to vector<2x4xf32>
    %12 = vector.shape_cast %9 : vector<2x4xf32> to vector<1x2x4xf32>
    tpu.vector_store %arg4[%c0_7, %c0_8, %c0_9], %12 {strides = array<i32>} : memref<1x2x4xf32, #tpu.memory_space<vmem>>, vector<1x2x4xf32>,
    return
  }
  func.func @transform_0(%arg0: i32) -> (i32, i32) {
    %c0_i32 = arith.constant 0 : i32
    %c0_i32_0 = arith.constant 0 : i32
    return %arg0, %c0_i32 : i32, i32
  }
  func.func @transform_1(%arg0: i32) -> (i32, i32) {
    %c0_i32 = arith.constant 0 : i32
    %c0_i32_0 = arith.constant 0 : i32
    %c0_i32_1 = arith.constant 0 : i32
    return %c0_i32, %c0_i32_0 : i32, i32
  }
  func.func @transform_2(%arg0: i32) -> (i32, i32) {
    %c0_i32 = arith.constant 0 : i32
    %c0_i32_0 = arith.constant 0 : i32
    return %arg0, %c0_i32 : i32, i32
  }
  func.func @transform_3(%arg0: i32) -> (i32, i32, i32) {
    %c0_i32 = arith.constant 0 : i32
    %c0_i32_0 = arith.constant 0 : i32
    %c0_i32_1 = arith.constant 0 : i32
    return %arg0, %c0_i32, %c0_i32_0 : i32, i32, i32
  }
}

module attributes {stable_mosaic.version = 11 : i64} {
  func.func @_deconv4_kernel(%arg0: i32, %arg1: i32, %arg2: memref<1x8x16x4xf32, #tpu.memory_space<vmem>>, %arg3: memref<1x1x16x4xf32, #tpu.memory_space<vmem>>, %arg4: memref<1x4xf32, #tpu.memory_space<vmem>>, %arg5: memref<1x4xf32, #tpu.memory_space<vmem>>, %arg6: memref<4x4x16xf32, #tpu.memory_space<vmem>>, %arg7: memref<1x8x16x16xf32, #tpu.memory_space<vmem>>, %arg8: memref<1x1x2x16xf32, #tpu.memory_space<vmem>>) attributes {dimension_semantics = [#tpu.dimension_semantics<parallel>, #tpu.dimension_semantics<parallel>], iteration_bounds = array<i64: 2, 2>, scalar_prefetch = 0 : i64, scratch_operands = 0 : i64, tpu.core_type = #tpu.core_type<tc>, window_params = [{transform_indices = @transform_0, window_bounds = array<i64: 1, 8, 16, 4>}, {transform_indices = @transform_1, window_bounds = array<i64: 1, 1, 16, 4>}, {pipeline_mode = #tpu.pipeline_mode<synchronous>, transform_indices = @transform_2, window_bounds = array<i64: 1, 4>}, {pipeline_mode = #tpu.pipeline_mode<synchronous>, transform_indices = @transform_3, window_bounds = array<i64: 1, 4>}, {pipeline_mode = #tpu.pipeline_mode<synchronous>, transform_indices = @transform_4, window_bounds = array<i64: 4, 4, 16>}, {transform_indices = @transform_5, window_bounds = array<i64: 1, 8, 16, 16>}, {transform_indices = @transform_6, window_bounds = array<i64: 1, 1, 2, 16>}]} {
    %c0 = arith.constant 0 : index
    %c0_0 = arith.constant 0 : index
    %0 = vector.load %arg4[%c0, %c0_0] : memref<1x4xf32, #tpu.memory_space<vmem>>, vector<1x4xf32>
    %1 = vector.shape_cast %0 : vector<1x4xf32> to vector<1x1x4xf32>
    %c0_1 = arith.constant 0 : index
    %c0_2 = arith.constant 0 : index
    %2 = vector.load %arg5[%c0_1, %c0_2] : memref<1x4xf32, #tpu.memory_space<vmem>>, vector<1x4xf32>
    %3 = vector.shape_cast %2 : vector<1x4xf32> to vector<1x1x4xf32>
    %c0_3 = arith.constant 0 : index
    %c0_4 = arith.constant 0 : index
    %c0_5 = arith.constant 0 : index
    %c0_6 = arith.constant 0 : index
    %4 = vector.load %arg2[%c0_3, %c0_4, %c0_5, %c0_6] : memref<1x8x16x4xf32, #tpu.memory_space<vmem>>, vector<1x8x16x4xf32>
    %5 = vector.shape_cast %4 : vector<1x8x16x4xf32> to vector<8x16x4xf32>
    %6 = vector.broadcast %1 : vector<1x1x4xf32> to vector<8x16x4xf32>
    %7 = arith.mulf %5, %6 : vector<8x16x4xf32>
    %8 = vector.broadcast %3 : vector<1x1x4xf32> to vector<8x16x4xf32>
    %9 = arith.addf %7, %8 : vector<8x16x4xf32>
    %cst = arith.constant 0.000000e+00 : f32
    %10 = vector.broadcast %cst : f32 to vector<8x16x4xf32>
    %11 = arith.maximumf %9, %10 : vector<8x16x4xf32>
    %c8_i32 = arith.constant 8 : i32
    %12 = arith.muli %arg1, %c8_i32 : i32
    %13 = tpu.iota {dimensions = array<i32: 0>} : vector<8x1x1xi32>
    %14 = vector.broadcast %12 : i32 to vector<8x1x1xi32>
    %15 = arith.addi %14, %13 : vector<8x1x1xi32>
    %c16_i32 = arith.constant 16 : i32
    %16 = vector.broadcast %c16_i32 : i32 to vector<8x1x1xi32>
    %17 = arith.cmpi slt, %15, %16 : vector<8x1x1xi32>
    %18 = arith.extui %17 : vector<8x1x1xi1> to vector<8x1x1xi32>
    %19 = arith.sitofp %18 : vector<8x1x1xi32> to vector<8x1x1xf32>
    %20 = vector.broadcast %19 : vector<8x1x1xf32> to vector<8x16x4xf32>
    %21 = arith.mulf %11, %20 : vector<8x16x4xf32>
    %c0_7 = arith.constant 0 : index
    %c0_8 = arith.constant 0 : index
    %c0_9 = arith.constant 0 : index
    %c0_10 = arith.constant 0 : index
    %22 = vector.load %arg3[%c0_7, %c0_8, %c0_9, %c0_10] : memref<1x1x16x4xf32, #tpu.memory_space<vmem>>, vector<1x1x16x4xf32>
    %23 = vector.shape_cast %22 : vector<1x1x16x4xf32> to vector<1x16x4xf32>
    %24 = vector.broadcast %1 : vector<1x1x4xf32> to vector<1x16x4xf32>
    %25 = arith.mulf %23, %24 : vector<1x16x4xf32>
    %26 = vector.broadcast %3 : vector<1x1x4xf32> to vector<1x16x4xf32>
    %27 = arith.addf %25, %26 : vector<1x16x4xf32>
    %cst_11 = arith.constant 0.000000e+00 : f32
    %28 = vector.broadcast %cst_11 : f32 to vector<1x16x4xf32>
    %29 = arith.maximumf %27, %28 : vector<1x16x4xf32>
    %c1_i32 = arith.constant 1 : i32
    %30 = arith.addi %arg1, %c1_i32 : i32
    %c8_i32_12 = arith.constant 8 : i32
    %31 = arith.muli %30, %c8_i32_12 : i32
    %c16_i32_13 = arith.constant 16 : i32
    %32 = arith.cmpi slt, %31, %c16_i32_13 : i32
    %33 = arith.extui %32 : i1 to i32
    %34 = arith.sitofp %33 : i32 to f32
    %35 = vector.broadcast %34 : f32 to vector<1x16x4xf32>
    %36 = arith.mulf %29, %35 : vector<1x16x4xf32>
    %37 = vector.extract_strided_slice %21 {offsets = [1, 0, 0], sizes = [7, 16, 4], strides = [1, 1, 1]} : vector<8x16x4xf32> to vector<7x16x4xf32>
    %38 = tpu.concatenate %37, %36 in 0 : vector<7x16x4xf32>, vector<1x16x4xf32> -> vector<8x16x4xf32>
    %cst_14 = arith.constant 0.000000e+00 : f32
    %39 = vector.broadcast %cst_14 : f32 to vector<8x1x4xf32>
    %40 = vector.extract_strided_slice %21 {offsets = [0, 1, 0], sizes = [8, 15, 4], strides = [1, 1, 1]} : vector<8x16x4xf32> to vector<8x15x4xf32>
    %41 = tpu.concatenate %40, %39 in 1 : vector<8x15x4xf32>, vector<8x1x4xf32> -> vector<8x16x4xf32>
    %42 = vector.extract_strided_slice %38 {offsets = [0, 1, 0], sizes = [8, 15, 4], strides = [1, 1, 1]} : vector<8x16x4xf32> to vector<8x15x4xf32>
    %43 = tpu.concatenate %42, %39 in 1 : vector<8x15x4xf32>, vector<8x1x4xf32> -> vector<8x16x4xf32>
    %cst_15 = arith.constant 0.000000e+00 : f32
    %44 = vector.broadcast %cst_15 : f32 to vector<128x16xf32>
    %45 = vector.shape_cast %21 : vector<8x16x4xf32> to vector<128x4xf32>
    %c0_16 = arith.constant 0 : index
    %c0_17 = arith.constant 0 : index
    %c0_18 = arith.constant 0 : index
    %46 = vector.load %arg6[%c0_16, %c0_17, %c0_18] : memref<4x4x16xf32, #tpu.memory_space<vmem>>, vector<1x4x16xf32>
    %47 = vector.shape_cast %46 : vector<1x4x16xf32> to vector<4x16xf32>
    %cst_19 = arith.constant dense<0.000000e+00> : vector<128x16xf32>
    %48 = tpu.matmul %45, %47, %cst_19 {dimension_numbers = #tpu.dot_dimension_numbers<[1], [0], [0], [1], [0, 0, 1, 1], [], []>} : vector<128x4xf32>, vector<4x16xf32>, vector<128x16xf32> -> vector<128x16xf32>
    %49 = arith.addf %44, %48 : vector<128x16xf32>
    %50 = vector.shape_cast %41 : vector<8x16x4xf32> to vector<128x4xf32>
    %c1 = arith.constant 1 : index
    %c0_20 = arith.constant 0 : index
    %c0_21 = arith.constant 0 : index
    %51 = vector.load %arg6[%c1, %c0_20, %c0_21] : memref<4x4x16xf32, #tpu.memory_space<vmem>>, vector<1x4x16xf32>
    %52 = vector.shape_cast %51 : vector<1x4x16xf32> to vector<4x16xf32>
    %cst_22 = arith.constant dense<0.000000e+00> : vector<128x16xf32>
    %53 = tpu.matmul %50, %52, %cst_22 {dimension_numbers = #tpu.dot_dimension_numbers<[1], [0], [0], [1], [0, 0, 1, 1], [], []>} : vector<128x4xf32>, vector<4x16xf32>, vector<128x16xf32> -> vector<128x16xf32>
    %54 = arith.addf %49, %53 : vector<128x16xf32>
    %55 = vector.shape_cast %38 : vector<8x16x4xf32> to vector<128x4xf32>
    %c2 = arith.constant 2 : index
    %c0_23 = arith.constant 0 : index
    %c0_24 = arith.constant 0 : index
    %56 = vector.load %arg6[%c2, %c0_23, %c0_24] : memref<4x4x16xf32, #tpu.memory_space<vmem>>, vector<1x4x16xf32>
    %57 = vector.shape_cast %56 : vector<1x4x16xf32> to vector<4x16xf32>
    %cst_25 = arith.constant dense<0.000000e+00> : vector<128x16xf32>
    %58 = tpu.matmul %55, %57, %cst_25 {dimension_numbers = #tpu.dot_dimension_numbers<[1], [0], [0], [1], [0, 0, 1, 1], [], []>} : vector<128x4xf32>, vector<4x16xf32>, vector<128x16xf32> -> vector<128x16xf32>
    %59 = arith.addf %54, %58 : vector<128x16xf32>
    %60 = vector.shape_cast %43 : vector<8x16x4xf32> to vector<128x4xf32>
    %c3 = arith.constant 3 : index
    %c0_26 = arith.constant 0 : index
    %c0_27 = arith.constant 0 : index
    %61 = vector.load %arg6[%c3, %c0_26, %c0_27] : memref<4x4x16xf32, #tpu.memory_space<vmem>>, vector<1x4x16xf32>
    %62 = vector.shape_cast %61 : vector<1x4x16xf32> to vector<4x16xf32>
    %cst_28 = arith.constant dense<0.000000e+00> : vector<128x16xf32>
    %63 = tpu.matmul %60, %62, %cst_28 {dimension_numbers = #tpu.dot_dimension_numbers<[1], [0], [0], [1], [0, 0, 1, 1], [], []>} : vector<128x4xf32>, vector<4x16xf32>, vector<128x16xf32> -> vector<128x16xf32>
    %64 = arith.addf %59, %63 : vector<128x16xf32>
    %65 = vector.shape_cast %64 : vector<128x16xf32> to vector<8x16x16xf32>
    %c0_29 = arith.constant 0 : index
    %c0_30 = arith.constant 0 : index
    %c0_31 = arith.constant 0 : index
    %c0_32 = arith.constant 0 : index
    %66 = vector.load %arg7[%c0_29, %c0_30, %c0_31, %c0_32] : memref<1x8x16x16xf32, #tpu.memory_space<vmem>>, vector<1x8x16x16xf32>
    %67 = vector.shape_cast %66 : vector<1x8x16x16xf32> to vector<8x16x16xf32>
    %68 = vector.shape_cast %65 : vector<8x16x16xf32> to vector<1x8x16x16xf32>
    tpu.vector_store %arg7[%c0_29, %c0_30, %c0_31, %c0_32], %68 {strides = array<i32>} : memref<1x8x16x16xf32, #tpu.memory_space<vmem>>, vector<1x8x16x16xf32>,
    %cst_33 = arith.constant dense<0.000000e+00> : vector<16xf32>
    %69 = vector.multi_reduction <add>, %64, %cst_33 [0] : vector<128x16xf32> to vector<16xf32>
    %70 = vector.shape_cast %69 : vector<16xf32> to vector<1x16xf32>
    %71 = arith.mulf %64, %64 : vector<128x16xf32>
    %cst_34 = arith.constant dense<0.000000e+00> : vector<16xf32>
    %72 = vector.multi_reduction <add>, %71, %cst_34 [0] : vector<128x16xf32> to vector<16xf32>
    %73 = vector.shape_cast %72 : vector<16xf32> to vector<1x16xf32>
    %74 = tpu.concatenate %70, %73 in 0 : vector<1x16xf32>, vector<1x16xf32> -> vector<2x16xf32>
    %c0_35 = arith.constant 0 : index
    %c0_36 = arith.constant 0 : index
    %c0_37 = arith.constant 0 : index
    %c0_38 = arith.constant 0 : index
    %75 = vector.load %arg8[%c0_35, %c0_36, %c0_37, %c0_38] : memref<1x1x2x16xf32, #tpu.memory_space<vmem>>, vector<1x1x2x16xf32>
    %76 = vector.shape_cast %75 : vector<1x1x2x16xf32> to vector<2x16xf32>
    %77 = vector.shape_cast %74 : vector<2x16xf32> to vector<1x1x2x16xf32>
    tpu.vector_store %arg8[%c0_35, %c0_36, %c0_37, %c0_38], %77 {strides = array<i32>} : memref<1x1x2x16xf32, #tpu.memory_space<vmem>>, vector<1x1x2x16xf32>,
    return
  }
  func.func @transform_0(%arg0: i32, %arg1: i32) -> (i32, i32, i32, i32) {
    %c0_i32 = arith.constant 0 : i32
    %c0_i32_0 = arith.constant 0 : i32
    %c0_i32_1 = arith.constant 0 : i32
    return %arg0, %arg1, %c0_i32, %c0_i32_0 : i32, i32, i32, i32
  }
  func.func @transform_1(%arg0: i32, %arg1: i32) -> (i32, i32, i32, i32) {
    %c0_i32 = arith.constant 0 : i32
    %c0_i32_0 = arith.constant 0 : i32
    %c0_i32_1 = arith.constant 0 : i32
    return %arg0, %arg1, %c0_i32, %c0_i32_0 : i32, i32, i32, i32
  }
  func.func @transform_2(%arg0: i32, %arg1: i32) -> (i32, i32) {
    %c0_i32 = arith.constant 0 : i32
    %c0_i32_0 = arith.constant 0 : i32
    %c0_i32_1 = arith.constant 0 : i32
    return %c0_i32, %c0_i32_0 : i32, i32
  }
  func.func @transform_3(%arg0: i32, %arg1: i32) -> (i32, i32) {
    %c0_i32 = arith.constant 0 : i32
    %c0_i32_0 = arith.constant 0 : i32
    %c0_i32_1 = arith.constant 0 : i32
    return %c0_i32, %c0_i32_0 : i32, i32
  }
  func.func @transform_4(%arg0: i32, %arg1: i32) -> (i32, i32, i32) {
    %c0_i32 = arith.constant 0 : i32
    %c0_i32_0 = arith.constant 0 : i32
    %c0_i32_1 = arith.constant 0 : i32
    %c0_i32_2 = arith.constant 0 : i32
    return %c0_i32, %c0_i32_0, %c0_i32_1 : i32, i32, i32
  }
  func.func @transform_5(%arg0: i32, %arg1: i32) -> (i32, i32, i32, i32) {
    %c0_i32 = arith.constant 0 : i32
    %c0_i32_0 = arith.constant 0 : i32
    %c0_i32_1 = arith.constant 0 : i32
    return %arg0, %arg1, %c0_i32, %c0_i32_0 : i32, i32, i32, i32
  }
  func.func @transform_6(%arg0: i32, %arg1: i32) -> (i32, i32, i32, i32) {
    %c0_i32 = arith.constant 0 : i32
    %c0_i32_0 = arith.constant 0 : i32
    %c0_i32_1 = arith.constant 0 : i32
    return %arg0, %arg1, %c0_i32, %c0_i32_0 : i32, i32, i32, i32
  }
}

module attributes {stable_mosaic.version = 11 : i64} {
  func.func @_bnrelu_conv_stats_kernel(%arg0: i32, %arg1: memref<512x4xf32, #tpu.memory_space<vmem>>, %arg2: memref<1x4xf32, #tpu.memory_space<vmem>>, %arg3: memref<1x4xf32, #tpu.memory_space<vmem>>, %arg4: memref<4x8xf32, #tpu.memory_space<vmem>>, %arg5: memref<512x8xf32, #tpu.memory_space<vmem>>, %arg6: memref<1x2x8xf32, #tpu.memory_space<vmem>>) attributes {dimension_semantics = [#tpu.dimension_semantics<parallel>], iteration_bounds = array<i64: 4>, scalar_prefetch = 0 : i64, scratch_operands = 0 : i64, tpu.core_type = #tpu.core_type<tc>, window_params = [{transform_indices = @transform_0, window_bounds = array<i64: 512, 4>}, {pipeline_mode = #tpu.pipeline_mode<synchronous>, transform_indices = @transform_1, window_bounds = array<i64: 1, 4>}, {pipeline_mode = #tpu.pipeline_mode<synchronous>, transform_indices = @transform_2, window_bounds = array<i64: 1, 4>}, {pipeline_mode = #tpu.pipeline_mode<synchronous>, transform_indices = @transform_3, window_bounds = array<i64: 4, 8>}, {transform_indices = @transform_4, window_bounds = array<i64: 512, 8>}, {transform_indices = @transform_5, window_bounds = array<i64: 1, 2, 8>}]} {
    %c0 = arith.constant 0 : index
    %c0_0 = arith.constant 0 : index
    %0 = vector.load %arg1[%c0, %c0_0] : memref<512x4xf32, #tpu.memory_space<vmem>>, vector<512x4xf32>
    %c0_1 = arith.constant 0 : index
    %c0_2 = arith.constant 0 : index
    %1 = vector.load %arg2[%c0_1, %c0_2] : memref<1x4xf32, #tpu.memory_space<vmem>>, vector<1x4xf32>
    %2 = vector.shape_cast %1 : vector<1x4xf32> to vector<4xf32>
    %3 = vector.shape_cast %2 : vector<4xf32> to vector<1x4xf32>
    %4 = vector.broadcast %3 : vector<1x4xf32> to vector<512x4xf32>
    %5 = arith.mulf %0, %4 : vector<512x4xf32>
    %c0_3 = arith.constant 0 : index
    %c0_4 = arith.constant 0 : index
    %6 = vector.load %arg3[%c0_3, %c0_4] : memref<1x4xf32, #tpu.memory_space<vmem>>, vector<1x4xf32>
    %7 = vector.shape_cast %6 : vector<1x4xf32> to vector<4xf32>
    %8 = vector.shape_cast %7 : vector<4xf32> to vector<1x4xf32>
    %9 = vector.broadcast %8 : vector<1x4xf32> to vector<512x4xf32>
    %10 = arith.addf %5, %9 : vector<512x4xf32>
    %cst = arith.constant 0.000000e+00 : f32
    %11 = vector.broadcast %cst : f32 to vector<512x4xf32>
    %12 = arith.maximumf %10, %11 : vector<512x4xf32>
    %c512_i32 = arith.constant 512 : i32
    %13 = arith.muli %arg0, %c512_i32 : i32
    %14 = tpu.iota {dimensions = array<i32: 0>} : vector<512x1xi32>
    %15 = vector.broadcast %13 : i32 to vector<512x1xi32>
    %16 = arith.addi %15, %14 : vector<512x1xi32>
    %c2048_i32 = arith.constant 2048 : i32
    %17 = vector.broadcast %c2048_i32 : i32 to vector<512x1xi32>
    %18 = arith.cmpi slt, %16, %17 : vector<512x1xi32>
    %19 = arith.extui %18 : vector<512x1xi1> to vector<512x1xi32>
    %20 = arith.sitofp %19 : vector<512x1xi32> to vector<512x1xf32>
    %21 = vector.broadcast %20 : vector<512x1xf32> to vector<512x4xf32>
    %22 = arith.mulf %12, %21 : vector<512x4xf32>
    %c0_5 = arith.constant 0 : index
    %c0_6 = arith.constant 0 : index
    %23 = vector.load %arg4[%c0_5, %c0_6] : memref<4x8xf32, #tpu.memory_space<vmem>>, vector<4x8xf32>
    %cst_7 = arith.constant dense<0.000000e+00> : vector<512x8xf32>
    %24 = tpu.matmul %22, %23, %cst_7 {dimension_numbers = #tpu.dot_dimension_numbers<[1], [0], [0], [1], [0, 0, 1, 1], [], []>} : vector<512x4xf32>, vector<4x8xf32>, vector<512x8xf32> -> vector<512x8xf32>
    %c0_8 = arith.constant 0 : index
    %c0_9 = arith.constant 0 : index
    %25 = vector.load %arg5[%c0_8, %c0_9] : memref<512x8xf32, #tpu.memory_space<vmem>>, vector<512x8xf32>
    tpu.vector_store %arg5[%c0_8, %c0_9], %24 {strides = array<i32>} : memref<512x8xf32, #tpu.memory_space<vmem>>, vector<512x8xf32>,
    %cst_10 = arith.constant dense<0.000000e+00> : vector<8xf32>
    %26 = vector.multi_reduction <add>, %24, %cst_10 [0] : vector<512x8xf32> to vector<8xf32>
    %27 = vector.shape_cast %26 : vector<8xf32> to vector<1x8xf32>
    %28 = arith.mulf %24, %24 : vector<512x8xf32>
    %cst_11 = arith.constant dense<0.000000e+00> : vector<8xf32>
    %29 = vector.multi_reduction <add>, %28, %cst_11 [0] : vector<512x8xf32> to vector<8xf32>
    %30 = vector.shape_cast %29 : vector<8xf32> to vector<1x8xf32>
    %31 = tpu.concatenate %27, %30 in 0 : vector<1x8xf32>, vector<1x8xf32> -> vector<2x8xf32>
    %c0_12 = arith.constant 0 : index
    %c0_13 = arith.constant 0 : index
    %c0_14 = arith.constant 0 : index
    %32 = vector.load %arg6[%c0_12, %c0_13, %c0_14] : memref<1x2x8xf32, #tpu.memory_space<vmem>>, vector<1x2x8xf32>
    %33 = vector.shape_cast %32 : vector<1x2x8xf32> to vector<2x8xf32>
    %34 = vector.shape_cast %31 : vector<2x8xf32> to vector<1x2x8xf32>
    tpu.vector_store %arg6[%c0_12, %c0_13, %c0_14], %34 {strides = array<i32>} : memref<1x2x8xf32, #tpu.memory_space<vmem>>, vector<1x2x8xf32>,
    return
  }
  func.func @transform_0(%arg0: i32) -> (i32, i32) {
    %c0_i32 = arith.constant 0 : i32
    %c0_i32_0 = arith.constant 0 : i32
    return %arg0, %c0_i32 : i32, i32
  }
  func.func @transform_1(%arg0: i32) -> (i32, i32) {
    %c0_i32 = arith.constant 0 : i32
    %c0_i32_0 = arith.constant 0 : i32
    %c0_i32_1 = arith.constant 0 : i32
    return %c0_i32, %c0_i32_0 : i32, i32
  }
  func.func @transform_2(%arg0: i32) -> (i32, i32) {
    %c0_i32 = arith.constant 0 : i32
    %c0_i32_0 = arith.constant 0 : i32
    %c0_i32_1 = arith.constant 0 : i32
    return %c0_i32, %c0_i32_0 : i32, i32
  }
  func.func @transform_3(%arg0: i32) -> (i32, i32) {
    %c0_i32 = arith.constant 0 : i32
    %c0_i32_0 = arith.constant 0 : i32
    %c0_i32_1 = arith.constant 0 : i32
    return %c0_i32, %c0_i32_0 : i32, i32
  }
  func.func @transform_4(%arg0: i32) -> (i32, i32) {
    %c0_i32 = arith.constant 0 : i32
    %c0_i32_0 = arith.constant 0 : i32
    return %arg0, %c0_i32 : i32, i32
  }
  func.func @transform_5(%arg0: i32) -> (i32, i32, i32) {
    %c0_i32 = arith.constant 0 : i32
    %c0_i32_0 = arith.constant 0 : i32
    %c0_i32_1 = arith.constant 0 : i32
    return %arg0, %c0_i32, %c0_i32_0 : i32, i32, i32
  }
}

module attributes {stable_mosaic.version = 11 : i64} {
  func.func @_bn_relu_apply_kernel(%arg0: i32, %arg1: memref<512x8xf32, #tpu.memory_space<vmem>>, %arg2: memref<1x8xf32, #tpu.memory_space<vmem>>, %arg3: memref<1x8xf32, #tpu.memory_space<vmem>>, %arg4: memref<512x8xf32, #tpu.memory_space<vmem>>) attributes {dimension_semantics = [#tpu.dimension_semantics<parallel>], iteration_bounds = array<i64: 4>, scalar_prefetch = 0 : i64, scratch_operands = 0 : i64, tpu.core_type = #tpu.core_type<tc>, window_params = [{transform_indices = @transform_0, window_bounds = array<i64: 512, 8>}, {pipeline_mode = #tpu.pipeline_mode<synchronous>, transform_indices = @transform_1, window_bounds = array<i64: 1, 8>}, {pipeline_mode = #tpu.pipeline_mode<synchronous>, transform_indices = @transform_2, window_bounds = array<i64: 1, 8>}, {transform_indices = @transform_3, window_bounds = array<i64: 512, 8>}]} {
    %c0 = arith.constant 0 : index
    %c0_0 = arith.constant 0 : index
    %0 = vector.load %arg1[%c0, %c0_0] : memref<512x8xf32, #tpu.memory_space<vmem>>, vector<512x8xf32>
    %c0_1 = arith.constant 0 : index
    %c0_2 = arith.constant 0 : index
    %1 = vector.load %arg2[%c0_1, %c0_2] : memref<1x8xf32, #tpu.memory_space<vmem>>, vector<1x8xf32>
    %2 = vector.shape_cast %1 : vector<1x8xf32> to vector<8xf32>
    %3 = vector.shape_cast %2 : vector<8xf32> to vector<1x8xf32>
    %4 = vector.broadcast %3 : vector<1x8xf32> to vector<512x8xf32>
    %5 = arith.mulf %0, %4 : vector<512x8xf32>
    %c0_3 = arith.constant 0 : index
    %c0_4 = arith.constant 0 : index
    %6 = vector.load %arg3[%c0_3, %c0_4] : memref<1x8xf32, #tpu.memory_space<vmem>>, vector<1x8xf32>
    %7 = vector.shape_cast %6 : vector<1x8xf32> to vector<8xf32>
    %8 = vector.shape_cast %7 : vector<8xf32> to vector<1x8xf32>
    %9 = vector.broadcast %8 : vector<1x8xf32> to vector<512x8xf32>
    %10 = arith.addf %5, %9 : vector<512x8xf32>
    %cst = arith.constant 0.000000e+00 : f32
    %11 = vector.broadcast %cst : f32 to vector<512x8xf32>
    %12 = arith.maximumf %10, %11 : vector<512x8xf32>
    %c0_5 = arith.constant 0 : index
    %c0_6 = arith.constant 0 : index
    %13 = vector.load %arg4[%c0_5, %c0_6] : memref<512x8xf32, #tpu.memory_space<vmem>>, vector<512x8xf32>
    tpu.vector_store %arg4[%c0_5, %c0_6], %12 {strides = array<i32>} : memref<512x8xf32, #tpu.memory_space<vmem>>, vector<512x8xf32>,
    return
  }
  func.func @transform_0(%arg0: i32) -> (i32, i32) {
    %c0_i32 = arith.constant 0 : i32
    %c0_i32_0 = arith.constant 0 : i32
    return %arg0, %c0_i32 : i32, i32
  }
  func.func @transform_1(%arg0: i32) -> (i32, i32) {
    %c0_i32 = arith.constant 0 : i32
    %c0_i32_0 = arith.constant 0 : i32
    %c0_i32_1 = arith.constant 0 : i32
    return %c0_i32, %c0_i32_0 : i32, i32
  }
  func.func @transform_2(%arg0: i32) -> (i32, i32) {
    %c0_i32 = arith.constant 0 : i32
    %c0_i32_0 = arith.constant 0 : i32
    %c0_i32_1 = arith.constant 0 : i32
    return %c0_i32, %c0_i32_0 : i32, i32
  }
  func.func @transform_3(%arg0: i32) -> (i32, i32) {
    %c0_i32 = arith.constant 0 : i32
    %c0_i32_0 = arith.constant 0 : i32
    return %arg0, %c0_i32 : i32, i32
  }
}

</mosaic_0001>

<llo_original>
// kernel: deconv_block.4
$region0: #{deconv_block.4}
  #allocation0 [shape = 'u32[]', space=smem, size = 0x4, offset = 0x4, fixed_abs, tag = 'smem constant byte address 0x4 - core index']
  #allocation1 [shape = 'u32[144,128]{1,0:T(1,128)}', space=vmem, size = 0x12000, scoped, tag = 'internal scratch']
  %s0 = inlined_call_operand.vmem [shape: f32[512,16], index: 0, kind: input, shape index: {}]
  %s1 = inlined_call_operand.vmem [shape: f32[16,4], index: 1, kind: input, shape index: {}]
  %s2 = inlined_call_operand.vmem [shape: f32[512,4], index: 2, kind: output, shape index: {0}]
  %s3 = inlined_call_operand.vmem [shape: f32[1,2,4], index: 3, kind: output, shape index: {1}]
  %4 = xla_tuple %s2, %s3
  %s5 = sld [smem:[#allocation0]]
  $region26: #{deconv_block.4} parent=0
    _
  %s7 = ssub.s32 1, %s5
  %s8 = scalar_select 0, %s7, %s5
  // Predicated region
  $region2: #{deconv_block.4} parent=0 // pred_check
    _
  $region3: #{deconv_block.4} parent=0 // pred_check_branch
    %10 = sbr.rel (0) target = $region5
  $region4: #{deconv_block.4} parent=0 // pred_region
    _
  $region5: #{deconv_block.4} parent=0 // pred_fallthru
    _
  // Predicated region
  $region6: #{deconv_block.4} parent=0 // pred_check
    _
  $region7: #{deconv_block.4} parent=0 // pred_check_branch
    %12 = sbr.rel (0) target = $region9
  $region8: #{deconv_block.4} parent=0 // pred_region
    _
  $region9: #{deconv_block.4} parent=0 // pred_fallthru
    _
  %v13 = vld [vmem:[%s0] sm:$0xff]
  %v14 = vld [vmem:[%s0 + $0x8] sm:$0xff]
  %v15 = vld [vmem:[%s0 + $0x10] sm:$0xff]
  %v16 = vld [vmem:[%s0 + $0x18] sm:$0xff]
  %v17 = vld [vmem:[%s0 + $0x20] sm:$0xff]
  %v18 = vld [vmem:[%s0 + $0x28] sm:$0xff]
  %v19 = vld [vmem:[%s0 + $0x30] sm:$0xff]
  %v20 = vld [vmem:[%s0 + $0x38] sm:$0xff]
  %v21 = vld [vmem:[%s0 + $0x40] sm:$0xff]
  %v22 = vld [vmem:[%s0 + $0x48] sm:$0xff]
  %v23 = vld [vmem:[%s0 + $0x50] sm:$0xff]
  %v24 = vld [vmem:[%s0 + $0x58] sm:$0xff]
  %v25 = vld [vmem:[%s0 + $0x60] sm:$0xff]
  %v26 = vld [vmem:[%s0 + $0x68] sm:$0xff]
  %v27 = vld [vmem:[%s0 + $0x70] sm:$0xff]
  %v28 = vld [vmem:[%s0 + $0x78] sm:$0xff]
  %v29 = vld [vmem:[%s0 + $0x80] sm:$0xff]
  %v30 = vld [vmem:[%s0 + $0x88] sm:$0xff]
  %v31 = vld [vmem:[%s0 + $0x90] sm:$0xff]
  %v32 = vld [vmem:[%s0 + $0x98] sm:$0xff]
  %v33 = vld [vmem:[%s0 + $0xa0] sm:$0xff]
  %v34 = vld [vmem:[%s0 + $0xa8] sm:$0xff]
  %v35 = vld [vmem:[%s0 + $0xb0] sm:$0xff]
  %v36 = vld [vmem:[%s0 + $0xb8] sm:$0xff]
  %v37 = vld [vmem:[%s0 + $0xc0] sm:$0xff]
  %v38 = vld [vmem:[%s0 + $0xc8] sm:$0xff]
  %v39 = vld [vmem:[%s0 + $0xd0] sm:$0xff]
  %v40 = vld [vmem:[%s0 + $0xd8] sm:$0xff]
  %v41 = vld [vmem:[%s0 + $0xe0] sm:$0xff]
  %v42 = vld [vmem:[%s0 + $0xe8] sm:$0xff]
  %v43 = vld [vmem:[%s0 + $0xf0] sm:$0xff]
  %v44 = vld [vmem:[%s0 + $0xf8] sm:$0xff]
  %v45 = vld [vmem:[%s0 + $0x100] sm:$0xff]
  %v46 = vld [vmem:[%s0 + $0x108] sm:$0xff]
  %v47 = vld [vmem:[%s0 + $0x110] sm:$0xff]
  %v48 = vld [vmem:[%s0 + $0x118] sm:$0xff]
  %v49 = vld [vmem:[%s0 + $0x120] sm:$0xff]
  %v50 = vld [vmem:[%s0 + $0x128] sm:$0xff]
  %v51 = vld [vmem:[%s0 + $0x130] sm:$0xff]
  %v52 = vld [vmem:[%s0 + $0x138] sm:$0xff]
  %v53 = vld [vmem:[%s0 + $0x140] sm:$0xff]
  %v54 = vld [vmem:[%s0 + $0x148] sm:$0xff]
  %v55 = vld [vmem:[%s0 + $0x150] sm:$0xff]
  %v56 = vld [vmem:[%s0 + $0x158] sm:$0xff]
  %v57 = vld [vmem:[%s0 + $0x160] sm:$0xff]
  %v58 = vld [vmem:[%s0 + $0x168] sm:$0xff]
  %v59 = vld [vmem:[%s0 + $0x170] sm:$0xff]
  %v60 = vld [vmem:[%s0 + $0x178] sm:$0xff]
  %v61 = vld [vmem:[%s0 + $0x180] sm:$0xff]
  %v62 = vld [vmem:[%s0 + $0x188] sm:$0xff]
  %v63 = vld [vmem:[%s0 + $0x190] sm:$0xff]
  %v64 = vld [vmem:[%s0 + $0x198] sm:$0xff]
  %v65 = vld [vmem:[%s0 + $0x1a0] sm:$0xff]
  %v66 = vld [vmem:[%s0 + $0x1a8] sm:$0xff]
  %v67 = vld [vmem:[%s0 + $0x1b0] sm:$0xff]
  %v68 = vld [vmem:[%s0 + $0x1b8] sm:$0xff]
  %v69 = vld [vmem:[%s0 + $0x1c0] sm:$0xff]
  %v70 = vld [vmem:[%s0 + $0x1c8] sm:$0xff]
  %v71 = vld [vmem:[%s0 + $0x1d0] sm:$0xff]
  %v72 = vld [vmem:[%s0 + $0x1d8] sm:$0xff]
  %v73 = vld [vmem:[%s0 + $0x1e0] sm:$0xff]
  %v74 = vld [vmem:[%s0 + $0x1e8] sm:$0xff]
  %v75 = vld [vmem:[%s0 + $0x1f0] sm:$0xff]
  %v76 = vld [vmem:[%s0 + $0x1f8] sm:$0xff]
  %v77 = vld [vmem:[%s1] sm:$0xff]
  %v78 = vld [vmem:[%s1 + $0x8] sm:$0xff]
  %vm79 = vcmask 130048
  %v81 = vsel %vm79, %v13, 0
  %v84 = vsel %vm79, %v14, 0
  %v87 = vsel %vm79, %v15, 0
  %v90 = vsel %vm79, %v16, 0
  %v93 = vsel %vm79, %v17, 0
  %v96 = vsel %vm79, %v18, 0
  %v99 = vsel %vm79, %v19, 0
  %v102 = vsel %vm79, %v20, 0
  %v105 = vsel %vm79, %v21, 0
  %v108 = vsel %vm79, %v22, 0
  %v111 = vsel %vm79, %v23, 0
  %v114 = vsel %vm79, %v24, 0
  %v117 = vsel %vm79, %v25, 0
  %v120 = vsel %vm79, %v26, 0
  %v123 = vsel %vm79, %v27, 0
  %v126 = vsel %vm79, %v28, 0
  %v129 = vsel %vm79, %v29, 0
  %v132 = vsel %vm79, %v30, 0
  %v135 = vsel %vm79, %v31, 0
  %v138 = vsel %vm79, %v32, 0
  %v141 = vsel %vm79, %v33, 0
  %v144 = vsel %vm79, %v34, 0
  %v147 = vsel %vm79, %v35, 0
  %v150 = vsel %vm79, %v36, 0
  %v153 = vsel %vm79, %v37, 0
  %v156 = vsel %vm79, %v38, 0
  %v159 = vsel %vm79, %v39, 0
  %v162 = vsel %vm79, %v40, 0
  %v165 = vsel %vm79, %v41, 0
  %v168 = vsel %vm79, %v42, 0
  %v171 = vsel %vm79, %v43, 0
  %v174 = vsel %vm79, %v44, 0
  %v177 = vsel %vm79, %v45, 0
  %v180 = vsel %vm79, %v46, 0
  %v183 = vsel %vm79, %v47, 0
  %v186 = vsel %vm79, %v48, 0
  %v189 = vsel %vm79, %v49, 0
  %v192 = vsel %vm79, %v50, 0
  %v195 = vsel %vm79, %v51, 0
  %v198 = vsel %vm79, %v52, 0
  %v201 = vsel %vm79, %v53, 0
  %v204 = vsel %vm79, %v54, 0
  %v207 = vsel %vm79, %v55, 0
  %v210 = vsel %vm79, %v56, 0
  %v213 = vsel %vm79, %v57, 0
  %v216 = vsel %vm79, %v58, 0
  %v219 = vsel %vm79, %v59, 0
  %v222 = vsel %vm79, %v60, 0
  %v225 = vsel %vm79, %v61, 0
  %v228 = vsel %vm79, %v62, 0
  %v231 = vsel %vm79, %v63, 0
  %v234 = vsel %vm79, %v64, 0
  %v237 = vsel %vm79, %v65, 0
  %v240 = vsel %vm79, %v66, 0
  %v243 = vsel %vm79, %v67, 0
  %v246 = vsel %vm79, %v68, 0
  %v249 = vsel %vm79, %v69, 0
  %v252 = vsel %vm79, %v70, 0
  %v255 = vsel %vm79, %v71, 0
  %v258 = vsel %vm79, %v72, 0
  %v261 = vsel %vm79, %v73, 0
  %v264 = vsel %vm79, %v74, 0
  %v267 = vsel %vm79, %v75, 0
  %v270 = vsel %vm79, %v76, 0
  %272 = vmatprep.subr.mxu0 0.0
  %273 = vmatpush1.msra.mxu0 %v77
  %274 = vmatprep.subr.mxu0 0.0
  %275 = vmatpush1.msra.mxu0 %v78
  %276 = vmatprep.subr.mxu0 0.0
  %277 = vmatpush1.msra.mxu0 0.0
  %278 = vmatprep.subr.mxu0 0.0
  %279 = vmatpush1.msra.mxu0 0.0
  %280 = vmatprep.subr.mxu0 0.0
  %281 = vmatpush1.msra.mxu0 0.0
  %282 = vmatprep.subr.mxu0 0.0
  %283 = vmatpush1.msra.mxu0 0.0
  %284 = vmatprep.subr.mxu0 0.0
  %285 = vmatpush1.msra.mxu0 0.0
  %286 = vmatprep.subr.mxu0 0.0
  %287 = vmatpush1.msra.mxu0 0.0
  %288 = vmatprep.subr.mxu0 0.0
  %289 = vmatpush1.msra.mxu0 0.0
  %290 = vmatprep.subr.mxu0 0.0
  %291 = vmatpush1.msra.mxu0 0.0
  %292 = vmatprep.subr.mxu0 0.0
  %293 = vmatpush1.msra.mxu0 0.0
  %294 = vmatprep.subr.mxu0 0.0
  %295 = vmatpush1.msra.mxu0 0.0
  %296 = vmatprep.subr.mxu0 0.0
  %297 = vmatpush1.msra.mxu0 0.0
  %298 = vmatprep.subr.mxu0 0.0
  %299 = vmatpush1.msra.mxu0 0.0
  %300 = vmatprep.subr.mxu0 0.0
  %301 = vmatpush1.msra.mxu0 0.0
  %302 = vmatprep.subr.mxu0 0.0
  %303 = vmatpush1.msra.mxu0 0.0
  %304 = vmatprep.subr.mxu0 0.0
  %305 = vmatpush1.msra.mxu0 0.0
  %306 = vmatprep.subr.mxu0 0.0
  %307 = vmatpush1.msra.mxu0 0.0
  %308 = vmatprep.subr.mxu0 0.0
  %309 = vmatpush1.msra.mxu0 0.0
  %310 = vmatprep.subr.mxu0 0.0
  %311 = vmatpush1.msra.mxu0 0.0
  %312 = vmatprep.subr.mxu0 0.0
  %313 = vmatpush1.msra.mxu0 0.0
  %314 = vmatprep.subr.mxu0 0.0
  %315 = vmatpush1.msra.mxu0 0.0
  %316 = vmatprep.subr.mxu0 0.0
  %317 = vmatpush1.msra.mxu0 0.0
  %318 = vmatprep.subr.mxu0 0.0
  %319 = vmatpush1.msra.mxu0 0.0
  %320 = vmatprep.subr.mxu0 0.0
  %321 = vmatpush1.msra.mxu0 0.0
  %322 = vmatprep.subr.mxu0 0.0
  %323 = vmatpush1.msra.mxu0 0.0
  %324 = vmatprep.subr.mxu0 0.0
  %325 = vmatpush1.msra.mxu0 0.0
  %326 = vmatprep.subr.mxu0 0.0
  %327 = vmatpush1.msra.mxu0 0.0
  %328 = vmatprep.subr.mxu0 0.0
  %329 = vmatpush1.msra.mxu0 0.0
  %330 = vmatprep.subr.mxu0 0.0
  %331 = vmatpush1.msra.mxu0 0.0
  %332 = vmatprep.subr.mxu0 0.0
  %333 = vmatpush1.msra.mxu0 0.0
  %334 = vmatprep.subr.mxu0 0.0
  %335 = vmatpush1.msra.mxu0 0.0
  %336 = vmatprep.mubr.f32.mxu0 0.0
  %337 = vmatmul.mubr.f32.gmra.mrb[0].mxu0 %v81
  %v338 = vpop.f32.mrb[0].mxu0
  %v339 = vadd.f32 0.0, %v338
  %v340 = vpop.f32.mrb[0].mxu0
  %341 = vmatprep.mubr.f32.mxu0 0.0
  %342 = vmatmul.mubr.f32.gmra.mrb[0].mxu0 %v84
  %v343 = vpop.f32.mrb[0].mxu0
  %v344 = vadd.f32 0.0, %v343
  %v345 = vpop.f32.mrb[0].mxu0
  %346 = vmatprep.mubr.f32.mxu0 0.0
  %347 = vmatmul.mubr.f32.gmra.mrb[0].mxu0 %v87
  %v348 = vpop.f32.mrb[0].mxu0
  %v349 = vadd.f32 0.0, %v348
  %v350 = vpop.f32.mrb[0].mxu0
  %351 = vmatprep.mubr.f32.mxu0 0.0
  %352 = vmatmul.mubr.f32.gmra.mrb[0].mxu0 %v90
  %v353 = vpop.f32.mrb[0].mxu0
  %v354 = vadd.f32 0.0, %v353
  %v355 = vpop.f32.mrb[0].mxu0
  %356 = vmatprep.mubr.f32.mxu0 0.0
  %357 = vmatmul.mubr.f32.gmra.mrb[0].mxu0 %v93
  %v358 = vpop.f32.mrb[0].mxu0
  %v359 = vadd.f32 0.0, %v358
  %v360 = vpop.f32.mrb[0].mxu0
  %361 = vmatprep.mubr.f32.mxu0 0.0
  %362 = vmatmul.mubr.f32.gmra.mrb[0].mxu0 %v96
  %v363 = vpop.f32.mrb[0].mxu0
  %v364 = vadd.f32 0.0, %v363
  %v365 = vpop.f32.mrb[0].mxu0
  %366 = vmatprep.mubr.f32.mxu0 0.0
  %367 = vmatmul.mubr.f32.gmra.mrb[0].mxu0 %v99
  %v368 = vpop.f32.mrb[0].mxu0
  %v369 = vadd.f32 0.0, %v368
  %v370 = vpop.f32.mrb[0].mxu0
  %371 = vmatprep.mubr.f32.mxu0 0.0
  %372 = vmatmul.mubr.f32.gmra.mrb[0].mxu0 %v102
  %v373 = vpop.f32.mrb[0].mxu0
  %v374 = vadd.f32 0.0, %v373
  %v375 = vpop.f32.mrb[0].mxu0
  %376 = vmatprep.mubr.f32.mxu0 0.0
  %377 = vmatmul.mubr.f32.gmra.mrb[0].mxu0 %v105
  %v378 = vpop.f32.mrb[0].mxu0
  %v379 = vadd.f32 0.0, %v378
  %v380 = vpop.f32.mrb[0].mxu0
  %381 = vmatprep.mubr.f32.mxu0 0.0
  %382 = vmatmul.mubr.f32.gmra.mrb[0].mxu0 %v108
  %v383 = vpop.f32.mrb[0].mxu0
  %v384 = vadd.f32 0.0, %v383
  %v385 = vpop.f32.mrb[0].mxu0
  %386 = vmatprep.mubr.f32.mxu0 0.0
  %387 = vmatmul.mubr.f32.gmra.mrb[0].mxu0 %v111
  %v388 = vpop.f32.mrb[0].mxu0
  %v389 = vadd.f32 0.0, %v388
  %v390 = vpop.f32.mrb[0].mxu0
  %391 = vmatprep.mubr.f32.mxu0 0.0
  %392 = vmatmul.mubr.f32.gmra.mrb[0].mxu0 %v114
  %v393 = vpop.f32.mrb[0].mxu0
  %v394 = vadd.f32 0.0, %v393
  %v395 = vpop.f32.mrb[0].mxu0
  %396 = vmatprep.mubr.f32.mxu0 0.0
  %397 = vmatmul.mubr.f32.gmra.mrb[0].mxu0 %v117
  %v398 = vpop.f32.mrb[0].mxu0
  %v399 = vadd.f32 0.0, %v398
  %v400 = vpop.f32.mrb[0].mxu0
  %401 = vmatprep.mubr.f32.mxu0 0.0
  %402 = vmatmul.mubr.f32.gmra.mrb[0].mxu0 %v120
  %v403 = vpop.f32.mrb[0].mxu0
  %v404 = vadd.f32 0.0, %v403
  %v405 = vpop.f32.mrb[0].mxu0
  %406 = vmatprep.mubr.f32.mxu0 0.0
  %407 = vmatmul.mubr.f32.gmra.mrb[0].mxu0 %v123
  %v408 = vpop.f32.mrb[0].mxu0
  %v409 = vadd.f32 0.0, %v408
  %v410 = vpop.f32.mrb[0].mxu0
  %411 = vmatprep.mubr.f32.mxu0 0.0
  %412 = vmatmul.mubr.f32.gmra.mrb[0].mxu0 %v126
  %v413 = vpop.f32.mrb[0].mxu0
  %v414 = vadd.f32 0.0, %v413
  %v415 = vpop.f32.mrb[0].mxu0
  %416 = vmatprep.mubr.f32.mxu0 0.0
  %417 = vmatmul.mubr.f32.gmra.mrb[0].mxu0 %v129
  %v418 = vpop.f32.mrb[0].mxu0
  %v419 = vadd.f32 0.0, %v418
  %v420 = vpop.f32.mrb[0].mxu0
  %421 = vmatprep.mubr.f32.mxu0 0.0
  %422 = vmatmul.mubr.f32.gmra.mrb[0].mxu0 %v132
  %v423 = vpop.f32.mrb[0].mxu0
  %v424 = vadd.f32 0.0, %v423
  %v425 = vpop.f32.mrb[0].mxu0
  %426 = vmatprep.mubr.f32.mxu0 0.0
  %427 = vmatmul.mubr.f32.gmra.mrb[0].mxu0 %v135
  %v428 = vpop.f32.mrb[0].mxu0
  %v429 = vadd.f32 0.0, %v428
  %v430 = vpop.f32.mrb[0].mxu0
  %431 = vmatprep.mubr.f32.mxu0 0.0
  %432 = vmatmul.mubr.f32.gmra.mrb[0].mxu0 %v138
  %v433 = vpop.f32.mrb[0].mxu0
  %v434 = vadd.f32 0.0, %v433
  %v435 = vpop.f32.mrb[0].mxu0
  %436 = vmatprep.mubr.f32.mxu0 0.0
  %437 = vmatmul.mubr.f32.gmra.mrb[0].mxu0 %v141
  %v438 = vpop.f32.mrb[0].mxu0
  %v439 = vadd.f32 0.0, %v438
  %v440 = vpop.f32.mrb[0].mxu0
  %441 = vmatprep.mubr.f32.mxu0 0.0
  %442 = vmatmul.mubr.f32.gmra.mrb[0].mxu0 %v144
  %v443 = vpop.f32.mrb[0].mxu0
  %v444 = vadd.f32 0.0, %v443
  %v445 = vpop.f32.mrb[0].mxu0
  %446 = vmatprep.mubr.f32.mxu0 0.0
  %447 = vmatmul.mubr.f32.gmra.mrb[0].mxu0 %v147
  %v448 = vpop.f32.mrb[0].mxu0
  %v449 = vadd.f32 0.0, %v448
  %v450 = vpop.f32.mrb[0].mxu0
  %451 = vmatprep.mubr.f32.mxu0 0.0
  %452 = vmatmul.mubr.f32.gmra.mrb[0].mxu0 %v150
  %v453 = vpop.f32.mrb[0].mxu0
  %v454 = vadd.f32 0.0, %v453
  %v455 = vpop.f32.mrb[0].mxu0
  %456 = vmatprep.mubr.f32.mxu0 0.0
  %457 = vmatmul.mubr.f32.gmra.mrb[0].mxu0 %v153
  %v458 = vpop.f32.mrb[0].mxu0
  %v459 = vadd.f32 0.0, %v458
  %v460 = vpop.f32.mrb[0].mxu0
  %461 = vmatprep.mubr.f32.mxu0 0.0
  %462 = vmatmul.mubr.f32.gmra.mrb[0].mxu0 %v156
  %v463 = vpop.f32.mrb[0].mxu0
  %v464 = vadd.f32 0.0, %v463
  %v465 = vpop.f32.mrb[0].mxu0
  %466 = vmatprep.mubr.f32.mxu0 0.0
  %467 = vmatmul.mubr.f32.gmra.mrb[0].mxu0 %v159
  %v468 = vpop.f32.mrb[0].mxu0
  %v469 = vadd.f32 0.0, %v468
  %v470 = vpop.f32.mrb[0].mxu0
  %471 = vmatprep.mubr.f32.mxu0 0.0
  %472 = vmatmul.mubr.f32.gmra.mrb[0].mxu0 %v162
  %v473 = vpop.f32.mrb[0].mxu0
  %v474 = vadd.f32 0.0, %v473
  %v475 = vpop.f32.mrb[0].mxu0
  %476 = vmatprep.mubr.f32.mxu0 0.0
  %477 = vmatmul.mubr.f32.gmra.mrb[0].mxu0 %v165
  %v478 = vpop.f32.mrb[0].mxu0
  %v479 = vadd.f32 0.0, %v478
  %v480 = vpop.f32.mrb[0].mxu0
  %481 = vmatprep.mubr.f32.mxu0 0.0
  %482 = vmatmul.mubr.f32.gmra.mrb[0].mxu0 %v168
  %v483 = vpop.f32.mrb[0].mxu0
  %v484 = vadd.f32 0.0, %v483
  %v485 = vpop.f32.mrb[0].mxu0
  %486 = vmatprep.mubr.f32.mxu0 0.0
  %487 = vmatmul.mubr.f32.gmra.mrb[0].mxu0 %v171
  %v488 = vpop.f32.mrb[0].mxu0
  %v489 = vadd.f32 0.0, %v488
  %v490 = vpop.f32.mrb[0].mxu0
  %491 = vmatprep.mubr.f32.mxu0 0.0
  %492 = vmatmul.mubr.f32.gmra.mrb[0].mxu0 %v174
  %v493 = vpop.f32.mrb[0].mxu0
  %v494 = vadd.f32 0.0, %v493
  %v495 = vpop.f32.mrb[0].mxu0
  %496 = vmatprep.mubr.f32.mxu0 0.0
  %497 = vmatmul.mubr.f32.gmra.mrb[0].mxu0 %v177
  %v498 = vpop.f32.mrb[0].mxu0
  %v499 = vadd.f32 0.0, %v498
  %v500 = vpop.f32.mrb[0].mxu0
  %501 = vmatprep.mubr.f32.mxu0 0.0
  %502 = vmatmul.mubr.f32.gmra.mrb[0].mxu0 %v180
  %v503 = vpop.f32.mrb[0].mxu0
  %v504 = vadd.f32 0.0, %v503
  %v505 = vpop.f32.mrb[0].mxu0
  %506 = vmatprep.mubr.f32.mxu0 0.0
  %507 = vmatmul.mubr.f32.gmra.mrb[0].mxu0 %v183
  %v508 = vpop.f32.mrb[0].mxu0
  %v509 = vadd.f32 0.0, %v508
  %v510 = vpop.f32.mrb[0].mxu0
  %511 = vmatprep.mubr.f32.mxu0 0.0
  %512 = vmatmul.mubr.f32.gmra.mrb[0].mxu0 %v186
  %v513 = vpop.f32.mrb[0].mxu0
  %v514 = vadd.f32 0.0, %v513
  %v515 = vpop.f32.mrb[0].mxu0
  %516 = vmatprep.mubr.f32.mxu0 0.0
  %517 = vmatmul.mubr.f32.gmra.mrb[0].mxu0 %v189
  %v518 = vpop.f32.mrb[0].mxu0
  %v519 = vadd.f32 0.0, %v518
  %v520 = vpop.f32.mrb[0].mxu0
  %521 = vmatprep.mubr.f32.mxu0 0.0
  %522 = vmatmul.mubr.f32.gmra.mrb[0].mxu0 %v192
  %v523 = vpop.f32.mrb[0].mxu0
  %v524 = vadd.f32 0.0, %v523
  %v525 = vpop.f32.mrb[0].mxu0
  %526 = vmatprep.mubr.f32.mxu0 0.0
  %527 = vmatmul.mubr.f32.gmra.mrb[0].mxu0 %v195
  %v528 = vpop.f32.mrb[0].mxu0
  %v529 = vadd.f32 0.0, %v528
  %v530 = vpop.f32.mrb[0].mxu0
  %531 = vmatprep.mubr.f32.mxu0 0.0
  %532 = vmatmul.mubr.f32.gmra.mrb[0].mxu0 %v198
  %v533 = vpop.f32.mrb[0].mxu0
  %v534 = vadd.f32 0.0, %v533
  %v535 = vpop.f32.mrb[0].mxu0
  %536 = vmatprep.mubr.f32.mxu0 0.0
  %537 = vmatmul.mubr.f32.gmra.mrb[0].mxu0 %v201
  %v538 = vpop.f32.mrb[0].mxu0
  %v539 = vadd.f32 0.0, %v538
  %v540 = vpop.f32.mrb[0].mxu0
  %541 = vmatprep.mubr.f32.mxu0 0.0
  %542 = vmatmul.mubr.f32.gmra.mrb[0].mxu0 %v204
  %v543 = vpop.f32.mrb[0].mxu0
  %v544 = vadd.f32 0.0, %v543
  %v545 = vpop.f32.mrb[0].mxu0
  %546 = vmatprep.mubr.f32.mxu0 0.0
  %547 = vmatmul.mubr.f32.gmra.mrb[0].mxu0 %v207
  %v548 = vpop.f32.mrb[0].mxu0
  %v549 = vadd.f32 0.0, %v548
  %v550 = vpop.f32.mrb[0].mxu0
  %551 = vmatprep.mubr.f32.mxu0 0.0
  %552 = vmatmul.mubr.f32.gmra.mrb[0].mxu0 %v210
  %v553 = vpop.f32.mrb[0].mxu0
  %v554 = vadd.f32 0.0, %v553
  %v555 = vpop.f32.mrb[0].mxu0
  %556 = vmatprep.mubr.f32.mxu0 0.0
  %557 = vmatmul.mubr.f32.gmra.mrb[0].mxu0 %v213
  %v558 = vpop.f32.mrb[0].mxu0
  %v559 = vadd.f32 0.0, %v558
  %v560 = vpop.f32.mrb[0].mxu0
  %561 = vmatprep.mubr.f32.mxu0 0.0
  %562 = vmatmul.mubr.f32.gmra.mrb[0].mxu0 %v216
  %v563 = vpop.f32.mrb[0].mxu0
  %v564 = vadd.f32 0.0, %v563
  %v565 = vpop.f32.mrb[0].mxu0
  %566 = vmatprep.mubr.f32.mxu0 0.0
  %567 = vmatmul.mubr.f32.gmra.mrb[0].mxu0 %v219
  %v568 = vpop.f32.mrb[0].mxu0
  %v569 = vadd.f32 0.0, %v568
  %v570 = vpop.f32.mrb[0].mxu0
  %571 = vmatprep.mubr.f32.mxu0 0.0
  %572 = vmatmul.mubr.f32.gmra.mrb[0].mxu0 %v222
  %v573 = vpop.f32.mrb[0].mxu0
  %v574 = vadd.f32 0.0, %v573
  %v575 = vpop.f32.mrb[0].mxu0
  %576 = vmatprep.mubr.f32.mxu0 0.0
  %577 = vmatmul.mubr.f32.gmra.mrb[0].mxu0 %v225
  %v578 = vpop.f32.mrb[0].mxu0
  %v579 = vadd.f32 0.0, %v578
  %v580 = vpop.f32.mrb[0].mxu0
  %581 = vmatprep.mubr.f32.mxu0 0.0
  %582 = vmatmul.mubr.f32.gmra.mrb[0].mxu0 %v228
  %v583 = vpop.f32.mrb[0].mxu0
  %v584 = vadd.f32 0.0, %v583
  %v585 = vpop.f32.mrb[0].mxu0
  %586 = vmatprep.mubr.f32.mxu0 0.0
  %587 = vmatmul.mubr.f32.gmra.mrb[0].mxu0 %v231
  %v588 = vpop.f32.mrb[0].mxu0
  %v589 = vadd.f32 0.0, %v588
  %v590 = vpop.f32.mrb[0].mxu0
  %591 = vmatprep.mubr.f32.mxu0 0.0
  %592 = vmatmul.mubr.f32.gmra.mrb[0].mxu0 %v234
  %v593 = vpop.f32.mrb[0].mxu0
  %v594 = vadd.f32 0.0, %v593
  %v595 = vpop.f32.mrb[0].mxu0
  %596 = vmatprep.mubr.f32.mxu0 0.0
  %597 = vmatmul.mubr.f32.gmra.mrb[0].mxu0 %v237
  %v598 = vpop.f32.mrb[0].mxu0
  %v599 = vadd.f32 0.0, %v598
  %v600 = vpop.f32.mrb[0].mxu0
  %601 = vmatprep.mubr.f32.mxu0 0.0
  %602 = vmatmul.mubr.f32.gmra.mrb[0].mxu0 %v240
  %v603 = vpop.f32.mrb[0].mxu0
  %v604 = vadd.f32 0.0, %v603
  %v605 = vpop.f32.mrb[0].mxu0
  %606 = vmatprep.mubr.f32.mxu0 0.0
  %607 = vmatmul.mubr.f32.gmra.mrb[0].mxu0 %v243
  %v608 = vpop.f32.mrb[0].mxu0
  %v609 = vadd.f32 0.0, %v608
  %v610 = vpop.f32.mrb[0].mxu0
  %611 = vmatprep.mubr.f32.mxu0 0.0
  %612 = vmatmul.mubr.f32.gmra.mrb[0].mxu0 %v246
  %v613 = vpop.f32.mrb[0].mxu0
  %v614 = vadd.f32 0.0, %v613
  %v615 = vpop.f32.mrb[0].mxu0
  %616 = vmatprep.mubr.f32.mxu0 0.0
  %617 = vmatmul.mubr.f32.gmra.mrb[0].mxu0 %v249
  %v618 = vpop.f32.mrb[0].mxu0
  %v619 = vadd.f32 0.0, %v618
  %v620 = vpop.f32.mrb[0].mxu0
  %621 = vmatprep.mubr.f32.mxu0 0.0
  %622 = vmatmul.mubr.f32.gmra.mrb[0].mxu0 %v252
  %v623 = vpop.f32.mrb[0].mxu0
  %v624 = vadd.f32 0.0, %v623
  %v625 = vpop.f32.mrb[0].mxu0
  %626 = vmatprep.mubr.f32.mxu0 0.0
  %627 = vmatmul.mubr.f32.gmra.mrb[0].mxu0 %v255
  %v628 = vpop.f32.mrb[0].mxu0
  %v629 = vadd.f32 0.0, %v628
  %v630 = vpop.f32.mrb[0].mxu0
  %631 = vmatprep.mubr.f32.mxu0 0.0
  %632 = vmatmul.mubr.f32.gmra.mrb[0].mxu0 %v258
  %v633 = vpop.f32.mrb[0].mxu0
  %v634 = vadd.f32 0.0, %v633
  %v635 = vpop.f32.mrb[0].mxu0
  %636 = vmatprep.mubr.f32.mxu0 0.0
  %637 = vmatmul.mubr.f32.gmra.mrb[0].mxu0 %v261
  %v638 = vpop.f32.mrb[0].mxu0
  %v639 = vadd.f32 0.0, %v638
  %v640 = vpop.f32.mrb[0].mxu0
  %641 = vmatprep.mubr.f32.mxu0 0.0
  %642 = vmatmul.mubr.f32.gmra.mrb[0].mxu0 %v264
  %v643 = vpop.f32.mrb[0].mxu0
  %v644 = vadd.f32 0.0, %v643
  %v645 = vpop.f32.mrb[0].mxu0
  %646 = vmatprep.mubr.f32.mxu0 0.0
  %647 = vmatmul.mubr.f32.gmra.mrb[0].mxu0 %v267
  %v648 = vpop.f32.mrb[0].mxu0
  %v649 = vadd.f32 0.0, %v648
  %v650 = vpop.f32.mrb[0].mxu0
  %651 = vmatprep.mubr.f32.mxu0 0.0
  %652 = vmatmul.mubr.f32.gmra.mrb[0].mxu0 %v270
  %v653 = vpop.f32.mrb[0].mxu0
  %v654 = vadd.f32 0.0, %v653
  %v655 = vpop.f32.mrb[0].mxu0
  %656 = vdwg.mxu0
  %vm657 = vcmask 31744
  %658 = vst.msk [vmem:[%s2] sm:$0xff] %vm657, %v339
  %659 = vst.msk [vmem:[%s2 + $0x8] sm:$0xff] %vm657, %v344
  %660 = vst.msk [vmem:[%s2 + $0x10] sm:$0xff] %vm657, %v349
  %661 = vst.msk [vmem:[%s2 + $0x18] sm:$0xff] %vm657, %v354
  %662 = vst.msk [vmem:[%s2 + $0x20] sm:$0xff] %vm657, %v359
  %663 = vst.msk [vmem:[%s2 + $0x28] sm:$0xff] %vm657, %v364
  %664 = vst.msk [vmem:[%s2 + $0x30] sm:$0xff] %vm657, %v369
  %665 = vst.msk [vmem:[%s2 + $0x38] sm:$0xff] %vm657, %v374
  %666 = vst.msk [vmem:[%s2 + $0x40] sm:$0xff] %vm657, %v379
  %667 = vst.msk [vmem:[%s2 + $0x48] sm:$0xff] %vm657, %v384
  %668 = vst.msk [vmem:[%s2 + $0x50] sm:$0xff] %vm657, %v389
  %669 = vst.msk [vmem:[%s2 + $0x58] sm:$0xff] %vm657, %v394
  %670 = vst.msk [vmem:[%s2 + $0x60] sm:$0xff] %vm657, %v399
  %671 = vst.msk [vmem:[%s2 + $0x68] sm:$0xff] %vm657, %v404
  %672 = vst.msk [vmem:[%s2 + $0x70] sm:$0xff] %vm657, %v409
  %673 = vst.msk [vmem:[%s2 + $0x78] sm:$0xff] %vm657, %v414
  %674 = vst.msk [vmem:[%s2 + $0x80] sm:$0xff] %vm657, %v419
  %675 = vst.msk [vmem:[%s2 + $0x88] sm:$0xff] %vm657, %v424
  %676 = vst.msk [vmem:[%s2 + $0x90] sm:$0xff] %vm657, %v429
  %677 = vst.msk [vmem:[%s2 + $0x98] sm:$0xff] %vm657, %v434
  %678 = vst.msk [vmem:[%s2 + $0xa0] sm:$0xff] %vm657, %v439
  %679 = vst.msk [vmem:[%s2 + $0xa8] sm:$0xff] %vm657, %v444
  %680 = vst.msk [vmem:[%s2 + $0xb0] sm:$0xff] %vm657, %v449
  %681 = vst.msk [vmem:[%s2 + $0xb8] sm:$0xff] %vm657, %v454
  %682 = vst.msk [vmem:[%s2 + $0xc0] sm:$0xff] %vm657, %v459
  %683 = vst.msk [vmem:[%s2 + $0xc8] sm:$0xff] %vm657, %v464
  %684 = vst.msk [vmem:[%s2 + $0xd0] sm:$0xff] %vm657, %v469
  %685 = vst.msk [vmem:[%s2 + $0xd8] sm:$0xff] %vm657, %v474
  %686 = vst.msk [vmem:[%s2 + $0xe0] sm:$0xff] %vm657, %v479
  %687 = vst.msk [vmem:[%s2 + $0xe8] sm:$0xff] %vm657, %v484
  %688 = vst.msk [vmem:[%s2 + $0xf0] sm:$0xff] %vm657, %v489
  %689 = vst.msk [vmem:[%s2 + $0xf8] sm:$0xff] %vm657, %v494
  %690 = vst.msk [vmem:[%s2 + $0x100] sm:$0xff] %vm657, %v499
  %691 = vst.msk [vmem:[%s2 + $0x108] sm:$0xff] %vm657, %v504
  %692 = vst.msk [vmem:[%s2 + $0x110] sm:$0xff] %vm657, %v509
  %693 = vst.msk [vmem:[%s2 + $0x118] sm:$0xff] %vm657, %v514
  %694 = vst.msk [vmem:[%s2 + $0x120] sm:$0xff] %vm657, %v519
  %695 = vst.msk [vmem:[%s2 + $0x128] sm:$0xff] %vm657, %v524
  %696 = vst.msk [vmem:[%s2 + $0x130] sm:$0xff] %vm657, %v529
  %697 = vst.msk [vmem:[%s2 + $0x138] sm:$0xff] %vm657, %v534
  %698 = vst.msk [vmem:[%s2 + $0x140] sm:$0xff] %vm657, %v539
  %699 = vst.msk [vmem:[%s2 + $0x148] sm:$0xff] %vm657, %v544
  %700 = vst.msk [vmem:[%s2 + $0x150] sm:$0xff] %vm657, %v549
  %701 = vst.msk [vmem:[%s2 + $0x158] sm:$0xff] %vm657, %v554
  %702 = vst.msk [vmem:[%s2 + $0x160] sm:$0xff] %vm657, %v559
  %703 = vst.msk [vmem:[%s2 + $0x168] sm:$0xff] %vm657, %v564
  %704 = vst.msk [vmem:[%s2 + $0x170] sm:$0xff] %vm657, %v569
  %705 = vst.msk [vmem:[%s2 + $0x178] sm:$0xff] %vm657, %v574
  %706 = vst.msk [vmem:[%s2 + $0x180] sm:$0xff] %vm657, %v579
  %707 = vst.msk [vmem:[%s2 + $0x188] sm:$0xff] %vm657, %v584
  %708 = vst.msk [vmem:[%s2 + $0x190] sm:$0xff] %vm657, %v589
  %709 = vst.msk [vmem:[%s2 + $0x198] sm:$0xff] %vm657, %v594
  %710 = vst.msk [vmem:[%s2 + $0x1a0] sm:$0xff] %vm657, %v599
  %711 = vst.msk [vmem:[%s2 + $0x1a8] sm:$0xff] %vm657, %v604
  %712 = vst.msk [vmem:[%s2 + $0x1b0] sm:$0xff] %vm657, %v609
  %713 = vst.msk [vmem:[%s2 + $0x1b8] sm:$0xff] %vm657, %v614
  %714 = vst.msk [vmem:[%s2 + $0x1c0] sm:$0xff] %vm657, %v619
  %715 = vst.msk [vmem:[%s2 + $0x1c8] sm:$0xff] %vm657, %v624
  %716 = vst.msk [vmem:[%s2 + $0x1d0] sm:$0xff] %vm657, %v629
  %717 = vst.msk [vmem:[%s2 + $0x1d8] sm:$0xff] %vm657, %v634
  %718 = vst.msk [vmem:[%s2 + $0x1e0] sm:$0xff] %vm657, %v639
  %719 = vst.msk [vmem:[%s2 + $0x1e8] sm:$0xff] %vm657, %v644
  %720 = vst.msk [vmem:[%s2 + $0x1f0] sm:$0xff] %vm657, %v649
  %721 = vst.msk [vmem:[%s2 + $0x1f8] sm:$0xff] %vm657, %v654
  %v722 = vsel %vm657, %v339, 0.0
  %v723 = vsel %vm657, %v344, 0.0
  %v724 = vadd.f32 %v722, %v723
  %v725 = vsel %vm657, %v349, 0.0
  %v726 = vadd.f32 %v724, %v725
  %v727 = vsel %vm657, %v354, 0.0
  %v728 = vadd.f32 %v726, %v727
  %v729 = vsel %vm657, %v359, 0.0
  %v730 = vadd.f32 %v728, %v729
  %v731 = vsel %vm657, %v364, 0.0
  %v732 = vadd.f32 %v730, %v731
  %v733 = vsel %vm657, %v369, 0.0
  %v734 = vadd.f32 %v732, %v733
  %v735 = vsel %vm657, %v374, 0.0
  %v736 = vadd.f32 %v734, %v735
  %v737 = vsel %vm657, %v379, 0.0
  %v738 = vadd.f32 %v736, %v737
  %v739 = vsel %vm657, %v384, 0.0
  %v740 = vadd.f32 %v738, %v739
  %v741 = vsel %vm657, %v389, 0.0
  %v742 = vadd.f32 %v740, %v741
  %v743 = vsel %vm657, %v394, 0.0
  %v744 = vadd.f32 %v742, %v743
  %v745 = vsel %vm657, %v399, 0.0
  %v746 = vadd.f32 %v744, %v745
  %v747 = vsel %vm657, %v404, 0.0
  %v748 = vadd.f32 %v746, %v747
  %v749 = vsel %vm657, %v409, 0.0
  %v750 = vadd.f32 %v748, %v749
  %v751 = vsel %vm657, %v414, 0.0
  %v752 = vadd.f32 %v750, %v751
  %v753 = vsel %vm657, %v419, 0.0
  %v754 = vadd.f32 %v752, %v753
  %v755 = vsel %vm657, %v424, 0.0
  %v756 = vadd.f32 %v754, %v755
  %v757 = vsel %vm657, %v429, 0.0
  %v758 = vadd.f32 %v756, %v757
  %v759 = vsel %vm657, %v434, 0.0
  %v760 = vadd.f32 %v758, %v759
  %v761 = vsel %vm657, %v439, 0.0
  %v762 = vadd.f32 %v760, %v761
  %v763 = vsel %vm657, %v444, 0.0
  %v764 = vadd.f32 %v762, %v763
  %v765 = vsel %vm657, %v449, 0.0
  %v766 = vadd.f32 %v764, %v765
  %v767 = vsel %vm657, %v454, 0.0
  %v768 = vadd.f32 %v766, %v767
  %v769 = vsel %vm657, %v459, 0.0
  %v770 = vadd.f32 %v768, %v769
  %v771 = vsel %vm657, %v464, 0.0
  %v772 = vadd.f32 %v770, %v771
  %v773 = vsel %vm657, %v469, 0.0
  %v774 = vadd.f32 %v772, %v773
  %v775 = vsel %vm657, %v474, 0.0
  %v776 = vadd.f32 %v774, %v775
  %v777 = vsel %vm657, %v479, 0.0
  %v778 = vadd.f32 %v776, %v777
  %v779 = vsel %vm657, %v484, 0.0
  %v780 = vadd.f32 %v778, %v779
  %v781 = vsel %vm657, %v489, 0.0
  %v782 = vadd.f32 %v780, %v781
  %v783 = vsel %vm657, %v494, 0.0
  %v784 = vadd.f32 %v782, %v783
  %v785 = vsel %vm657, %v499, 0.0
  %v786 = vadd.f32 %v784, %v785
  %v787 = vsel %vm657, %v504, 0.0
  %v788 = vadd.f32 %v786, %v787
  %v789 = vsel %vm657, %v509, 0.0
  %v790 = vadd.f32 %v788, %v789
  %v791 = vsel %vm657, %v514, 0.0
  %v792 = vadd.f32 %v790, %v791
  %v793 = vsel %vm657, %v519, 0.0
  %v794 = vadd.f32 %v792, %v793
  %v795 = vsel %vm657, %v524, 0.0
  %v796 = vadd.f32 %v794, %v795
  %v797 = vsel %vm657, %v529, 0.0
  %v798 = vadd.f32 %v796, %v797
  %v799 = vsel %vm657, %v534, 0.0
  %v800 = vadd.f32 %v798, %v799
  %v801 = vsel %vm657, %v539, 0.0
  %v802 = vadd.f32 %v800, %v801
  %v803 = vsel %vm657, %v544, 0.0
  %v804 = vadd.f32 %v802, %v803
  %v805 = vsel %vm657, %v549, 0.0
  %v806 = vadd.f32 %v804, %v805
  %v807 = vsel %vm657, %v554, 0.0
  %v808 = vadd.f32 %v806, %v807
  %v809 = vsel %vm657, %v559, 0.0
  %v810 = vadd.f32 %v808, %v809
  %v811 = vsel %vm657, %v564, 0.0
  %v812 = vadd.f32 %v810, %v811
  %v813 = vsel %vm657, %v569, 0.0
  %v814 = vadd.f32 %v812, %v813
  %v815 = vsel %vm657, %v574, 0.0
  %v816 = vadd.f32 %v814, %v815
  %v817 = vsel %vm657, %v579, 0.0
  %v818 = vadd.f32 %v816, %v817
  %v819 = vsel %vm657, %v584, 0.0
  %v820 = vadd.f32 %v818, %v819
  %v821 = vsel %vm657, %v589, 0.0
  %v822 = vadd.f32 %v820, %v821
  %v823 = vsel %vm657, %v594, 0.0
  %v824 = vadd.f32 %v822, %v823
  %v825 = vsel %vm657, %v599, 0.0
  %v826 = vadd.f32 %v824, %v825
  %v827 = vsel %vm657, %v604, 0.0
  %v828 = vadd.f32 %v826, %v827
  %v829 = vsel %vm657, %v609, 0.0
  %v830 = vadd.f32 %v828, %v829
  %v831 = vsel %vm657, %v614, 0.0
  %v832 = vadd.f32 %v830, %v831
  %v833 = vsel %vm657, %v619, 0.0
  %v834 = vadd.f32 %v832, %v833
  %v835 = vsel %vm657, %v624, 0.0
  %v836 = vadd.f32 %v834, %v835
  %v837 = vsel %vm657, %v629, 0.0
  %v838 = vadd.f32 %v836, %v837
  %v839 = vsel %vm657, %v634, 0.0
  %v840 = vadd.f32 %v838, %v839
  %v841 = vsel %vm657, %v639, 0.0
  %v842 = vadd.f32 %v840, %v841
  %v843 = vsel %vm657, %v644, 0.0
  %v844 = vadd.f32 %v842, %v843
  %v845 = vsel %vm657, %v649, 0.0
  %v846 = vadd.f32 %v844, %v845
  %v847 = vsel %vm657, %v654, 0.0
  %v848 = vadd.f32 %v846, %v847
  %v849 = vrot.slane %v848, 4
  %v850 = vadd.f32 %v848, %v849
  %v851 = vrot.slane %v850, 2
  %v852 = vadd.f32 %v850, %v851
  %v853 = vrot.slane %v852, 1
  %v854 = vadd.f32 %v852, %v853
  %v855 = vmul.f32 %v339, %v339
  %v856 = vmul.f32 %v344, %v344
  %v857 = vmul.f32 %v349, %v349
  %v858 = vmul.f32 %v354, %v354
  %v859 = vmul.f32 %v359, %v359
  %v860 = vmul.f32 %v364, %v364
  %v861 = vmul.f32 %v369, %v369
  %v862 = vmul.f32 %v374, %v374
  %v863 = vmul.f32 %v379, %v379
  %v864 = vmul.f32 %v384, %v384
  %v865 = vmul.f32 %v389, %v389
  %v866 = vmul.f32 %v394, %v394
  %v867 = vmul.f32 %v399, %v399
  %v868 = vmul.f32 %v404, %v404
  %v869 = vmul.f32 %v409, %v409
  %v870 = vmul.f32 %v414, %v414
  %v871 = vmul.f32 %v419, %v419
  %v872 = vmul.f32 %v424, %v424
  %v873 = vmul.f32 %v429, %v429
  %v874 = vmul.f32 %v434, %v434
  %v875 = vmul.f32 %v439, %v439
  %v876 = vmul.f32 %v444, %v444
  %v877 = vmul.f32 %v449, %v449
  %v878 = vmul.f32 %v454, %v454
  %v879 = vmul.f32 %v459, %v459
  %v880 = vmul.f32 %v464, %v464
  %v881 = vmul.f32 %v469, %v469
  %v882 = vmul.f32 %v474, %v474
  %v883 = vmul.f32 %v479, %v479
  %v884 = vmul.f32 %v484, %v484
  %v885 = vmul.f32 %v489, %v489
  %v886 = vmul.f32 %v494, %v494
  %v887 = vmul.f32 %v499, %v499
  %v888 = vmul.f32 %v504, %v504
  %v889 = vmul.f32 %v509, %v509
  %v890 = vmul.f32 %v514, %v514
  %v891 = vmul.f32 %v519, %v519
  %v892 = vmul.f32 %v524, %v524
  %v893 = vmul.f32 %v529, %v529
  %v894 = vmul.f32 %v534, %v534
  %v895 = vmul.f32 %v539, %v539
  %v896 = vmul.f32 %v544, %v544
  %v897 = vmul.f32 %v549, %v549
  %v898 = vmul.f32 %v554, %v554
  %v899 = vmul.f32 %v559, %v559
  %v900 = vmul.f32 %v564, %v564
  %v901 = vmul.f32 %v569, %v569
  %v902 = vmul.f32 %v574, %v574
  %v903 = vmul.f32 %v579, %v579
  %v904 = vmul.f32 %v584, %v584
  %v905 = vmul.f32 %v589, %v589
  %v906 = vmul.f32 %v594, %v594
  %v907 = vmul.f32 %v599, %v599
  %v908 = vmul.f32 %v604, %v604
  %v909 = vmul.f32 %v609, %v609
  %v910 = vmul.f32 %v614, %v614
  %v911 = vmul.f32 %v619, %v619
  %v912 = vmul.f32 %v624, %v624
  %v913 = vmul.f32 %v629, %v629
  %v914 = vmul.f32 %v634, %v634
  %v915 = vmul.f32 %v639, %v639
  %v916 = vmul.f32 %v644, %v644
  %v917 = vmul.f32 %v649, %v649
  %v918 = vmul.f32 %v654, %v654
  %v919 = vsel %vm657, %v855, 0.0
  %v920 = vsel %vm657, %v856, 0.0
  %v921 = vadd.f32 %v919, %v920
  %v922 = vsel %vm657, %v857, 0.0
  %v923 = vadd.f32 %v921, %v922
  %v924 = vsel %vm657, %v858, 0.0
  %v925 = vadd.f32 %v923, %v924
  %v926 = vsel %vm657, %v859, 0.0
  %v927 = vadd.f32 %v925, %v926
  %v928 = vsel %vm657, %v860, 0.0
  %v929 = vadd.f32 %v927, %v928
  %v930 = vsel %vm657, %v861, 0.0
  %v931 = vadd.f32 %v929, %v930
  %v932 = vsel %vm657, %v862, 0.0
  %v933 = vadd.f32 %v931, %v932
  %v934 = vsel %vm657, %v863, 0.0
  %v935 = vadd.f32 %v933, %v934
  %v936 = vsel %vm657, %v864, 0.0
  %v937 = vadd.f32 %v935, %v936
  %v938 = vsel %vm657, %v865, 0.0
  %v939 = vadd.f32 %v937, %v938
  %v940 = vsel %vm657, %v866, 0.0
  %v941 = vadd.f32 %v939, %v940
  %v942 = vsel %vm657, %v867, 0.0
  %v943 = vadd.f32 %v941, %v942
  %v944 = vsel %vm657, %v868, 0.0
  %v945 = vadd.f32 %v943, %v944
  %v946 = vsel %vm657, %v869, 0.0
  %v947 = vadd.f32 %v945, %v946
  %v948 = vsel %vm657, %v870, 0.0
  %v949 = vadd.f32 %v947, %v948
  %v950 = vsel %vm657, %v871, 0.0
  %v951 = vadd.f32 %v949, %v950
  %v952 = vsel %vm657, %v872, 0.0
  %v953 = vadd.f32 %v951, %v952
  %v954 = vsel %vm657, %v873, 0.0
  %v955 = vadd.f32 %v953, %v954
  %v956 = vsel %vm657, %v874, 0.0
  %v957 = vadd.f32 %v955, %v956
  %v958 = vsel %vm657, %v875, 0.0
  %v959 = vadd.f32 %v957, %v958
  %v960 = vsel %vm657, %v876, 0.0
  %v961 = vadd.f32 %v959, %v960
  %v962 = vsel %vm657, %v877, 0.0
  %v963 = vadd.f32 %v961, %v962
  %v964 = vsel %vm657, %v878, 0.0
  %v965 = vadd.f32 %v963, %v964
  %v966 = vsel %vm657, %v879, 0.0
  %v967 = vadd.f32 %v965, %v966
  %v968 = vsel %vm657, %v880, 0.0
  %v969 = vadd.f32 %v967, %v968
  %v970 = vsel %vm657, %v881, 0.0
  %v971 = vadd.f32 %v969, %v970
  %v972 = vsel %vm657, %v882, 0.0
  %v973 = vadd.f32 %v971, %v972
  %v974 = vsel %vm657, %v883, 0.0
  %v975 = vadd.f32 %v973, %v974
  %v976 = vsel %vm657, %v884, 0.0
  %v977 = vadd.f32 %v975, %v976
  %v978 = vsel %vm657, %v885, 0.0
  %v979 = vadd.f32 %v977, %v978
  %v980 = vsel %vm657, %v886, 0.0
  %v981 = vadd.f32 %v979, %v980
  %v982 = vsel %vm657, %v887, 0.0
  %v983 = vadd.f32 %v981, %v982
  %v984 = vsel %vm657, %v888, 0.0
  %v985 = vadd.f32 %v983, %v984
  %v986 = vsel %vm657, %v889, 0.0
  %v987 = vadd.f32 %v985, %v986
  %v988 = vsel %vm657, %v890, 0.0
  %v989 = vadd.f32 %v987, %v988
  %v990 = vsel %vm657, %v891, 0.0
  %v991 = vadd.f32 %v989, %v990
  %v992 = vsel %vm657, %v892, 0.0
  %v993 = vadd.f32 %v991, %v992
  %v994 = vsel %vm657, %v893, 0.0
  %v995 = vadd.f32 %v993, %v994
  %v996 = vsel %vm657, %v894, 0.0
  %v997 = vadd.f32 %v995, %v996
  %v998 = vsel %vm657, %v895, 0.0
  %v999 = vadd.f32 %v997, %v998
  %v1000 = vsel %vm657, %v896, 0.0
  %v1001 = vadd.f32 %v999, %v1000
  %v1002 = vsel %vm657, %v897, 0.0
  %v1003 = vadd.f32 %v1001, %v1002
  %v1004 = vsel %vm657, %v898, 0.0
  %v1005 = vadd.f32 %v1003, %v1004
  %v1006 = vsel %vm657, %v899, 0.0
  %v1007 = vadd.f32 %v1005, %v1006
  %v1008 = vsel %vm657, %v900, 0.0
  %v1009 = vadd.f32 %v1007, %v1008
  %v1010 = vsel %vm657, %v901, 0.0
  %v1011 = vadd.f32 %v1009, %v1010
  %v1012 = vsel %vm657, %v902, 0.0
  %v1013 = vadd.f32 %v1011, %v1012
  %v1014 = vsel %vm657, %v903, 0.0
  %v1015 = vadd.f32 %v1013, %v1014
  %v1016 = vsel %vm657, %v904, 0.0
  %v1017 = vadd.f32 %v1015, %v1016
  %v1018 = vsel %vm657, %v905, 0.0
  %v1019 = vadd.f32 %v1017, %v1018
  %v1020 = vsel %vm657, %v906, 0.0
  %v1021 = vadd.f32 %v1019, %v1020
  %v1022 = vsel %vm657, %v907, 0.0
  %v1023 = vadd.f32 %v1021, %v1022
  %v1024 = vsel %vm657, %v908, 0.0
  %v1025 = vadd.f32 %v1023, %v1024
  %v1026 = vsel %vm657, %v909, 0.0
  %v1027 = vadd.f32 %v1025, %v1026
  %v1028 = vsel %vm657, %v910, 0.0
  %v1029 = vadd.f32 %v1027, %v1028
  %v1030 = vsel %vm657, %v911, 0.0
  %v1031 = vadd.f32 %v1029, %v1030
  %v1032 = vsel %vm657, %v912, 0.0
  %v1033 = vadd.f32 %v1031, %v1032
  %v1034 = vsel %vm657, %v913, 0.0
  %v1035 = vadd.f32 %v1033, %v1034
  %v1036 = vsel %vm657, %v914, 0.0
  %v1037 = vadd.f32 %v1035, %v1036
  %v1038 = vsel %vm657, %v915, 0.0
  %v1039 = vadd.f32 %v1037, %v1038
  %v1040 = vsel %vm657, %v916, 0.0
  %v1041 = vadd.f32 %v1039, %v1040
  %v1042 = vsel %vm657, %v917, 0.0
  %v1043 = vadd.f32 %v1041, %v1042
  %v1044 = vsel %vm657, %v918, 0.0
  %v1045 = vadd.f32 %v1043, %v1044
  %v1046 = vrot.slane %v1045, 4
  %v1047 = vadd.f32 %v1045, %v1046
  %v1048 = vrot.slane %v1047, 2
  %v1049 = vadd.f32 %v1047, %v1048
  %v1050 = vrot.slane %v1049, 1
  %v1051 = vadd.f32 %v1049, %v1050
  %vm1052 = vcmask 1040384
  %v1053 = vsel %vm1052, %v854, %v1051
  %vm1054 = vcmask 25600
  %1055 = vst.msk [vmem:[%s3] sm:$0x3] %vm1054, %v1053
  // Predicated region
  $region10: #{deconv_block.4} parent=0 // pred_check
    _
  $region11: #{deconv_block.4} parent=0 // pred_check_branch
    %1057 = sbr.rel (0) target = $region13
  $region12: #{deconv_block.4} parent=0 // pred_region
    _
  $region13: #{deconv_block.4} parent=0 // pred_fallthru
    _
  // Predicated region
  $region14: #{deconv_block.4} parent=0 // pred_check
    _
  $region15: #{deconv_block.4} parent=0 // pred_check_branch
    %1059 = sbr.rel (0) target = $region17
  $region16: #{deconv_block.4} parent=0 // pred_region
    _
  $region17: #{deconv_block.4} parent=0 // pred_fallthru
    _
  // Predicated region
  $region18: #{deconv_block.4} parent=0 // pred_check
    _
  $region19: #{deconv_block.4} parent=0 // pred_check_branch
    %1061 = sbr.rel (0) target = $region21
  $region20: #{deconv_block.4} parent=0 // pred_region
    _
  $region21: #{deconv_block.4} parent=0 // pred_fallthru
    _
  // Predicated region
  $region22: #{deconv_block.4} parent=0 // pred_check
    _
  $region23: #{deconv_block.4} parent=0 // pred_check_branch
    %1063 = sbr.rel (0) target = $region25
  $region24: #{deconv_block.4} parent=0 // pred_region
    _
  $region25: #{deconv_block.4} parent=0 // pred_fallthru
    _

// kernel: deconv_block.5
$region0: #{deconv_block.5}
  #allocation0 [shape = 'u32[]', space=smem, size = 0x4, offset = 0x4, fixed_abs, tag = 'smem constant byte address 0x4 - core index']
  #allocation1 [shape = 'u32[144,128]{1,0:T(1,128)}', space=vmem, size = 0x12000, scoped, tag = 'internal scratch']
  %s0 = inlined_call_operand.vmem [shape: f32[2,16,16,4], index: 0, kind: input, shape index: {}]
  %s1 = inlined_call_operand.vmem [shape: f32[2,2,16,4], index: 1, kind: input, shape index: {}]
  %s2 = inlined_call_operand.vmem [shape: f32[1,4], index: 2, kind: input, shape index: {}]
  %s3 = inlined_call_operand.vmem [shape: f32[1,4], index: 3, kind: input, shape index: {}]
  %s4 = inlined_call_operand.vmem [shape: f32[4,4,16], index: 4, kind: input, shape index: {}]
  %s5 = inlined_call_operand.vmem [shape: f32[2,16,16,16], index: 5, kind: output, shape index: {0}]
  %s6 = inlined_call_operand.vmem [shape: f32[2,2,2,16], index: 6, kind: output, shape index: {1}]
  %7 = xla_tuple %s5, %s6
  %s8 = sld [smem:[#allocation0]]
  $region61: #{deconv_block.5} parent=0
    _
  %s10 = ssub.s32 1, %s8
  %s11 = scalar_select 0, %s10, %s8
  loop: start=0, step=1, limit=6
  $region2: #{deconv_block.5} parent=0 // loop_pre_header
    _
  $region3: #{deconv_block.5} parent=0 // loop_header
    %s13 = sphi 0, %s17
    %p14 = scmp.ge.s32.totalorder %s13, 6
    %s20 = sphi 0, %s32
    %s21 = sphi 0, %s28
    %s22 = sphi 0, %s20
    %s23 = sphi 0, %s21
    %s24 = sphi 0, %s22
    %s25 = sphi 0, %s23
    %s37 = sphi 0, %s39
    %s40 = sphi 0, %s37
    %s41 = sphi 0, %s40
    %s57 = sphi 0, %s41
    %s65 = sphi 0, %s67
    %s68 = sphi 0, %s65
    %s69 = sphi 0, %s68
    %s85 = sphi 0, %s69
    %s89 = sphi 0, %s89
    %s91 = sphi 0, %s89
    %s92 = sphi 0, %s91
    %s106 = sphi 0, %s92
    %s110 = sphi 0, %s110
    %s112 = sphi 0, %s110
    %s113 = sphi 0, %s112
    %s127 = sphi 0, %s113
    %s131 = sphi 0, %s131
    %s133 = sphi 0, %s131
    %s134 = sphi 0, %s133
    %s148 = sphi 0, %s134
    %s156 = sphi 0, %s158
    %s159 = sphi 0, %s156
    %s160 = sphi 0, %s159
    %s176 = sphi 0, %s160
    %s184 = sphi 0, %s186
    %s187 = sphi 0, %s184
    %s188 = sphi 0, %s187
    %s204 = sphi 0, %s188
  $region4: #{deconv_block.5} parent=0 // loop_header_branch
    %16 = sbr.rel (%p14) target = $region8
  $region5: #{deconv_block.5} parent=0 // loop_body
    %s18 = ssub.s32 %s13, 1
    %s19 = ssub.s32 %s13, 2
    %s26 = sadd.s32 1, %s21
    %p27 = scmp.ge.s32.totalorder %s26, 2
    %s28 = scalar_select %p27, 0, %s26
    %s29 = sadd.s32 1, %s20
    %s30 = scalar_select %p27, %s29, %s20
    %p31 = scmp.ge.s32.totalorder %s30, 2
    %s32 = scalar_select %p31, 0, %s30
    %s33 = ssub.s32 %s20, %s32
    %s34 = ssub.s32 %s21, %s28
    %s35 = sor.u32 %s33, %s34
    %p36 = scmp.eq.s32.totalorder %s35, 0
    %s38 = sadd.s32 %s37, 1
    %s39 = scalar_select %p36, %s37, %s38
    %p42 = pneg %p36
    %p43 = scmp.eq.s32.totalorder %s13, 3
    %p44 = por %p42, %p43
    %p45 = scmp.ne.s32.totalorder %s37, %s40
    %p46 = scmp.eq.s32.totalorder %s13, 0
    %p47 = por %p45, %p46
    %p48 = scmp.ne.s32.totalorder %s37, %s40
    %p49 = scmp.eq.s32.totalorder %s18, 3
    %p50 = por %p48, %p49
    %p51 = scmp.ne.s32.totalorder %s40, %s41
    %p52 = scmp.eq.s32.totalorder %s18, 0
    %p53 = por %p51, %p52
    %p54 = scmp.ne.s32.totalorder %s40, %s41
    %p55 = scmp.eq.s32.totalorder %s19, 3
    %p56 = por %p54, %p55
    %p58 = scmp.ne.s32.totalorder %s41, %s57
    %p59 = scmp.eq.s32.totalorder %s19, 0
    %p60 = por %p58, %p59
    %s61 = ssub.s32 %s20, %s32
    %s62 = ssub.s32 %s21, %s28
    %s63 = sor.u32 %s61, %s62
    %p64 = scmp.eq.s32.totalorder %s63, 0
    %s66 = sadd.s32 %s65, 1
    %s67 = scalar_select %p64, %s65, %s66
    %p70 = pneg %p64
    %p71 = scmp.eq.s32.totalorder %s13, 3
    %p72 = por %p70, %p71
    %p73 = scmp.ne.s32.totalorder %s65, %s68
    %p74 = scmp.eq.s32.totalorder %s13, 0
    %p75 = por %p73, %p74
    %p76 = scmp.ne.s32.totalorder %s65, %s68
    %p77 = scmp.eq.s32.totalorder %s18, 3
    %p78 = por %p76, %p77
    %p79 = scmp.ne.s32.totalorder %s68, %s69
    %p80 = scmp.eq.s32.totalorder %s18, 0
    %p81 = por %p79, %p80
    %p82 = scmp.ne.s32.totalorder %s68, %s69
    %p83 = scmp.eq.s32.totalorder %s19, 3
    %p84 = por %p82, %p83
    %p86 = scmp.ne.s32.totalorder %s69, %s85
    %p87 = scmp.eq.s32.totalorder %s19, 0
    %p88 = por %p86, %p87
    %s90 = sadd.s32 %s89, 1
    %p93 = scmp.eq.s32.totalorder %s13, 3
    %p94 = scmp.ne.s32.totalorder %s89, %s91
    %p95 = scmp.eq.s32.totalorder %s13, 0
    %p96 = por %p94, %p95
    %p97 = scmp.ne.s32.totalorder %s89, %s91
    %p98 = scmp.eq.s32.totalorder %s18, 3
    %p99 = por %p97, %p98
    %p100 = scmp.ne.s32.totalorder %s91, %s92
    %p101 = scmp.eq.s32.totalorder %s18, 0
    %p102 = por %p100, %p101
    %p103 = scmp.ne.s32.totalorder %s91, %s92
    %p104 = scmp.eq.s32.totalorder %s19, 3
    %p105 = por %p103, %p104
    %p107 = scmp.ne.s32.totalorder %s92, %s106
    %p108 = scmp.eq.s32.totalorder %s19, 0
    %p109 = por %p107, %p108
    %s111 = sadd.s32 %s110, 1
    %p114 = scmp.eq.s32.totalorder %s13, 3
    %p115 = scmp.ne.s32.totalorder %s110, %s112
    %p116 = scmp.eq.s32.totalorder %s13, 0
    %p117 = por %p115, %p116
    %p118 = scmp.ne.s32.totalorder %s110, %s112
    %p119 = scmp.eq.s32.totalorder %s18, 3
    %p120 = por %p118, %p119
    %p121 = scmp.ne.s32.totalorder %s112, %s113
    %p122 = scmp.eq.s32.totalorder %s18, 0
    %p123 = por %p121, %p122
    %p124 = scmp.ne.s32.totalorder %s112, %s113
    %p125 = scmp.eq.s32.totalorder %s19, 3
    %p126 = por %p124, %p125
    %p128 = scmp.ne.s32.totalorder %s113, %s127
    %p129 = scmp.eq.s32.totalorder %s19, 0
    %p130 = por %p128, %p129
    %s132 = sadd.s32 %s131, 1
    %p135 = scmp.eq.s32.totalorder %s13, 3
    %p136 = scmp.ne.s32.totalorder %s131, %s133
    %p137 = scmp.eq.s32.totalorder %s13, 0
    %p138 = por %p136, %p137
    %p139 = scmp.ne.s32.totalorder %s131, %s133
    %p140 = scmp.eq.s32.totalorder %s18, 3
    %p141 = por %p139, %p140
    %p142 = scmp.ne.s32.totalorder %s133, %s134
    %p143 = scmp.eq.s32.totalorder %s18, 0
    %p144 = por %p142, %p143
    %p145 = scmp.ne.s32.totalorder %s133, %s134
    %p146 = scmp.eq.s32.totalorder %s19, 3
    %p147 = por %p145, %p146
    %p149 = scmp.ne.s32.totalorder %s134, %s148
    %p150 = scmp.eq.s32.totalorder %s19, 0
    %p151 = por %p149, %p150
    %s152 = ssub.s32 %s20, %s32
    %s153 = ssub.s32 %s21, %s28
    %s154 = sor.u32 %s152, %s153
    %p155 = scmp.eq.s32.totalorder %s154, 0
    %s157 = sadd.s32 %s156, 1
    %s158 = scalar_select %p155, %s156, %s157
    %p161 = pneg %p155
    %p162 = scmp.eq.s32.totalorder %s13, 3
    %p163 = por %p161, %p162
    %p164 = scmp.ne.s32.totalorder %s156, %s159
    %p165 = scmp.eq.s32.totalorder %s13, 0
    %p166 = por %p164, %p165
    %p167 = scmp.ne.s32.totalorder %s156, %s159
    %p168 = scmp.eq.s32.totalorder %s18, 3
    %p169 = por %p167, %p168
    %p170 = scmp.ne.s32.totalorder %s159, %s160
    %p171 = scmp.eq.s32.totalorder %s18, 0
    %p172 = por %p170, %p171
    %p173 = scmp.ne.s32.totalorder %s159, %s160
    %p174 = scmp.eq.s32.totalorder %s19, 3
    %p175 = por %p173, %p174
    %p177 = scmp.ne.s32.totalorder %s160, %s176
    %p178 = scmp.eq.s32.totalorder %s19, 0
    %p179 = por %p177, %p178
    %s180 = ssub.s32 %s20, %s32
    %s181 = ssub.s32 %s21, %s28
    %s182 = sor.u32 %s180, %s181
    %p183 = scmp.eq.s32.totalorder %s182, 0
    %s185 = sadd.s32 %s184, 1
    %s186 = scalar_select %p183, %s184, %s185
    %p189 = pneg %p183
    %p190 = scmp.eq.s32.totalorder %s13, 3
    %p191 = por %p189, %p190
    %p192 = scmp.ne.s32.totalorder %s184, %s187
    %p193 = scmp.eq.s32.totalorder %s13, 0
    %p194 = por %p192, %p193
    %p195 = scmp.ne.s32.totalorder %s184, %s187
    %p196 = scmp.eq.s32.totalorder %s18, 3
    %p197 = por %p195, %p196
    %p198 = scmp.ne.s32.totalorder %s187, %s188
    %p199 = scmp.eq.s32.totalorder %s18, 0
    %p200 = por %p198, %p199
    %p201 = scmp.ne.s32.totalorder %s187, %s188
    %p202 = scmp.eq.s32.totalorder %s19, 3
    %p203 = por %p201, %p202
    %p205 = scmp.ne.s32.totalorder %s188, %s204
    %p206 = scmp.eq.s32.totalorder %s19, 0
    %p207 = por %p205, %p206
    %p208 = scmp.le.s32.totalorder 1, %s13
    %p209 = scmp.lt.s32.totalorder %s13, 5
    %p210 = pnand %p208, %p209
    %p211 = pneg %p210
    // Predicated region
    $region9: #{deconv_block.5} parent=5 // pred_check
      _
    $region10: #{deconv_block.5} parent=5 // pred_check_branch
      %213 = sbr.rel (%p210) target = $region12
    $region11: #{deconv_block.5} parent=5 // pred_region
      %s214 = ssub.s32 %s13, 1
      // Predicated region
      $region13: #{deconv_block.5} parent=11 // pred_check
        %p215 = pneg %p102
      $region14: #{deconv_block.5} parent=11 // pred_check_branch
        %217 = sbr.rel (%p215) target = $region16
      $region15: #{deconv_block.5} parent=11 // pred_region
        _
      $region16: #{deconv_block.5} parent=11 // pred_fallthru
        _
      // Predicated region
      $region17: #{deconv_block.5} parent=11 // pred_check
        %p218 = pneg %p123
      $region18: #{deconv_block.5} parent=11 // pred_check_branch
        %220 = sbr.rel (%p218) target = $region20
      $region19: #{deconv_block.5} parent=11 // pred_region
        _
      $region20: #{deconv_block.5} parent=11 // pred_fallthru
        _
      // Predicated region
      $region21: #{deconv_block.5} parent=11 // pred_check
        %p221 = pneg %p144
      $region22: #{deconv_block.5} parent=11 // pred_check_branch
        %223 = sbr.rel (%p221) target = $region24
      $region23: #{deconv_block.5} parent=11 // pred_region
        _
      $region24: #{deconv_block.5} parent=11 // pred_fallthru
        _
    $region12: #{deconv_block.5} parent=5 // pred_fallthru
      _
    %p224 = scmp.lt.s32.totalorder %s13, 4
    // Predicated region
    $region25: #{deconv_block.5} parent=5 // pred_check
      %p225 = pneg %p224
    $region26: #{deconv_block.5} parent=5 // pred_check_branch
      %227 = sbr.rel (%p225) target = $region28
    $region27: #{deconv_block.5} parent=5 // pred_region
      // Predicated region
      $region29: #{deconv_block.5} parent=27 // pred_check
        %p228 = pneg %p47
      $region30: #{deconv_block.5} parent=27 // pred_check_branch
        %230 = sbr.rel (%p228) target = $region32
      $region31: #{deconv_block.5} parent=27 // pred_region
        %s231 = smul.u32 8, %s21
        %p232 = scmp.lt.s32.totalorder %s20, 1
        %s233 = scalar_select %p232, %s20, 1
        %p234 = scmp.lt.s32.totalorder %s231, 15
        %s235 = scalar_select %p234, %s231, 15
        %s236 = smul.addr %s235, 2
        %s237 = smul.addr %s233, 32
        %s238 = sadd.s32 %s236, %s237
        %s239 = smul.addr %s238, 8
        %s240 = scalar_lea.vmem %s0, %s239
        %s241 = smul.u32 8, %s21
      $region32: #{deconv_block.5} parent=27 // pred_fallthru
        _
      // Predicated region
      $region33: #{deconv_block.5} parent=27 // pred_check
        %p242 = pneg %p75
      $region34: #{deconv_block.5} parent=27 // pred_check_branch
        %244 = sbr.rel (%p242) target = $region36
      $region35: #{deconv_block.5} parent=27 // pred_region
        %p245 = scmp.lt.s32.totalorder %s20, 1
        %s246 = scalar_select %p245, %s20, 1
        %p247 = scmp.lt.s32.totalorder %s21, 1
        %s248 = scalar_select %p247, %s21, 1
        %s249 = smul.addr %s248, 2
        %s250 = smul.addr %s246, 4
        %s251 = sadd.s32 %s249, %s250
        %s252 = smul.addr %s251, 8
        %s253 = scalar_lea.vmem %s1, %s252
      $region36: #{deconv_block.5} parent=27 // pred_fallthru
        _
    $region28: #{deconv_block.5} parent=5 // pred_fallthru
      _
    %p254 = scmp.le.s32.totalorder 1, %s13
    %p255 = scmp.lt.s32.totalorder %s13, 5
    %p256 = pnand %p254, %p255
    %p257 = pneg %p256
    // Predicated region
    $region37: #{deconv_block.5} parent=5 // pred_check
      _
    $region38: #{deconv_block.5} parent=5 // pred_check_branch
      %259 = sbr.rel (%p256) target = $region40
    $region39: #{deconv_block.5} parent=5 // pred_region
      %s260 = ssub.s32 %s13, 1
      %s261 = smul.u32 8, %s23
      %p262 = scmp.lt.s32.totalorder %s22, 1
      %s263 = scalar_select %p262, %s22, 1
      %p264 = scmp.lt.s32.totalorder %s261, 15
      %s265 = scalar_select %p264, %s261, 15
      %s266 = smul.addr %s265, 2
      %s267 = smul.addr %s263, 32
      %s268 = sadd.s32 %s266, %s267
      %s269 = smul.addr %s268, 8
      %s270 = scalar_lea.vmem %s0, %s269
      %p271 = pneg %p53
      %p272 = pneg %p50
      %p273 = scmp.lt.s32.totalorder %s22, 1
      %s274 = scalar_select %p273, %s22, 1
      %p275 = scmp.lt.s32.totalorder %s23, 1
      %s276 = scalar_select %p275, %s23, 1
      %s277 = smul.addr %s276, 2
      %s278 = smul.addr %s274, 4
      %s279 = sadd.s32 %s277, %s278
      %s280 = smul.addr %s279, 8
      %s281 = scalar_lea.vmem %s1, %s280
      %p282 = pneg %p81
      %p283 = pneg %p78
      %p284 = pneg %p102
      %p285 = pneg %p99
      %p286 = pneg %p123
      %p287 = pneg %p120
      %p288 = pneg %p144
      %p289 = pneg %p141
      %p290 = pneg %p172
      %p291 = pneg %p169
      %s292 = smul.u32 8, %s23
      %p293 = scmp.lt.s32.totalorder %s22, 1
      %s294 = scalar_select %p293, %s22, 1
      %p295 = scmp.lt.s32.totalorder %s292, 15
      %s296 = scalar_select %p295, %s292, 15
      %s297 = smul.addr %s296, 2
      %s298 = smul.addr %s294, 32
      %s299 = sadd.s32 %s297, %s298
      %s300 = smul.addr %s299, 8
      %s301 = scalar_lea.vmem %s5, %s300
      %p302 = pneg %p200
      %p303 = pneg %p197
      %p304 = scmp.lt.s32.totalorder %s22, 1
      %s305 = scalar_select %p304, %s22, 1
      %p306 = scmp.lt.s32.totalorder %s23, 1
      %s307 = scalar_select %p306, %s23, 1
      %s308 = smul.addr %s305, 2
      %s309 = sadd.s32 %s307, %s308
      %s310 = smul.addr %s309, 2
      %s311 = scalar_lea.vmem %s6, %s310
      %s312 = smul.u32 8, %s23
      %p313 = scmp.lt.s32.totalorder %s22, 1
      %s314 = scalar_select %p313, %s22, 1
      %p315 = scmp.lt.s32.totalorder %s312, 15
      %s316 = scalar_select %p315, %s312, 15
      %s317 = smul.addr %s316, 2
      %s318 = smul.addr %s314, 32
      %s319 = sadd.s32 %s317, %s318
      %s320 = smul.addr %s319, 8
      %s321 = scalar_lea.vmem %s0, %s320
      %s322 = smul.u32 8, %s23
      %p323 = scmp.lt.s32.totalorder %s22, 1
      %s324 = scalar_select %p323, %s22, 1
      %p325 = scmp.lt.s32.totalorder %s23, 1
      %s326 = scalar_select %p325, %s23, 1
      %s327 = smul.addr %s326, 2
      %s328 = smul.addr %s324, 4
      %s329 = sadd.s32 %s327, %s328
      %s330 = smul.addr %s329, 8
      %s331 = scalar_lea.vmem %s1, %s330
      %s332 = smul.u32 8, %s23
      %p333 = scmp.lt.s32.totalorder %s22, 1
      %s334 = scalar_select %p333, %s22, 1
      %p335 = scmp.lt.s32.totalorder %s332, 15
      %s336 = scalar_select %p335, %s332, 15
      %s337 = smul.addr %s336, 2
      %s338 = smul.addr %s334, 32
      %s339 = sadd.s32 %s337, %s338
      %s340 = smul.addr %s339, 8
      %s341 = scalar_lea.vmem %s5, %s340
      %s342 = smul.u32 8, %s23
      %p343 = scmp.lt.s32.totalorder %s22, 1
      %s344 = scalar_select %p343, %s22, 1
      %p345 = scmp.lt.s32.totalorder %s23, 1
      %s346 = scalar_select %p345, %s23, 1
      %s347 = smul.addr %s344, 2
      %s348 = sadd.s32 %s346, %s347
      %s349 = smul.addr %s348, 2
      %s350 = scalar_lea.vmem %s6, %s349
      %v351 = vld [vmem:[%s2] sm:$0x1]
      %v352 = vld [vmem:[%s3] sm:$0x1]
      %v353 = vld [vmem:[%s321] sm:$0xff]
      %v354 = vld [vmem:[%s321 + $0x8] sm:$0xff]
      %v355 = vld [vmem:[%s321 + $0x10] sm:$0xff]
      %v356 = vld [vmem:[%s321 + $0x18] sm:$0xff]
      %v357 = vld [vmem:[%s321 + $0x20] sm:$0xff]
      %v358 = vld [vmem:[%s321 + $0x28] sm:$0xff]
      %v359 = vld [vmem:[%s321 + $0x30] sm:$0xff]
      %v360 = vld [vmem:[%s321 + $0x38] sm:$0xff]
      %v361 = vld [vmem:[%s321 + $0x40] sm:$0xff]
      %v362 = vld [vmem:[%s321 + $0x48] sm:$0xff]
      %v363 = vld [vmem:[%s321 + $0x50] sm:$0xff]
      %v364 = vld [vmem:[%s321 + $0x58] sm:$0xff]
      %v365 = vld [vmem:[%s321 + $0x60] sm:$0xff]
      %v366 = vld [vmem:[%s321 + $0x68] sm:$0xff]
      %v367 = vld [vmem:[%s321 + $0x70] sm:$0xff]
      %v368 = vld [vmem:[%s321 + $0x78] sm:$0xff]
      %v370 = vlaneseq
      %v371 = vshrl.u32 %v370, 7
      %v372 = vsub.s32 0, %v371
      %v373 = vrot.slane %v351, %v372
      %v375 = vmul.f32 %v353, %v373
      %v376 = vmul.f32 %v354, %v373
      %v377 = vmul.f32 %v355, %v373
      %v378 = vmul.f32 %v356, %v373
      %v379 = vmul.f32 %v357, %v373
      %v380 = vmul.f32 %v358, %v373
      %v381 = vmul.f32 %v359, %v373
      %v382 = vmul.f32 %v360, %v373
      %v383 = vmul.f32 %v361, %v373
      %v384 = vmul.f32 %v362, %v373
      %v385 = vmul.f32 %v363, %v373
      %v386 = vmul.f32 %v364, %v373
      %v387 = vmul.f32 %v365, %v373
      %v388 = vmul.f32 %v366, %v373
      %v389 = vmul.f32 %v367, %v373
      %v390 = vmul.f32 %v368, %v373
      %v392 = vlaneseq
      %v393 = vshrl.u32 %v392, 7
      %v394 = vsub.s32 0, %v393
      %v395 = vrot.slane %v352, %v394
      %v397 = vadd.f32 %v375, %v395
      %v398 = vadd.f32 %v376, %v395
      %v399 = vadd.f32 %v377, %v395
      %v400 = vadd.f32 %v378, %v395
      %v401 = vadd.f32 %v379, %v395
      %v402 = vadd.f32 %v380, %v395
      %v403 = vadd.f32 %v381, %v395
      %v404 = vadd.f32 %v382, %v395
      %v405 = vadd.f32 %v383, %v395
      %v406 = vadd.f32 %v384, %v395
      %v407 = vadd.f32 %v385, %v395
      %v408 = vadd.f32 %v386, %v395
      %v409 = vadd.f32 %v387, %v395
      %v410 = vadd.f32 %v388, %v395
      %v411 = vadd.f32 %v389, %v395
      %v412 = vadd.f32 %v390, %v395
      %v413 = vmax.f32 %v397, 0.0
      %v414 = vmax.f32 %v398, 0.0
      %v415 = vmax.f32 %v399, 0.0
      %v416 = vmax.f32 %v400, 0.0
      %v417 = vmax.f32 %v401, 0.0
      %v418 = vmax.f32 %v402, 0.0
      %v419 = vmax.f32 %v403, 0.0
      %v420 = vmax.f32 %v404, 0.0
      %v421 = vmax.f32 %v405, 0.0
      %v422 = vmax.f32 %v406, 0.0
      %v423 = vmax.f32 %v407, 0.0
      %v424 = vmax.f32 %v408, 0.0
      %v425 = vmax.f32 %v409, 0.0
      %v426 = vmax.f32 %v410, 0.0
      %v427 = vmax.f32 %v411, 0.0
      %v428 = vmax.f32 %v412, 0.0
      %s429 = smul.u32 %s23, 8
      %v430 = vstv %s429
      %v431 = vadd.s32 %v430, 1
      %v432 = vadd.s32 %v430, 2
      %v433 = vadd.s32 %v430, 3
      %v434 = vadd.s32 %v430, 4
      %v435 = vadd.s32 %v430, 5
      %v436 = vadd.s32 %v430, 6
      %v437 = vadd.s32 %v430, 7
      %vm438 = vcmp.lt.s32.totalorder %v430, 16
      %vm439 = vcmp.lt.s32.totalorder %v431, 16
      %vm440 = vcmp.lt.s32.totalorder %v432, 16
      %vm441 = vcmp.lt.s32.totalorder %v433, 16
      %vm442 = vcmp.lt.s32.totalorder %v434, 16
      %vm443 = vcmp.lt.s32.totalorder %v435, 16
      %vm444 = vcmp.lt.s32.totalorder %v436, 16
      %vm445 = vcmp.lt.s32.totalorder %v437, 16
      %v446 = vsel %vm438, 1, 0
      %v447 = vsel %vm439, 1, 0
      %v448 = vsel %vm440, 1, 0
      %v449 = vsel %vm441, 1, 0
      %v450 = vsel %vm442, 1, 0
      %v451 = vsel %vm443, 1, 0
      %v452 = vsel %vm444, 1, 0
      %v453 = vsel %vm445, 1, 0
      %v454 = vcvt.s32.f32 %v446
      %v455 = vcvt.s32.f32 %v447
      %v456 = vcvt.s32.f32 %v448
      %v457 = vcvt.s32.f32 %v449
      %v458 = vcvt.s32.f32 %v450
      %v459 = vcvt.s32.f32 %v451
      %v460 = vcvt.s32.f32 %v452
      %v461 = vcvt.s32.f32 %v453
      %v462 = vmul.f32 %v413, %v454
      %v463 = vmul.f32 %v414, %v454
      %v464 = vmul.f32 %v415, %v455
      %v465 = vmul.f32 %v416, %v455
      %v466 = vmul.f32 %v417, %v456
      %v467 = vmul.f32 %v418, %v456
      %v468 = vmul.f32 %v419, %v457
      %v469 = vmul.f32 %v420, %v457
      %v470 = vmul.f32 %v421, %v458
      %v471 = vmul.f32 %v422, %v458
      %v472 = vmul.f32 %v423, %v459
      %v473 = vmul.f32 %v424, %v459
      %v474 = vmul.f32 %v425, %v460
      %v475 = vmul.f32 %v426, %v460
      %v476 = vmul.f32 %v427, %v461
      %v477 = vmul.f32 %v428, %v461
      %v478 = vld [vmem:[%s331] sm:$0xff]
      %v479 = vld [vmem:[%s331 + $0x8] sm:$0xff]
      %v480 = vmul.f32 %v478, %v373
      %v481 = vmul.f32 %v479, %v373
      %v482 = vadd.f32 %v480, %v395
      %v483 = vadd.f32 %v481, %v395
      %v484 = vmax.f32 %v482, 0.0
      %v485 = vmax.f32 %v483, 0.0
      %s486 = sadd.s32 %s23, 1
      %s487 = smul.u32 %s486, 8
      %p488 = scmp.lt.s32.totalorder %s487, 16
      %s489 = scalar_select %p488, 1, 0
      %s490 = scvt.s32.f32 %s489
      %v491 = vstv %s490
      %v492 = vmul.f32 %v484, %v491
      %v493 = vmul.f32 %v485, %v491
      %vm510 = vcmask 1046528
      %v511 = vrot.slane %v462, 1
      %v512 = vrot.slane %v463, 1
      %v513 = vsel %vm510, %v511, %v512
      %v514 = vrot.slane %v464, 1
      %v515 = vrot.slane %v465, 1
      %v516 = vsel %vm510, %v514, %v515
      %v517 = vrot.slane %v466, 1
      %v518 = vrot.slane %v467, 1
      %v519 = vsel %vm510, %v517, %v518
      %v520 = vrot.slane %v468, 1
      %v521 = vrot.slane %v469, 1
      %v522 = vsel %vm510, %v520, %v521
      %v523 = vrot.slane %v470, 1
      %v524 = vrot.slane %v471, 1
      %v525 = vsel %vm510, %v523, %v524
      %v526 = vrot.slane %v472, 1
      %v527 = vrot.slane %v473, 1
      %v528 = vsel %vm510, %v526, %v527
      %v529 = vrot.slane %v474, 1
      %v530 = vrot.slane %v475, 1
      %v531 = vsel %vm510, %v529, %v530
      %v532 = vrot.slane %v476, 1
      %v533 = vrot.slane %v477, 1
      %v534 = vsel %vm510, %v532, %v533
      %v543 = vsel %vm510, %v512, 0.0
      %v544 = vsel %vm510, %v515, 0.0
      %v545 = vsel %vm510, %v518, 0.0
      %v546 = vsel %vm510, %v521, 0.0
      %v547 = vsel %vm510, %v524, 0.0
      %v548 = vsel %vm510, %v527, 0.0
      %v549 = vsel %vm510, %v530, 0.0
      %v550 = vsel %vm510, %v533, 0.0
      %v553 = vrot.slane %v492, 1
      %v554 = vrot.slane %v493, 1
      %v555 = vsel %vm510, %v553, %v554
      %v557 = vsel %vm510, %v554, 0.0
      %v558 = vld [vmem:[%s4] sm:$0xf]
      %s559 = scalar_lea.vmem %s4, 4
      %v560 = vld [vmem:[%s559] sm:$0xf]
      %vm561 = vcmask 31744
      %v562 = vsel %vm561, %v513, 0
      %v565 = vsel %vm561, %v543, 0
      %v567 = vsel %vm561, %v516, 0
      %v570 = vsel %vm561, %v544, 0
      %v572 = vsel %vm561, %v519, 0
      %v575 = vsel %vm561, %v545, 0
      %v577 = vsel %vm561, %v522, 0
      %v580 = vsel %vm561, %v546, 0
      %v582 = vsel %vm561, %v525, 0
      %v585 = vsel %vm561, %v547, 0
      %v587 = vsel %vm561, %v528, 0
      %v590 = vsel %vm561, %v548, 0
      %v592 = vsel %vm561, %v531, 0
      %v595 = vsel %vm561, %v549, 0
      %v597 = vsel %vm561, %v534, 0
      %v600 = vsel %vm561, %v550, 0
      %vm602 = vcmask 1043456
      %v604 = vsel %vm602, %v560, 0
      %606 = vmatprep.subr.mxu0 0.0
      %607 = vmatpush1.msra.mxu0 %v604
      %608 = vmatprep.subr.mxu0 0.0
      %609 = vmatpush1.msra.mxu0 0.0
      %610 = vmatprep.subr.mxu0 0.0
      %611 = vmatpush1.msra.mxu0 0.0
      %612 = vmatprep.subr.mxu0 0.0
      %613 = vmatpush1.msra.mxu0 0.0
      %614 = vmatprep.subr.mxu0 0.0
      %615 = vmatpush1.msra.mxu0 0.0
      %616 = vmatprep.subr.mxu0 0.0
      %617 = vmatpush1.msra.mxu0 0.0
      %618 = vmatprep.subr.mxu0 0.0
      %619 = vmatpush1.msra.mxu0 0.0
      %620 = vmatprep.subr.mxu0 0.0
      %621 = vmatpush1.msra.mxu0 0.0
      %622 = vmatprep.subr.mxu0 0.0
      %623 = vmatpush1.msra.mxu0 0.0
      %624 = vmatprep.subr.mxu0 0.0
      %625 = vmatpush1.msra.mxu0 0.0
      %626 = vmatprep.subr.mxu0 0.0
      %627 = vmatpush1.msra.mxu0 0.0
      %628 = vmatprep.subr.mxu0 0.0
      %629 = vmatpush1.msra.mxu0 0.0
      %630 = vmatprep.subr.mxu0 0.0
      %631 = vmatpush1.msra.mxu0 0.0
      %632 = vmatprep.subr.mxu0 0.0
      %633 = vmatpush1.msra.mxu0 0.0
      %634 = vmatprep.subr.mxu0 0.0
      %635 = vmatpush1.msra.mxu0 0.0
      %636 = vmatprep.subr.mxu0 0.0
      %637 = vmatpush1.msra.mxu0 0.0
      %638 = vmatprep.subr.mxu0 0.0
      %639 = vmatpush1.msra.mxu0 0.0
      %640 = vmatprep.subr.mxu0 0.0
      %641 = vmatpush1.msra.mxu0 0.0
      %642 = vmatprep.subr.mxu0 0.0
      %643 = vmatpush1.msra.mxu0 0.0
      %644 = vmatprep.subr.mxu0 0.0
      %645 = vmatpush1.msra.mxu0 0.0
      %646 = vmatprep.subr.mxu0 0.0
      %647 = vmatpush1.msra.mxu0 0.0
      %648 = vmatprep.subr.mxu0 0.0
      %649 = vmatpush1.msra.mxu0 0.0
      %650 = vmatprep.subr.mxu0 0.0
      %651 = vmatpush1.msra.mxu0 0.0
      %652 = vmatprep.subr.mxu0 0.0
      %653 = vmatpush1.msra.mxu0 0.0
      %654 = vmatprep.subr.mxu0 0.0
      %655 = vmatpush1.msra.mxu0 0.0
      %656 = vmatprep.subr.mxu0 0.0
      %657 = vmatpush1.msra.mxu0 0.0
      %658 = vmatprep.subr.mxu0 0.0
      %659 = vmatpush1.msra.mxu0 0.0
      %660 = vmatprep.subr.mxu0 0.0
      %661 = vmatpush1.msra.mxu0 0.0
      %662 = vmatprep.subr.mxu0 0.0
      %663 = vmatpush1.msra.mxu0 0.0
      %664 = vmatprep.subr.mxu0 0.0
      %665 = vmatpush1.msra.mxu0 0.0
      %666 = vmatprep.subr.mxu0 0.0
      %667 = vmatpush1.msra.mxu0 0.0
      %668 = vmatprep.subr.mxu0 0.0
      %669 = vmatpush1.msra.mxu0 0.0
      %670 = vmatprep.mubr.f32.mxu0 0.0
      %671 = vmatmul.mubr.f32.gmra.mrb[0].mxu0 %v562
      %v672 = vpop.f32.mrb[0].mxu0
      %v673 = vadd.f32 0.0, %v672
      %v674 = vpop.f32.mrb[0].mxu0
      %675 = vmatprep.mubr.f32.mxu0 0.0
      %676 = vmatmul.mubr.f32.gmra.mrb[0].mxu0 %v565
      %v677 = vpop.f32.mrb[0].mxu0
      %v678 = vadd.f32 0.0, %v677
      %v679 = vpop.f32.mrb[0].mxu0
      %680 = vmatprep.mubr.f32.mxu0 0.0
      %681 = vmatmul.mubr.f32.gmra.mrb[0].mxu0 %v567
      %v682 = vpop.f32.mrb[0].mxu0
      %v683 = vadd.f32 0.0, %v682
      %v684 = vpop.f32.mrb[0].mxu0
      %685 = vmatprep.mubr.f32.mxu0 0.0
      %686 = vmatmul.mubr.f32.gmra.mrb[0].mxu0 %v570
      %v687 = vpop.f32.mrb[0].mxu0
      %v688 = vadd.f32 0.0, %v687
      %v689 = vpop.f32.mrb[0].mxu0
      %690 = vmatprep.mubr.f32.mxu0 0.0
      %691 = vmatmul.mubr.f32.gmra.mrb[0].mxu0 %v572
      %v692 = vpop.f32.mrb[0].mxu0
      %v693 = vadd.f32 0.0, %v692
      %v694 = vpop.f32.mrb[0].mxu0
      %695 = vmatprep.mubr.f32.mxu0 0.0
      %696 = vmatmul.mubr.f32.gmra.mrb[0].mxu0 %v575
      %v697 = vpop.f32.mrb[0].mxu0
      %v698 = vadd.f32 0.0, %v697
      %v699 = vpop.f32.mrb[0].mxu0
      %700 = vmatprep.mubr.f32.mxu0 0.0
      %701 = vmatmul.mubr.f32.gmra.mrb[0].mxu0 %v577
      %v702 = vpop.f32.mrb[0].mxu0
      %v703 = vadd.f32 0.0, %v702
      %v704 = vpop.f32.mrb[0].mxu0
      %705 = vmatprep.mubr.f32.mxu0 0.0
      %706 = vmatmul.mubr.f32.gmra.mrb[0].mxu0 %v580
      %v707 = vpop.f32.mrb[0].mxu0
      %v708 = vadd.f32 0.0, %v707
      %v709 = vpop.f32.mrb[0].mxu0
      %710 = vmatprep.mubr.f32.mxu0 0.0
      %711 = vmatmul.mubr.f32.gmra.mrb[0].mxu0 %v582
      %v712 = vpop.f32.mrb[0].mxu0
      %v713 = vadd.f32 0.0, %v712
      %v714 = vpop.f32.mrb[0].mxu0
      %715 = vmatprep.mubr.f32.mxu0 0.0
      %716 = vmatmul.mubr.f32.gmra.mrb[0].mxu0 %v585
      %v717 = vpop.f32.mrb[0].mxu0
      %v718 = vadd.f32 0.0, %v717
      %v719 = vpop.f32.mrb[0].mxu0
      %720 = vmatprep.mubr.f32.mxu0 0.0
      %721 = vmatmul.mubr.f32.gmra.mrb[0].mxu0 %v587
      %v722 = vpop.f32.mrb[0].mxu0
      %v723 = vadd.f32 0.0, %v722
      %v724 = vpop.f32.mrb[0].mxu0
      %725 = vmatprep.mubr.f32.mxu0 0.0
      %726 = vmatmul.mubr.f32.gmra.mrb[0].mxu0 %v590
      %v727 = vpop.f32.mrb[0].mxu0
      %v728 = vadd.f32 0.0, %v727
      %v729 = vpop.f32.mrb[0].mxu0
      %730 = vmatprep.mubr.f32.mxu0 0.0
      %731 = vmatmul.mubr.f32.gmra.mrb[0].mxu0 %v592
      %v732 = vpop.f32.mrb[0].mxu0
      %v733 = vadd.f32 0.0, %v732
      %v734 = vpop.f32.mrb[0].mxu0
      %735 = vmatprep.mubr.f32.mxu0 0.0
      %736 = vmatmul.mubr.f32.gmra.mrb[0].mxu0 %v595
      %v737 = vpop.f32.mrb[0].mxu0
      %v738 = vadd.f32 0.0, %v737
      %v739 = vpop.f32.mrb[0].mxu0
      %740 = vmatprep.mubr.f32.mxu0 0.0
      %741 = vmatmul.mubr.f32.gmra.mrb[0].mxu0 %v597
      %v742 = vpop.f32.mrb[0].mxu0
      %v743 = vadd.f32 0.0, %v742
      %v744 = vpop.f32.mrb[0].mxu0
      %745 = vmatprep.mubr.f32.mxu0 0.0
      %746 = vmatmul.mubr.f32.gmra.mrb[0].mxu0 %v600
      %v747 = vpop.f32.mrb[0].mxu0
      %v748 = vadd.f32 0.0, %v747
      %v749 = vpop.f32.mrb[0].mxu0
      %750 = vdwg.mxu0
      %v751 = vsel %vm561, %v462, 0
      %v753 = vsel %vm561, %v463, 0
      %v755 = vsel %vm561, %v464, 0
      %v757 = vsel %vm561, %v465, 0
      %v759 = vsel %vm561, %v466, 0
      %v761 = vsel %vm561, %v467, 0
      %v763 = vsel %vm561, %v468, 0
      %v765 = vsel %vm561, %v469, 0
      %v767 = vsel %vm561, %v470, 0
      %v769 = vsel %vm561, %v471, 0
      %v771 = vsel %vm561, %v472, 0
      %v773 = vsel %vm561, %v473, 0
      %v775 = vsel %vm561, %v474, 0
      %v777 = vsel %vm561, %v475, 0
      %v779 = vsel %vm561, %v476, 0
      %v781 = vsel %vm561, %v477, 0
      %v784 = vsel %vm602, %v558, 0
      %786 = vmatprep.subr.mxu0 0.0
      %787 = vmatpush1.msra.mxu0 %v784
      %788 = vmatprep.subr.mxu0 0.0
      %789 = vmatpush1.msra.mxu0 0.0
      %790 = vmatprep.subr.mxu0 0.0
      %791 = vmatpush1.msra.mxu0 0.0
      %792 = vmatprep.subr.mxu0 0.0
      %793 = vmatpush1.msra.mxu0 0.0
      %794 = vmatprep.subr.mxu0 0.0
      %795 = vmatpush1.msra.mxu0 0.0
      %796 = vmatprep.subr.mxu0 0.0
      %797 = vmatpush1.msra.mxu0 0.0
      %798 = vmatprep.subr.mxu0 0.0
      %799 = vmatpush1.msra.mxu0 0.0
      %800 = vmatprep.subr.mxu0 0.0
      %801 = vmatpush1.msra.mxu0 0.0
      %802 = vmatprep.subr.mxu0 0.0
      %803 = vmatpush1.msra.mxu0 0.0
      %804 = vmatprep.subr.mxu0 0.0
      %805 = vmatpush1.msra.mxu0 0.0
      %806 = vmatprep.subr.mxu0 0.0
      %807 = vmatpush1.msra.mxu0 0.0
      %808 = vmatprep.subr.mxu0 0.0
      %809 = vmatpush1.msra.mxu0 0.0
      %810 = vmatprep.subr.mxu0 0.0
      %811 = vmatpush1.msra.mxu0 0.0
      %812 = vmatprep.subr.mxu0 0.0
      %813 = vmatpush1.msra.mxu0 0.0
      %814 = vmatprep.subr.mxu0 0.0
      %815 = vmatpush1.msra.mxu0 0.0
      %816 = vmatprep.subr.mxu0 0.0
      %817 = vmatpush1.msra.mxu0 0.0
      %818 = vmatprep.subr.mxu0 0.0
      %819 = vmatpush1.msra.mxu0 0.0
      %820 = vmatprep.subr.mxu0 0.0
      %821 = vmatpush1.msra.mxu0 0.0
      %822 = vmatprep.subr.mxu0 0.0
      %823 = vmatpush1.msra.mxu0 0.0
      %824 = vmatprep.subr.mxu0 0.0
      %825 = vmatpush1.msra.mxu0 0.0
      %826 = vmatprep.subr.mxu0 0.0
      %827 = vmatpush1.msra.mxu0 0.0
      %828 = vmatprep.subr.mxu0 0.0
      %829 = vmatpush1.msra.mxu0 0.0
      %830 = vmatprep.subr.mxu0 0.0
      %831 = vmatpush1.msra.mxu0 0.0
      %832 = vmatprep.subr.mxu0 0.0
      %833 = vmatpush1.msra.mxu0 0.0
      %834 = vmatprep.subr.mxu0 0.0
      %835 = vmatpush1.msra.mxu0 0.0
      %836 = vmatprep.subr.mxu0 0.0
      %837 = vmatpush1.msra.mxu0 0.0
      %838 = vmatprep.subr.mxu0 0.0
      %839 = vmatpush1.msra.mxu0 0.0
      %840 = vmatprep.subr.mxu0 0.0
      %841 = vmatpush1.msra.mxu0 0.0
      %842 = vmatprep.subr.mxu0 0.0
      %843 = vmatpush1.msra.mxu0 0.0
      %844 = vmatprep.subr.mxu0 0.0
      %845 = vmatpush1.msra.mxu0 0.0
      %846 = vmatprep.subr.mxu0 0.0
      %847 = vmatpush1.msra.mxu0 0.0
      %848 = vmatprep.subr.mxu0 0.0
      %849 = vmatpush1.msra.mxu0 0.0
      %850 = vmatprep.mubr.f32.mxu0 0.0
      %851 = vmatmul.mubr.f32.gmra.mrb[0].mxu0 %v751
      %v852 = vpop.f32.mrb[0].mxu0
      %v853 = vadd.f32 %v673, %v852
      %v854 = vpop.f32.mrb[0].mxu0
      %855 = vmatprep.mubr.f32.mxu0 0.0
      %856 = vmatmul.mubr.f32.gmra.mrb[0].mxu0 %v753
      %v857 = vpop.f32.mrb[0].mxu0
      %v858 = vadd.f32 %v678, %v857
      %v859 = vpop.f32.mrb[0].mxu0
      %860 = vmatprep.mubr.f32.mxu0 0.0
      %861 = vmatmul.mubr.f32.gmra.mrb[0].mxu0 %v755
      %v862 = vpop.f32.mrb[0].mxu0
      %v863 = vadd.f32 %v683, %v862
      %v864 = vpop.f32.mrb[0].mxu0
      %865 = vmatprep.mubr.f32.mxu0 0.0
      %866 = vmatmul.mubr.f32.gmra.mrb[0].mxu0 %v757
      %v867 = vpop.f32.mrb[0].mxu0
      %v868 = vadd.f32 %v688, %v867
      %v869 = vpop.f32.mrb[0].mxu0
      %870 = vmatprep.mubr.f32.mxu0 0.0
      %871 = vmatmul.mubr.f32.gmra.mrb[0].mxu0 %v759
      %v872 = vpop.f32.mrb[0].mxu0
      %v873 = vadd.f32 %v693, %v872
      %v874 = vpop.f32.mrb[0].mxu0
      %875 = vmatprep.mubr.f32.mxu0 0.0
      %876 = vmatmul.mubr.f32.gmra.mrb[0].mxu0 %v761
      %v877 = vpop.f32.mrb[0].mxu0
      %v878 = vadd.f32 %v698, %v877
      %v879 = vpop.f32.mrb[0].mxu0
      %880 = vmatprep.mubr.f32.mxu0 0.0
      %881 = vmatmul.mubr.f32.gmra.mrb[0].mxu0 %v763
      %v882 = vpop.f32.mrb[0].mxu0
      %v883 = vadd.f32 %v703, %v882
      %v884 = vpop.f32.mrb[0].mxu0
      %885 = vmatprep.mubr.f32.mxu0 0.0
      %886 = vmatmul.mubr.f32.gmra.mrb[0].mxu0 %v765
      %v887 = vpop.f32.mrb[0].mxu0
      %v888 = vadd.f32 %v708, %v887
      %v889 = vpop.f32.mrb[0].mxu0
      %890 = vmatprep.mubr.f32.mxu0 0.0
      %891 = vmatmul.mubr.f32.gmra.mrb[0].mxu0 %v767
      %v892 = vpop.f32.mrb[0].mxu0
      %v893 = vadd.f32 %v713, %v892
      %v894 = vpop.f32.mrb[0].mxu0
      %895 = vmatprep.mubr.f32.mxu0 0.0
      %896 = vmatmul.mubr.f32.gmra.mrb[0].mxu0 %v769
      %v897 = vpop.f32.mrb[0].mxu0
      %v898 = vadd.f32 %v718, %v897
      %v899 = vpop.f32.mrb[0].mxu0
      %900 = vmatprep.mubr.f32.mxu0 0.0
      %901 = vmatmul.mubr.f32.gmra.mrb[0].mxu0 %v771
      %v902 = vpop.f32.mrb[0].mxu0
      %v903 = vadd.f32 %v723, %v902
      %v904 = vpop.f32.mrb[0].mxu0
      %905 = vmatprep.mubr.f32.mxu0 0.0
      %906 = vmatmul.mubr.f32.gmra.mrb[0].mxu0 %v773
      %v907 = vpop.f32.mrb[0].mxu0
      %v908 = vadd.f32 %v728, %v907
      %v909 = vpop.f32.mrb[0].mxu0
      %910 = vmatprep.mubr.f32.mxu0 0.0
      %911 = vmatmul.mubr.f32.gmra.mrb[0].mxu0 %v775
      %v912 = vpop.f32.mrb[0].mxu0
      %v913 = vadd.f32 %v733, %v912
      %v914 = vpop.f32.mrb[0].mxu0
      %915 = vmatprep.mubr.f32.mxu0 0.0
      %916 = vmatmul.mubr.f32.gmra.mrb[0].mxu0 %v777
      %v917 = vpop.f32.mrb[0].mxu0
      %v918 = vadd.f32 %v738, %v917
      %v919 = vpop.f32.mrb[0].mxu0
      %920 = vmatprep.mubr.f32.mxu0 0.0
      %921 = vmatmul.mubr.f32.gmra.mrb[0].mxu0 %v779
      %v922 = vpop.f32.mrb[0].mxu0
      %v923 = vadd.f32 %v743, %v922
      %v924 = vpop.f32.mrb[0].mxu0
      %925 = vmatprep.mubr.f32.mxu0 0.0
      %926 = vmatmul.mubr.f32.gmra.mrb[0].mxu0 %v781
      %v927 = vpop.f32.mrb[0].mxu0
      %v928 = vadd.f32 %v748, %v927
      %v929 = vpop.f32.mrb[0].mxu0
      %930 = vdwg.mxu0
      %s931 = scalar_lea.vmem %s4, 8
      %v932 = vld [vmem:[%s931] sm:$0xf]
      %v933 = vsel %vm561, %v492, 0
      %v935 = vsel %vm561, %v493, 0
      %v938 = vsel %vm602, %v932, 0
      %940 = vmatprep.subr.mxu0 0.0
      %941 = vmatpush1.msra.mxu0 %v938
      %942 = vmatprep.subr.mxu0 0.0
      %943 = vmatpush1.msra.mxu0 0.0
      %944 = vmatprep.subr.mxu0 0.0
      %945 = vmatpush1.msra.mxu0 0.0
      %946 = vmatprep.subr.mxu0 0.0
      %947 = vmatpush1.msra.mxu0 0.0
      %948 = vmatprep.subr.mxu0 0.0
      %949 = vmatpush1.msra.mxu0 0.0
      %950 = vmatprep.subr.mxu0 0.0
      %951 = vmatpush1.msra.mxu0 0.0
      %952 = vmatprep.subr.mxu0 0.0
      %953 = vmatpush1.msra.mxu0 0.0
      %954 = vmatprep.subr.mxu0 0.0
      %955 = vmatpush1.msra.mxu0 0.0
      %956 = vmatprep.subr.mxu0 0.0
      %957 = vmatpush1.msra.mxu0 0.0
      %958 = vmatprep.subr.mxu0 0.0
      %959 = vmatpush1.msra.mxu0 0.0
      %960 = vmatprep.subr.mxu0 0.0
      %961 = vmatpush1.msra.mxu0 0.0
      %962 = vmatprep.subr.mxu0 0.0
      %963 = vmatpush1.msra.mxu0 0.0
      %964 = vmatprep.subr.mxu0 0.0
      %965 = vmatpush1.msra.mxu0 0.0
      %966 = vmatprep.subr.mxu0 0.0
      %967 = vmatpush1.msra.mxu0 0.0
      %968 = vmatprep.subr.mxu0 0.0
      %969 = vmatpush1.msra.mxu0 0.0
      %970 = vmatprep.subr.mxu0 0.0
      %971 = vmatpush1.msra.mxu0 0.0
      %972 = vmatprep.subr.mxu0 0.0
      %973 = vmatpush1.msra.mxu0 0.0
      %974 = vmatprep.subr.mxu0 0.0
      %975 = vmatpush1.msra.mxu0 0.0
      %976 = vmatprep.subr.mxu0 0.0
      %977 = vmatpush1.msra.mxu0 0.0
      %978 = vmatprep.subr.mxu0 0.0
      %979 = vmatpush1.msra.mxu0 0.0
      %980 = vmatprep.subr.mxu0 0.0
      %981 = vmatpush1.msra.mxu0 0.0
      %982 = vmatprep.subr.mxu0 0.0
      %983 = vmatpush1.msra.mxu0 0.0
      %984 = vmatprep.subr.mxu0 0.0
      %985 = vmatpush1.msra.mxu0 0.0
      %986 = vmatprep.subr.mxu0 0.0
      %987 = vmatpush1.msra.mxu0 0.0
      %988 = vmatprep.subr.mxu0 0.0
      %989 = vmatpush1.msra.mxu0 0.0
      %990 = vmatprep.subr.mxu0 0.0
      %991 = vmatpush1.msra.mxu0 0.0
      %992 = vmatprep.subr.mxu0 0.0
      %993 = vmatpush1.msra.mxu0 0.0
      %994 = vmatprep.subr.mxu0 0.0
      %995 = vmatpush1.msra.mxu0 0.0
      %996 = vmatprep.subr.mxu0 0.0
      %997 = vmatpush1.msra.mxu0 0.0
      %998 = vmatprep.subr.mxu0 0.0
      %999 = vmatpush1.msra.mxu0 0.0
      %1000 = vmatprep.subr.mxu0 0.0
      %1001 = vmatpush1.msra.mxu0 0.0
      %1002 = vmatprep.subr.mxu0 0.0
      %1003 = vmatpush1.msra.mxu0 0.0
      %1004 = vmatprep.mubr.f32.mxu0 0.0
      %1005 = vmatmul.mubr.f32.gmra.mrb[0].mxu0 %v755
      %v1006 = vpop.f32.mrb[0].mxu0
      %v1007 = vadd.f32 0.0, %v1006
      %v1008 = vpop.f32.mrb[0].mxu0
      %1009 = vmatprep.mubr.f32.mxu0 0.0
      %1010 = vmatmul.mubr.f32.gmra.mrb[0].mxu0 %v757
      %v1011 = vpop.f32.mrb[0].mxu0
      %v1012 = vadd.f32 0.0, %v1011
      %v1013 = vpop.f32.mrb[0].mxu0
      %1014 = vmatprep.mubr.f32.mxu0 0.0
      %1015 = vmatmul.mubr.f32.gmra.mrb[0].mxu0 %v759
      %v1016 = vpop.f32.mrb[0].mxu0
      %v1017 = vadd.f32 0.0, %v1016
      %v1018 = vpop.f32.mrb[0].mxu0
      %1019 = vmatprep.mubr.f32.mxu0 0.0
      %1020 = vmatmul.mubr.f32.gmra.mrb[0].mxu0 %v761
      %v1021 = vpop.f32.mrb[0].mxu0
      %v1022 = vadd.f32 0.0, %v1021
      %v1023 = vpop.f32.mrb[0].mxu0
      %1024 = vmatprep.mubr.f32.mxu0 0.0
      %1025 = vmatmul.mubr.f32.gmra.mrb[0].mxu0 %v763
      %v1026 = vpop.f32.mrb[0].mxu0
      %v1027 = vadd.f32 0.0, %v1026
      %v1028 = vpop.f32.mrb[0].mxu0
      %1029 = vmatprep.mubr.f32.mxu0 0.0
      %1030 = vmatmul.mubr.f32.gmra.mrb[0].mxu0 %v765
      %v1031 = vpop.f32.mrb[0].mxu0
      %v1032 = vadd.f32 0.0, %v1031
      %v1033 = vpop.f32.mrb[0].mxu0
      %1034 = vmatprep.mubr.f32.mxu0 0.0
      %1035 = vmatmul.mubr.f32.gmra.mrb[0].mxu0 %v767
      %v1036 = vpop.f32.mrb[0].mxu0
      %v1037 = vadd.f32 0.0, %v1036
      %v1038 = vpop.f32.mrb[0].mxu0
      %1039 = vmatprep.mubr.f32.mxu0 0.0
      %1040 = vmatmul.mubr.f32.gmra.mrb[0].mxu0 %v769
      %v1041 = vpop.f32.mrb[0].mxu0
      %v1042 = vadd.f32 0.0, %v1041
      %v1043 = vpop.f32.mrb[0].mxu0
      %1044 = vmatprep.mubr.f32.mxu0 0.0
      %1045 = vmatmul.mubr.f32.gmra.mrb[0].mxu0 %v771
      %v1046 = vpop.f32.mrb[0].mxu0
      %v1047 = vadd.f32 0.0, %v1046
      %v1048 = vpop.f32.mrb[0].mxu0
      %1049 = vmatprep.mubr.f32.mxu0 0.0
      %1050 = vmatmul.mubr.f32.gmra.mrb[0].mxu0 %v773
      %v1051 = vpop.f32.mrb[0].mxu0
      %v1052 = vadd.f32 0.0, %v1051
      %v1053 = vpop.f32.mrb[0].mxu0
      %1054 = vmatprep.mubr.f32.mxu0 0.0
      %1055 = vmatmul.mubr.f32.gmra.mrb[0].mxu0 %v775
      %v1056 = vpop.f32.mrb[0].mxu0
      %v1057 = vadd.f32 0.0, %v1056
      %v1058 = vpop.f32.mrb[0].mxu0
      %1059 = vmatprep.mubr.f32.mxu0 0.0
      %1060 = vmatmul.mubr.f32.gmra.mrb[0].mxu0 %v777
      %v1061 = vpop.f32.mrb[0].mxu0
      %v1062 = vadd.f32 0.0, %v1061
      %v1063 = vpop.f32.mrb[0].mxu0
      %1064 = vmatprep.mubr.f32.mxu0 0.0
      %1065 = vmatmul.mubr.f32.gmra.mrb[0].mxu0 %v779
      %v1066 = vpop.f32.mrb[0].mxu0
      %v1067 = vadd.f32 0.0, %v1066
      %v1068 = vpop.f32.mrb[0].mxu0
      %1069 = vmatprep.mubr.f32.mxu0 0.0
      %1070 = vmatmul.mubr.f32.gmra.mrb[0].mxu0 %v781
      %v1071 = vpop.f32.mrb[0].mxu0
      %v1072 = vadd.f32 0.0, %v1071
      %v1073 = vpop.f32.mrb[0].mxu0
      %1074 = vmatprep.mubr.f32.mxu0 0.0
      %1075 = vmatmul.mubr.f32.gmra.mrb[0].mxu0 %v933
      %v1076 = vpop.f32.mrb[0].mxu0
      %v1077 = vadd.f32 0.0, %v1076
      %v1078 = vpop.f32.mrb[0].mxu0
      %1079 = vmatprep.mubr.f32.mxu0 0.0
      %1080 = vmatmul.mubr.f32.gmra.mrb[0].mxu0 %v935
      %v1081 = vpop.f32.mrb[0].mxu0
      %v1082 = vadd.f32 0.0, %v1081
      %v1083 = vpop.f32.mrb[0].mxu0
      %1084 = vdwg.mxu0
      %v1085 = vadd.f32 %v853, %v1007
      %v1086 = vadd.f32 %v858, %v1012
      %v1087 = vadd.f32 %v863, %v1017
      %v1088 = vadd.f32 %v868, %v1022
      %v1089 = vadd.f32 %v873, %v1027
      %v1090 = vadd.f32 %v878, %v1032
      %v1091 = vadd.f32 %v883, %v1037
      %v1092 = vadd.f32 %v888, %v1042
      %v1093 = vadd.f32 %v893, %v1047
      %v1094 = vadd.f32 %v898, %v1052
      %v1095 = vadd.f32 %v903, %v1057
      %v1096 = vadd.f32 %v908, %v1062
      %v1097 = vadd.f32 %v913, %v1067
      %v1098 = vadd.f32 %v918, %v1072
      %v1099 = vadd.f32 %v923, %v1077
      %v1100 = vadd.f32 %v928, %v1082
      %s1101 = scalar_lea.vmem %s4, 12
      %v1102 = vld [vmem:[%s1101] sm:$0xf]
      %v1103 = vsel %vm561, %v555, 0
      %v1106 = vsel %vm561, %v557, 0
      %v1109 = vsel %vm602, %v1102, 0
      %1111 = vmatprep.subr.mxu0 0.0
      %1112 = vmatpush1.msra.mxu0 %v1109
      %1113 = vmatprep.subr.mxu0 0.0
      %1114 = vmatpush1.msra.mxu0 0.0
      %1115 = vmatprep.subr.mxu0 0.0
      %1116 = vmatpush1.msra.mxu0 0.0
      %1117 = vmatprep.subr.mxu0 0.0
      %1118 = vmatpush1.msra.mxu0 0.0
      %1119 = vmatprep.subr.mxu0 0.0
      %1120 = vmatpush1.msra.mxu0 0.0
      %1121 = vmatprep.subr.mxu0 0.0
      %1122 = vmatpush1.msra.mxu0 0.0
      %1123 = vmatprep.subr.mxu0 0.0
      %1124 = vmatpush1.msra.mxu0 0.0
      %1125 = vmatprep.subr.mxu0 0.0
      %1126 = vmatpush1.msra.mxu0 0.0
      %1127 = vmatprep.subr.mxu0 0.0
      %1128 = vmatpush1.msra.mxu0 0.0
      %1129 = vmatprep.subr.mxu0 0.0
      %1130 = vmatpush1.msra.mxu0 0.0
      %1131 = vmatprep.subr.mxu0 0.0
      %1132 = vmatpush1.msra.mxu0 0.0
      %1133 = vmatprep.subr.mxu0 0.0
      %1134 = vmatpush1.msra.mxu0 0.0
      %1135 = vmatprep.subr.mxu0 0.0
      %1136 = vmatpush1.msra.mxu0 0.0
      %1137 = vmatprep.subr.mxu0 0.0
      %1138 = vmatpush1.msra.mxu0 0.0
      %1139 = vmatprep.subr.mxu0 0.0
      %1140 = vmatpush1.msra.mxu0 0.0
      %1141 = vmatprep.subr.mxu0 0.0
      %1142 = vmatpush1.msra.mxu0 0.0
      %1143 = vmatprep.subr.mxu0 0.0
      %1144 = vmatpush1.msra.mxu0 0.0
      %1145 = vmatprep.subr.mxu0 0.0
      %1146 = vmatpush1.msra.mxu0 0.0
      %1147 = vmatprep.subr.mxu0 0.0
      %1148 = vmatpush1.msra.mxu0 0.0
      %1149 = vmatprep.subr.mxu0 0.0
      %1150 = vmatpush1.msra.mxu0 0.0
      %1151 = vmatprep.subr.mxu0 0.0
      %1152 = vmatpush1.msra.mxu0 0.0
      %1153 = vmatprep.subr.mxu0 0.0
      %1154 = vmatpush1.msra.mxu0 0.0
      %1155 = vmatprep.subr.mxu0 0.0
      %1156 = vmatpush1.msra.mxu0 0.0
      %1157 = vmatprep.subr.mxu0 0.0
      %1158 = vmatpush1.msra.mxu0 0.0
      %1159 = vmatprep.subr.mxu0 0.0
      %1160 = vmatpush1.msra.mxu0 0.0
      %1161 = vmatprep.subr.mxu0 0.0
      %1162 = vmatpush1.msra.mxu0 0.0
      %1163 = vmatprep.subr.mxu0 0.0
      %1164 = vmatpush1.msra.mxu0 0.0
      %1165 = vmatprep.subr.mxu0 0.0
      %1166 = vmatpush1.msra.mxu0 0.0
      %1167 = vmatprep.subr.mxu0 0.0
      %1168 = vmatpush1.msra.mxu0 0.0
      %1169 = vmatprep.subr.mxu0 0.0
      %1170 = vmatpush1.msra.mxu0 0.0
      %1171 = vmatprep.subr.mxu0 0.0
      %1172 = vmatpush1.msra.mxu0 0.0
      %1173 = vmatprep.subr.mxu0 0.0
      %1174 = vmatpush1.msra.mxu0 0.0
      %1175 = vmatprep.mubr.f32.mxu0 0.0
      %1176 = vmatmul.mubr.f32.gmra.mrb[0].mxu0 %v567
      %v1177 = vpop.f32.mrb[0].mxu0
      %v1178 = vadd.f32 0.0, %v1177
      %v1179 = vpop.f32.mrb[0].mxu0
      %1180 = vmatprep.mubr.f32.mxu0 0.0
      %1181 = vmatmul.mubr.f32.gmra.mrb[0].mxu0 %v570
      %v1182 = vpop.f32.mrb[0].mxu0
      %v1183 = vadd.f32 0.0, %v1182
      %v1184 = vpop.f32.mrb[0].mxu0
      %1185 = vmatprep.mubr.f32.mxu0 0.0
      %1186 = vmatmul.mubr.f32.gmra.mrb[0].mxu0 %v572
      %v1187 = vpop.f32.mrb[0].mxu0
      %v1188 = vadd.f32 0.0, %v1187
      %v1189 = vpop.f32.mrb[0].mxu0
      %1190 = vmatprep.mubr.f32.mxu0 0.0
      %1191 = vmatmul.mubr.f32.gmra.mrb[0].mxu0 %v575
      %v1192 = vpop.f32.mrb[0].mxu0
      %v1193 = vadd.f32 0.0, %v1192
      %v1194 = vpop.f32.mrb[0].mxu0
      %1195 = vmatprep.mubr.f32.mxu0 0.0
      %1196 = vmatmul.mubr.f32.gmra.mrb[0].mxu0 %v577
      %v1197 = vpop.f32.mrb[0].mxu0
      %v1198 = vadd.f32 0.0, %v1197
      %v1199 = vpop.f32.mrb[0].mxu0
      %1200 = vmatprep.mubr.f32.mxu0 0.0
      %1201 = vmatmul.mubr.f32.gmra.mrb[0].mxu0 %v580
      %v1202 = vpop.f32.mrb[0].mxu0
      %v1203 = vadd.f32 0.0, %v1202
      %v1204 = vpop.f32.mrb[0].mxu0
      %1205 = vmatprep.mubr.f32.mxu0 0.0
      %1206 = vmatmul.mubr.f32.gmra.mrb[0].mxu0 %v582
      %v1207 = vpop.f32.mrb[0].mxu0
      %v1208 = vadd.f32 0.0, %v1207
      %v1209 = vpop.f32.mrb[0].mxu0
      %1210 = vmatprep.mubr.f32.mxu0 0.0
      %1211 = vmatmul.mubr.f32.gmra.mrb[0].mxu0 %v585
      %v1212 = vpop.f32.mrb[0].mxu0
      %v1213 = vadd.f32 0.0, %v1212
      %v1214 = vpop.f32.mrb[0].mxu0
      %1215 = vmatprep.mubr.f32.mxu0 0.0
      %1216 = vmatmul.mubr.f32.gmra.mrb[0].mxu0 %v587
      %v1217 = vpop.f32.mrb[0].mxu0
      %v1218 = vadd.f32 0.0, %v1217
      %v1219 = vpop.f32.mrb[0].mxu0
      %1220 = vmatprep.mubr.f32.mxu0 0.0
      %1221 = vmatmul.mubr.f32.gmra.mrb[0].mxu0 %v590
      %v1222 = vpop.f32.mrb[0].mxu0
      %v1223 = vadd.f32 0.0, %v1222
      %v1224 = vpop.f32.mrb[0].mxu0
      %1225 = vmatprep.mubr.f32.mxu0 0.0
      %1226 = vmatmul.mubr.f32.gmra.mrb[0].mxu0 %v592
      %v1227 = vpop.f32.mrb[0].mxu0
      %v1228 = vadd.f32 0.0, %v1227
      %v1229 = vpop.f32.mrb[0].mxu0
      %1230 = vmatprep.mubr.f32.mxu0 0.0
      %1231 = vmatmul.mubr.f32.gmra.mrb[0].mxu0 %v595
      %v1232 = vpop.f32.mrb[0].mxu0
      %v1233 = vadd.f32 0.0, %v1232
      %v1234 = vpop.f32.mrb[0].mxu0
      %1235 = vmatprep.mubr.f32.mxu0 0.0
      %1236 = vmatmul.mubr.f32.gmra.mrb[0].mxu0 %v597
      %v1237 = vpop.f32.mrb[0].mxu0
      %v1238 = vadd.f32 0.0, %v1237
      %v1239 = vpop.f32.mrb[0].mxu0
      %1240 = vmatprep.mubr.f32.mxu0 0.0
      %1241 = vmatmul.mubr.f32.gmra.mrb[0].mxu0 %v600
      %v1242 = vpop.f32.mrb[0].mxu0
      %v1243 = vadd.f32 0.0, %v1242
      %v1244 = vpop.f32.mrb[0].mxu0
      %1245 = vmatprep.mubr.f32.mxu0 0.0
      %1246 = vmatmul.mubr.f32.gmra.mrb[0].mxu0 %v1103
      %v1247 = vpop.f32.mrb[0].mxu0
      %v1248 = vadd.f32 0.0, %v1247
      %v1249 = vpop.f32.mrb[0].mxu0
      %1250 = vmatprep.mubr.f32.mxu0 0.0
      %1251 = vmatmul.mubr.f32.gmra.mrb[0].mxu0 %v1106
      %v1252 = vpop.f32.mrb[0].mxu0
      %v1253 = vadd.f32 0.0, %v1252
      %v1254 = vpop.f32.mrb[0].mxu0
      %1255 = vdwg.mxu0
      %v1256 = vadd.f32 %v1085, %v1178
      %v1257 = vadd.f32 %v1086, %v1183
      %v1258 = vadd.f32 %v1087, %v1188
      %v1259 = vadd.f32 %v1088, %v1193
      %v1260 = vadd.f32 %v1089, %v1198
      %v1261 = vadd.f32 %v1090, %v1203
      %v1262 = vadd.f32 %v1091, %v1208
      %v1263 = vadd.f32 %v1092, %v1213
      %v1264 = vadd.f32 %v1093, %v1218
      %v1265 = vadd.f32 %v1094, %v1223
      %v1266 = vadd.f32 %v1095, %v1228
      %v1267 = vadd.f32 %v1096, %v1233
      %v1268 = vadd.f32 %v1097, %v1238
      %v1269 = vadd.f32 %v1098, %v1243
      %v1270 = vadd.f32 %v1099, %v1248
      %v1271 = vadd.f32 %v1100, %v1253
      %vm1272 = vcmask 130048
      %1273 = vst.msk [vmem:[%s341] sm:$0xff] %vm1272, %v1256
      %1274 = vst.msk [vmem:[%s341 + $0x8] sm:$0xff] %vm1272, %v1257
      %1275 = vst.msk [vmem:[%s341 + $0x10] sm:$0xff] %vm1272, %v1258
      %1276 = vst.msk [vmem:[%s341 + $0x18] sm:$0xff] %vm1272, %v1259
      %1277 = vst.msk [vmem:[%s341 + $0x20] sm:$0xff] %vm1272, %v1260
      %1278 = vst.msk [vmem:[%s341 + $0x28] sm:$0xff] %vm1272, %v1261
      %1279 = vst.msk [vmem:[%s341 + $0x30] sm:$0xff] %vm1272, %v1262
      %1280 = vst.msk [vmem:[%s341 + $0x38] sm:$0xff] %vm1272, %v1263
      %1281 = vst.msk [vmem:[%s341 + $0x40] sm:$0xff] %vm1272, %v1264
      %1282 = vst.msk [vmem:[%s341 + $0x48] sm:$0xff] %vm1272, %v1265
      %1283 = vst.msk [vmem:[%s341 + $0x50] sm:$0xff] %vm1272, %v1266
      %1284 = vst.msk [vmem:[%s341 + $0x58] sm:$0xff] %vm1272, %v1267
      %1285 = vst.msk [vmem:[%s341 + $0x60] sm:$0xff] %vm1272, %v1268
      %1286 = vst.msk [vmem:[%s341 + $0x68] sm:$0xff] %vm1272, %v1269
      %1287 = vst.msk [vmem:[%s341 + $0x70] sm:$0xff] %vm1272, %v1270
      %1288 = vst.msk [vmem:[%s341 + $0x78] sm:$0xff] %vm1272, %v1271
      %v1289 = vsel %vm1272, %v1256, 0.0
      %v1290 = vsel %vm1272, %v1257, 0.0
      %v1291 = vadd.f32 %v1289, %v1290
      %v1292 = vsel %vm1272, %v1258, 0.0
      %v1293 = vadd.f32 %v1291, %v1292
      %v1294 = vsel %vm1272, %v1259, 0.0
      %v1295 = vadd.f32 %v1293, %v1294
      %v1296 = vsel %vm1272, %v1260, 0.0
      %v1297 = vadd.f32 %v1295, %v1296
      %v1298 = vsel %vm1272, %v1261, 0.0
      %v1299 = vadd.f32 %v1297, %v1298
      %v1300 = vsel %vm1272, %v1262, 0.0
      %v1301 = vadd.f32 %v1299, %v1300
      %v1302 = vsel %vm1272, %v1263, 0.0
      %v1303 = vadd.f32 %v1301, %v1302
      %v1304 = vsel %vm1272, %v1264, 0.0
      %v1305 = vadd.f32 %v1303, %v1304
      %v1306 = vsel %vm1272, %v1265, 0.0
      %v1307 = vadd.f32 %v1305, %v1306
      %v1308 = vsel %vm1272, %v1266, 0.0
      %v1309 = vadd.f32 %v1307, %v1308
      %v1310 = vsel %vm1272, %v1267, 0.0
      %v1311 = vadd.f32 %v1309, %v1310
      %v1312 = vsel %vm1272, %v1268, 0.0
      %v1313 = vadd.f32 %v1311, %v1312
      %v1314 = vsel %vm1272, %v1269, 0.0
      %v1315 = vadd.f32 %v1313, %v1314
      %v1316 = vsel %vm1272, %v1270, 0.0
      %v1317 = vadd.f32 %v1315, %v1316
      %v1318 = vsel %vm1272, %v1271, 0.0
      %v1319 = vadd.f32 %v1317, %v1318
      %v1320 = vrot.slane %v1319, 4
      %v1321 = vadd.f32 %v1319, %v1320
      %v1322 = vrot.slane %v1321, 2
      %v1323 = vadd.f32 %v1321, %v1322
      %v1324 = vrot.slane %v1323, 1
      %v1325 = vadd.f32 %v1323, %v1324
      %v1326 = vmul.f32 %v1256, %v1256
      %v1327 = vmul.f32 %v1257, %v1257
      %v1328 = vmul.f32 %v1258, %v1258
      %v1329 = vmul.f32 %v1259, %v1259
      %v1330 = vmul.f32 %v1260, %v1260
      %v1331 = vmul.f32 %v1261, %v1261
      %v1332 = vmul.f32 %v1262, %v1262
      %v1333 = vmul.f32 %v1263, %v1263
      %v1334 = vmul.f32 %v1264, %v1264
      %v1335 = vmul.f32 %v1265, %v1265
      %v1336 = vmul.f32 %v1266, %v1266
      %v1337 = vmul.f32 %v1267, %v1267
      %v1338 = vmul.f32 %v1268, %v1268
      %v1339 = vmul.f32 %v1269, %v1269
      %v1340 = vmul.f32 %v1270, %v1270
      %v1341 = vmul.f32 %v1271, %v1271
      %v1342 = vsel %vm1272, %v1326, 0.0
      %v1343 = vsel %vm1272, %v1327, 0.0
      %v1344 = vadd.f32 %v1342, %v1343
      %v1345 = vsel %vm1272, %v1328, 0.0
      %v1346 = vadd.f32 %v1344, %v1345
      %v1347 = vsel %vm1272, %v1329, 0.0
      %v1348 = vadd.f32 %v1346, %v1347
      %v1349 = vsel %vm1272, %v1330, 0.0
      %v1350 = vadd.f32 %v1348, %v1349
      %v1351 = vsel %vm1272, %v1331, 0.0
      %v1352 = vadd.f32 %v1350, %v1351
      %v1353 = vsel %vm1272, %v1332, 0.0
      %v1354 = vadd.f32 %v1352, %v1353
      %v1355 = vsel %vm1272, %v1333, 0.0
      %v1356 = vadd.f32 %v1354, %v1355
      %v1357 = vsel %vm1272, %v1334, 0.0
      %v1358 = vadd.f32 %v1356, %v1357
      %v1359 = vsel %vm1272, %v1335, 0.0
      %v1360 = vadd.f32 %v1358, %v1359
      %v1361 = vsel %vm1272, %v1336, 0.0
      %v1362 = vadd.f32 %v1360, %v1361
      %v1363 = vsel %vm1272, %v1337, 0.0
      %v1364 = vadd.f32 %v1362, %v1363
      %v1365 = vsel %vm1272, %v1338, 0.0
      %v1366 = vadd.f32 %v1364, %v1365
      %v1367 = vsel %vm1272, %v1339, 0.0
      %v1368 = vadd.f32 %v1366, %v1367
      %v1369 = vsel %vm1272, %v1340, 0.0
      %v1370 = vadd.f32 %v1368, %v1369
      %v1371 = vsel %vm1272, %v1341, 0.0
      %v1372 = vadd.f32 %v1370, %v1371
      %v1373 = vrot.slane %v1372, 4
      %v1374 = vadd.f32 %v1372, %v1373
      %v1375 = vrot.slane %v1374, 2
      %v1376 = vadd.f32 %v1374, %v1375
      %v1377 = vrot.slane %v1376, 1
      %v1378 = vadd.f32 %v1376, %v1377
      %vm1379 = vcmask 1040384
      %v1380 = vsel %vm1379, %v1325, %v1378
      %vm1381 = vcmask 123904
      %1382 = vst.msk [vmem:[%s350] sm:$0x3] %vm1381, %v1380
      %s1383 = smul.u32 8, %s23
      %p1384 = scmp.lt.s32.totalorder %s22, 1
      %s1385 = scalar_select %p1384, %s22, 1
      %p1386 = scmp.lt.s32.totalorder %s1383, 15
      %s1387 = scalar_select %p1386, %s1383, 15
      %s1388 = smul.addr %s1387, 2
      %s1389 = smul.addr %s1385, 32
      %s1390 = sadd.s32 %s1388, %s1389
      %s1391 = smul.addr %s1390, 8
      %s1392 = scalar_lea.vmem %s5, %s1391
      %p1393 = scmp.lt.s32.totalorder %s22, 1
      %s1394 = scalar_select %p1393, %s22, 1
      %p1395 = scmp.lt.s32.totalorder %s23, 1
      %s1396 = scalar_select %p1395, %s23, 1
      %s1397 = smul.addr %s1394, 2
      %s1398 = sadd.s32 %s1396, %s1397
      %s1399 = smul.addr %s1398, 2
      %s1400 = scalar_lea.vmem %s6, %s1399
      // Predicated region
      $region41: #{deconv_block.5} parent=39 // pred_check
        %p1401 = pneg %p169
      $region42: #{deconv_block.5} parent=39 // pred_check_branch
        %1403 = sbr.rel (%p1401) target = $region44
      $region43: #{deconv_block.5} parent=39 // pred_region
        %s1404 = smul.u32 8, %s23
      $region44: #{deconv_block.5} parent=39 // pred_fallthru
        _
      // Predicated region
      $region45: #{deconv_block.5} parent=39 // pred_check
        %p1405 = pneg %p197
      $region46: #{deconv_block.5} parent=39 // pred_check_branch
        %1407 = sbr.rel (%p1405) target = $region48
      $region47: #{deconv_block.5} parent=39 // pred_region
        _
      $region48: #{deconv_block.5} parent=39 // pred_fallthru
        _
    $region40: #{deconv_block.5} parent=5 // pred_fallthru
      _
    %p1408 = scmp.le.s32.totalorder 2, %s13
    // Predicated region
    $region49: #{deconv_block.5} parent=5 // pred_check
      %p1409 = pneg %p1408
    $region50: #{deconv_block.5} parent=5 // pred_check_branch
      %1411 = sbr.rel (%p1409) target = $region52
    $region51: #{deconv_block.5} parent=5 // pred_region
      %s1412 = ssub.s32 %s13, 2
      // Predicated region
      $region53: #{deconv_block.5} parent=51 // pred_check
        %p1413 = pneg %p175
      $region54: #{deconv_block.5} parent=51 // pred_check_branch
        %1415 = sbr.rel (%p1413) target = $region56
      $region55: #{deconv_block.5} parent=51 // pred_region
        %s1416 = smul.u32 8, %s25
        %p1417 = scmp.lt.s32.totalorder %s24, 1
        %s1418 = scalar_select %p1417, %s24, 1
        %p1419 = scmp.lt.s32.totalorder %s1416, 15
        %s1420 = scalar_select %p1419, %s1416, 15
        %s1421 = smul.addr %s1420, 2
        %s1422 = smul.addr %s1418, 32
        %s1423 = sadd.s32 %s1421, %s1422
        %s1424 = smul.addr %s1423, 8
        %s1425 = scalar_lea.vmem %s5, %s1424
      $region56: #{deconv_block.5} parent=51 // pred_fallthru
        _
      // Predicated region
      $region57: #{deconv_block.5} parent=51 // pred_check
        %p1426 = pneg %p203
      $region58: #{deconv_block.5} parent=51 // pred_check_branch
        %1428 = sbr.rel (%p1426) target = $region60
      $region59: #{deconv_block.5} parent=51 // pred_region
        %p1429 = scmp.lt.s32.totalorder %s24, 1
        %s1430 = scalar_select %p1429, %s24, 1
        %p1431 = scmp.lt.s32.totalorder %s25, 1
        %s1432 = scalar_select %p1431, %s25, 1
        %s1433 = smul.addr %s1430, 2
        %s1434 = sadd.s32 %s1432, %s1433
        %s1435 = smul.addr %s1434, 2
        %s1436 = scalar_lea.vmem %s6, %s1435
      $region60: #{deconv_block.5} parent=51 // pred_fallthru
        _
    $region52: #{deconv_block.5} parent=5 // pred_fallthru
      _
  $region6: #{deconv_block.5} parent=0 // loop_footer
    %s17 = sadd.s32 1, %s13
  $region7: #{deconv_block.5} parent=0 // loop_footer_branch
    %12 = sbr.rel target = $region3
  $region8: #{deconv_block.5} parent=0 // loop_exit
    _

// kernel: deconv_block.6
$region0: #{deconv_block.6}
  #allocation0 [shape = 'u32[]', space=smem, size = 0x4, offset = 0x4, fixed_abs, tag = 'smem constant byte address 0x4 - core index']
  #allocation1 [shape = 'u32[144,128]{1,0:T(1,128)}', space=vmem, size = 0x12000, scoped, tag = 'internal scratch']
  %s0 = inlined_call_operand.vmem [shape: f32[2048,4], index: 0, kind: input, shape index: {}]
  %s1 = inlined_call_operand.vmem [shape: f32[1,4], index: 1, kind: input, shape index: {}]
  %s2 = inlined_call_operand.vmem [shape: f32[1,4], index: 2, kind: input, shape index: {}]
  %s3 = inlined_call_operand.vmem [shape: f32[4,8], index: 3, kind: input, shape index: {}]
  %s4 = inlined_call_operand.vmem [shape: f32[2048,8], index: 4, kind: output, shape index: {0}]
  %s5 = inlined_call_operand.vmem [shape: f32[4,2,8], index: 5, kind: output, shape index: {1}]
  %6 = xla_tuple %s4, %s5
  %s7 = sld [smem:[#allocation0]]
  $region57: #{deconv_block.6} parent=0
    _
  %s9 = ssub.s32 1, %s7
  %s10 = scalar_select 0, %s9, %s7
  loop: start=0, step=1, limit=6
  $region2: #{deconv_block.6} parent=0 // loop_pre_header
    _
  $region3: #{deconv_block.6} parent=0 // loop_header
    %s12 = sphi 0, %s16
    %p13 = scmp.ge.s32.totalorder %s12, 6
    %s22 = sphi 0, %s24
    %s25 = sphi 0, %s22
    %s26 = sphi 0, %s25
    %s42 = sphi 0, %s26
    %s46 = sphi 0, %s46
    %s48 = sphi 0, %s46
    %s49 = sphi 0, %s48
    %s63 = sphi 0, %s49
    %s67 = sphi 0, %s67
    %s69 = sphi 0, %s67
    %s70 = sphi 0, %s69
    %s84 = sphi 0, %s70
    %s88 = sphi 0, %s88
    %s90 = sphi 0, %s88
    %s91 = sphi 0, %s90
    %s105 = sphi 0, %s91
    %s111 = sphi 0, %s113
    %s114 = sphi 0, %s111
    %s115 = sphi 0, %s114
    %s131 = sphi 0, %s115
    %s137 = sphi 0, %s139
    %s140 = sphi 0, %s137
    %s141 = sphi 0, %s140
    %s157 = sphi 0, %s141
  $region4: #{deconv_block.6} parent=0 // loop_header_branch
    %15 = sbr.rel (%p13) target = $region8
  $region5: #{deconv_block.6} parent=0 // loop_body
    %s17 = ssub.s32 %s12, 1
    %s18 = ssub.s32 %s12, 2
    %s19 = sadd.s32 %s12, 1
    %s20 = ssub.s32 %s12, %s19
    %p21 = scmp.eq.s32.totalorder %s20, 0
    %s23 = sadd.s32 %s22, 1
    %s24 = scalar_select %p21, %s22, %s23
    %p27 = pneg %p21
    %p28 = scmp.eq.s32.totalorder %s12, 3
    %p29 = por %p27, %p28
    %p30 = scmp.ne.s32.totalorder %s22, %s25
    %p31 = scmp.eq.s32.totalorder %s12, 0
    %p32 = por %p30, %p31
    %p33 = scmp.ne.s32.totalorder %s22, %s25
    %p34 = scmp.eq.s32.totalorder %s17, 3
    %p35 = por %p33, %p34
    %p36 = scmp.ne.s32.totalorder %s25, %s26
    %p37 = scmp.eq.s32.totalorder %s17, 0
    %p38 = por %p36, %p37
    %p39 = scmp.ne.s32.totalorder %s25, %s26
    %p40 = scmp.eq.s32.totalorder %s18, 3
    %p41 = por %p39, %p40
    %p43 = scmp.ne.s32.totalorder %s26, %s42
    %p44 = scmp.eq.s32.totalorder %s18, 0
    %p45 = por %p43, %p44
    %s47 = sadd.s32 %s46, 1
    %p50 = scmp.eq.s32.totalorder %s12, 3
    %p51 = scmp.ne.s32.totalorder %s46, %s48
    %p52 = scmp.eq.s32.totalorder %s12, 0
    %p53 = por %p51, %p52
    %p54 = scmp.ne.s32.totalorder %s46, %s48
    %p55 = scmp.eq.s32.totalorder %s17, 3
    %p56 = por %p54, %p55
    %p57 = scmp.ne.s32.totalorder %s48, %s49
    %p58 = scmp.eq.s32.totalorder %s17, 0
    %p59 = por %p57, %p58
    %p60 = scmp.ne.s32.totalorder %s48, %s49
    %p61 = scmp.eq.s32.totalorder %s18, 3
    %p62 = por %p60, %p61
    %p64 = scmp.ne.s32.totalorder %s49, %s63
    %p65 = scmp.eq.s32.totalorder %s18, 0
    %p66 = por %p64, %p65
    %s68 = sadd.s32 %s67, 1
    %p71 = scmp.eq.s32.totalorder %s12, 3
    %p72 = scmp.ne.s32.totalorder %s67, %s69
    %p73 = scmp.eq.s32.totalorder %s12, 0
    %p74 = por %p72, %p73
    %p75 = scmp.ne.s32.totalorder %s67, %s69
    %p76 = scmp.eq.s32.totalorder %s17, 3
    %p77 = por %p75, %p76
    %p78 = scmp.ne.s32.totalorder %s69, %s70
    %p79 = scmp.eq.s32.totalorder %s17, 0
    %p80 = por %p78, %p79
    %p81 = scmp.ne.s32.totalorder %s69, %s70
    %p82 = scmp.eq.s32.totalorder %s18, 3
    %p83 = por %p81, %p82
    %p85 = scmp.ne.s32.totalorder %s70, %s84
    %p86 = scmp.eq.s32.totalorder %s18, 0
    %p87 = por %p85, %p86
    %s89 = sadd.s32 %s88, 1
    %p92 = scmp.eq.s32.totalorder %s12, 3
    %p93 = scmp.ne.s32.totalorder %s88, %s90
    %p94 = scmp.eq.s32.totalorder %s12, 0
    %p95 = por %p93, %p94
    %p96 = scmp.ne.s32.totalorder %s88, %s90
    %p97 = scmp.eq.s32.totalorder %s17, 3
    %p98 = por %p96, %p97
    %p99 = scmp.ne.s32.totalorder %s90, %s91
    %p100 = scmp.eq.s32.totalorder %s17, 0
    %p101 = por %p99, %p100
    %p102 = scmp.ne.s32.totalorder %s90, %s91
    %p103 = scmp.eq.s32.totalorder %s18, 3
    %p104 = por %p102, %p103
    %p106 = scmp.ne.s32.totalorder %s91, %s105
    %p107 = scmp.eq.s32.totalorder %s18, 0
    %p108 = por %p106, %p107
    %s109 = ssub.s32 %s12, %s19
    %p110 = scmp.eq.s32.totalorder %s109, 0
    %s112 = sadd.s32 %s111, 1
    %s113 = scalar_select %p110, %s111, %s112
    %p116 = pneg %p110
    %p117 = scmp.eq.s32.totalorder %s12, 3
    %p118 = por %p116, %p117
    %p119 = scmp.ne.s32.totalorder %s111, %s114
    %p120 = scmp.eq.s32.totalorder %s12, 0
    %p121 = por %p119, %p120
    %p122 = scmp.ne.s32.totalorder %s111, %s114
    %p123 = scmp.eq.s32.totalorder %s17, 3
    %p124 = por %p122, %p123
    %p125 = scmp.ne.s32.totalorder %s114, %s115
    %p126 = scmp.eq.s32.totalorder %s17, 0
    %p127 = por %p125, %p126
    %p128 = scmp.ne.s32.totalorder %s114, %s115
    %p129 = scmp.eq.s32.totalorder %s18, 3
    %p130 = por %p128, %p129
    %p132 = scmp.ne.s32.totalorder %s115, %s131
    %p133 = scmp.eq.s32.totalorder %s18, 0
    %p134 = por %p132, %p133
    %s135 = ssub.s32 %s12, %s19
    %p136 = scmp.eq.s32.totalorder %s135, 0
    %s138 = sadd.s32 %s137, 1
    %s139 = scalar_select %p136, %s137, %s138
    %p142 = pneg %p136
    %p143 = scmp.eq.s32.totalorder %s12, 3
    %p144 = por %p142, %p143
    %p145 = scmp.ne.s32.totalorder %s137, %s140
    %p146 = scmp.eq.s32.totalorder %s12, 0
    %p147 = por %p145, %p146
    %p148 = scmp.ne.s32.totalorder %s137, %s140
    %p149 = scmp.eq.s32.totalorder %s17, 3
    %p150 = por %p148, %p149
    %p151 = scmp.ne.s32.totalorder %s140, %s141
    %p152 = scmp.eq.s32.totalorder %s17, 0
    %p153 = por %p151, %p152
    %p154 = scmp.ne.s32.totalorder %s140, %s141
    %p155 = scmp.eq.s32.totalorder %s18, 3
    %p156 = por %p154, %p155
    %p158 = scmp.ne.s32.totalorder %s141, %s157
    %p159 = scmp.eq.s32.totalorder %s18, 0
    %p160 = por %p158, %p159
    %p161 = scmp.le.s32.totalorder 1, %s12
    %p162 = scmp.lt.s32.totalorder %s12, 5
    %p163 = pnand %p161, %p162
    %p164 = pneg %p163
    // Predicated region
    $region9: #{deconv_block.6} parent=5 // pred_check
      _
    $region10: #{deconv_block.6} parent=5 // pred_check_branch
      %166 = sbr.rel (%p163) target = $region12
    $region11: #{deconv_block.6} parent=5 // pred_region
      %s167 = ssub.s32 %s12, 1
      // Predicated region
      $region13: #{deconv_block.6} parent=11 // pred_check
        %p168 = pneg %p59
      $region14: #{deconv_block.6} parent=11 // pred_check_branch
        %170 = sbr.rel (%p168) target = $region16
      $region15: #{deconv_block.6} parent=11 // pred_region
        _
      $region16: #{deconv_block.6} parent=11 // pred_fallthru
        _
      // Predicated region
      $region17: #{deconv_block.6} parent=11 // pred_check
        %p171 = pneg %p80
      $region18: #{deconv_block.6} parent=11 // pred_check_branch
        %173 = sbr.rel (%p171) target = $region20
      $region19: #{deconv_block.6} parent=11 // pred_region
        _
      $region20: #{deconv_block.6} parent=11 // pred_fallthru
        _
      // Predicated region
      $region21: #{deconv_block.6} parent=11 // pred_check
        %p174 = pneg %p101
      $region22: #{deconv_block.6} parent=11 // pred_check_branch
        %176 = sbr.rel (%p174) target = $region24
      $region23: #{deconv_block.6} parent=11 // pred_region
        _
      $region24: #{deconv_block.6} parent=11 // pred_fallthru
        _
    $region12: #{deconv_block.6} parent=5 // pred_fallthru
      _
    %p177 = scmp.lt.s32.totalorder %s12, 4
    // Predicated region
    $region25: #{deconv_block.6} parent=5 // pred_check
      %p178 = pneg %p177
    $region26: #{deconv_block.6} parent=5 // pred_check_branch
      %180 = sbr.rel (%p178) target = $region28
    $region27: #{deconv_block.6} parent=5 // pred_region
      // Predicated region
      $region29: #{deconv_block.6} parent=27 // pred_check
        %p181 = pneg %p32
      $region30: #{deconv_block.6} parent=27 // pred_check_branch
        %183 = sbr.rel (%p181) target = $region32
      $region31: #{deconv_block.6} parent=27 // pred_region
        %s184 = smul.u32 64, %s12
        %p185 = scmp.lt.s32.totalorder %s184, 255
        %s186 = scalar_select %p185, %s184, 255
        %s187 = smul.addr %s186, 8
        %s188 = scalar_lea.vmem %s0, %s187
        %s189 = smul.u32 64, %s12
      $region32: #{deconv_block.6} parent=27 // pred_fallthru
        _
    $region28: #{deconv_block.6} parent=5 // pred_fallthru
      _
    %p190 = scmp.le.s32.totalorder 1, %s12
    %p191 = scmp.lt.s32.totalorder %s12, 5
    %p192 = pnand %p190, %p191
    %p193 = pneg %p192
    // Predicated region
    $region33: #{deconv_block.6} parent=5 // pred_check
      _
    $region34: #{deconv_block.6} parent=5 // pred_check_branch
      %195 = sbr.rel (%p192) target = $region36
    $region35: #{deconv_block.6} parent=5 // pred_region
      %s196 = ssub.s32 %s12, 1
      %s197 = smul.u32 64, %s17
      %p198 = scmp.lt.s32.totalorder %s197, 255
      %s199 = scalar_select %p198, %s197, 255
      %s200 = smul.addr %s199, 8
      %s201 = scalar_lea.vmem %s0, %s200
      %p202 = pneg %p38
      %p203 = pneg %p35
      %p204 = pneg %p59
      %p205 = pneg %p56
      %p206 = pneg %p80
      %p207 = pneg %p77
      %p208 = pneg %p101
      %p209 = pneg %p98
      %p210 = pneg %p127
      %p211 = pneg %p124
      %s212 = smul.u32 64, %s17
      %p213 = scmp.lt.s32.totalorder %s212, 255
      %s214 = scalar_select %p213, %s212, 255
      %s215 = smul.addr %s214, 8
      %s216 = scalar_lea.vmem %s4, %s215
      %p217 = pneg %p153
      %p218 = pneg %p150
      %p219 = scmp.lt.s32.totalorder %s17, 3
      %s220 = scalar_select %p219, %s17, 3
      %s221 = smul.addr %s220, 2
      %s222 = scalar_lea.vmem %s5, %s221
      %s223 = smul.u32 64, %s17
      %p224 = scmp.lt.s32.totalorder %s223, 255
      %s225 = scalar_select %p224, %s223, 255
      %s226 = smul.addr %s225, 8
      %s227 = scalar_lea.vmem %s0, %s226
      %s228 = smul.u32 64, %s17
      %s229 = smul.u32 64, %s17
      %p230 = scmp.lt.s32.totalorder %s229, 255
      %s231 = scalar_select %p230, %s229, 255
      %s232 = smul.addr %s231, 8
      %s233 = scalar_lea.vmem %s4, %s232
      %s234 = smul.u32 64, %s17
      %p235 = scmp.lt.s32.totalorder %s17, 3
      %s236 = scalar_select %p235, %s17, 3
      %s237 = smul.addr %s236, 2
      %s238 = scalar_lea.vmem %s5, %s237
      %v239 = vld [vmem:[%s227] sm:$0xff]
      %v240 = vld [vmem:[%s227 + $0x8] sm:$0xff]
      %v241 = vld [vmem:[%s227 + $0x10] sm:$0xff]
      %v242 = vld [vmem:[%s227 + $0x18] sm:$0xff]
      %v243 = vld [vmem:[%s227 + $0x20] sm:$0xff]
      %v244 = vld [vmem:[%s227 + $0x28] sm:$0xff]
      %v245 = vld [vmem:[%s227 + $0x30] sm:$0xff]
      %v246 = vld [vmem:[%s227 + $0x38] sm:$0xff]
      %v247 = vld [vmem:[%s227 + $0x40] sm:$0xff]
      %v248 = vld [vmem:[%s227 + $0x48] sm:$0xff]
      %v249 = vld [vmem:[%s227 + $0x50] sm:$0xff]
      %v250 = vld [vmem:[%s227 + $0x58] sm:$0xff]
      %v251 = vld [vmem:[%s227 + $0x60] sm:$0xff]
      %v252 = vld [vmem:[%s227 + $0x68] sm:$0xff]
      %v253 = vld [vmem:[%s227 + $0x70] sm:$0xff]
      %v254 = vld [vmem:[%s227 + $0x78] sm:$0xff]
      %v255 = vld [vmem:[%s227 + $0x80] sm:$0xff]
      %v256 = vld [vmem:[%s227 + $0x88] sm:$0xff]
      %v257 = vld [vmem:[%s227 + $0x90] sm:$0xff]
      %v258 = vld [vmem:[%s227 + $0x98] sm:$0xff]
      %v259 = vld [vmem:[%s227 + $0xa0] sm:$0xff]
      %v260 = vld [vmem:[%s227 + $0xa8] sm:$0xff]
      %v261 = vld [vmem:[%s227 + $0xb0] sm:$0xff]
      %v262 = vld [vmem:[%s227 + $0xb8] sm:$0xff]
      %v263 = vld [vmem:[%s227 + $0xc0] sm:$0xff]
      %v264 = vld [vmem:[%s227 + $0xc8] sm:$0xff]
      %v265 = vld [vmem:[%s227 + $0xd0] sm:$0xff]
      %v266 = vld [vmem:[%s227 + $0xd8] sm:$0xff]
      %v267 = vld [vmem:[%s227 + $0xe0] sm:$0xff]
      %v268 = vld [vmem:[%s227 + $0xe8] sm:$0xff]
      %v269 = vld [vmem:[%s227 + $0xf0] sm:$0xff]
      %v270 = vld [vmem:[%s227 + $0xf8] sm:$0xff]
      %v271 = vld [vmem:[%s227 + $0x100] sm:$0xff]
      %v272 = vld [vmem:[%s227 + $0x108] sm:$0xff]
      %v273 = vld [vmem:[%s227 + $0x110] sm:$0xff]
      %v274 = vld [vmem:[%s227 + $0x118] sm:$0xff]
      %v275 = vld [vmem:[%s227 + $0x120] sm:$0xff]
      %v276 = vld [vmem:[%s227 + $0x128] sm:$0xff]
      %v277 = vld [vmem:[%s227 + $0x130] sm:$0xff]
      %v278 = vld [vmem:[%s227 + $0x138] sm:$0xff]
      %v279 = vld [vmem:[%s227 + $0x140] sm:$0xff]
      %v280 = vld [vmem:[%s227 + $0x148] sm:$0xff]
      %v281 = vld [vmem:[%s227 + $0x150] sm:$0xff]
      %v282 = vld [vmem:[%s227 + $0x158] sm:$0xff]
      %v283 = vld [vmem:[%s227 + $0x160] sm:$0xff]
      %v284 = vld [vmem:[%s227 + $0x168] sm:$0xff]
      %v285 = vld [vmem:[%s227 + $0x170] sm:$0xff]
      %v286 = vld [vmem:[%s227 + $0x178] sm:$0xff]
      %v287 = vld [vmem:[%s227 + $0x180] sm:$0xff]
      %v288 = vld [vmem:[%s227 + $0x188] sm:$0xff]
      %v289 = vld [vmem:[%s227 + $0x190] sm:$0xff]
      %v290 = vld [vmem:[%s227 + $0x198] sm:$0xff]
      %v291 = vld [vmem:[%s227 + $0x1a0] sm:$0xff]
      %v292 = vld [vmem:[%s227 + $0x1a8] sm:$0xff]
      %v293 = vld [vmem:[%s227 + $0x1b0] sm:$0xff]
      %v294 = vld [vmem:[%s227 + $0x1b8] sm:$0xff]
      %v295 = vld [vmem:[%s227 + $0x1c0] sm:$0xff]
      %v296 = vld [vmem:[%s227 + $0x1c8] sm:$0xff]
      %v297 = vld [vmem:[%s227 + $0x1d0] sm:$0xff]
      %v298 = vld [vmem:[%s227 + $0x1d8] sm:$0xff]
      %v299 = vld [vmem:[%s227 + $0x1e0] sm:$0xff]
      %v300 = vld [vmem:[%s227 + $0x1e8] sm:$0xff]
      %v301 = vld [vmem:[%s227 + $0x1f0] sm:$0xff]
      %v302 = vld [vmem:[%s227 + $0x1f8] sm:$0xff]
      %v303 = vld [vmem:[%s1] sm:$0x1]
      %v305 = vlaneseq
      %v306 = vshrl.u32 %v305, 7
      %v307 = vsub.s32 0, %v306
      %v308 = vrot.slane %v303, %v307
      %v310 = vmul.f32 %v239, %v308
      %v311 = vmul.f32 %v240, %v308
      %v312 = vmul.f32 %v241, %v308
      %v313 = vmul.f32 %v242, %v308
      %v314 = vmul.f32 %v243, %v308
      %v315 = vmul.f32 %v244, %v308
      %v316 = vmul.f32 %v245, %v308
      %v317 = vmul.f32 %v246, %v308
      %v318 = vmul.f32 %v247, %v308
      %v319 = vmul.f32 %v248, %v308
      %v320 = vmul.f32 %v249, %v308
      %v321 = vmul.f32 %v250, %v308
      %v322 = vmul.f32 %v251, %v308
      %v323 = vmul.f32 %v252, %v308
      %v324 = vmul.f32 %v253, %v308
      %v325 = vmul.f32 %v254, %v308
      %v326 = vmul.f32 %v255, %v308
      %v327 = vmul.f32 %v256, %v308
      %v328 = vmul.f32 %v257, %v308
      %v329 = vmul.f32 %v258, %v308
      %v330 = vmul.f32 %v259, %v308
      %v331 = vmul.f32 %v260, %v308
      %v332 = vmul.f32 %v261, %v308
      %v333 = vmul.f32 %v262, %v308
      %v334 = vmul.f32 %v263, %v308
      %v335 = vmul.f32 %v264, %v308
      %v336 = vmul.f32 %v265, %v308
      %v337 = vmul.f32 %v266, %v308
      %v338 = vmul.f32 %v267, %v308
      %v339 = vmul.f32 %v268, %v308
      %v340 = vmul.f32 %v269, %v308
      %v341 = vmul.f32 %v270, %v308
      %v342 = vmul.f32 %v271, %v308
      %v343 = vmul.f32 %v272, %v308
      %v344 = vmul.f32 %v273, %v308
      %v345 = vmul.f32 %v274, %v308
      %v346 = vmul.f32 %v275, %v308
      %v347 = vmul.f32 %v276, %v308
      %v348 = vmul.f32 %v277, %v308
      %v349 = vmul.f32 %v278, %v308
      %v350 = vmul.f32 %v279, %v308
      %v351 = vmul.f32 %v280, %v308
      %v352 = vmul.f32 %v281, %v308
      %v353 = vmul.f32 %v282, %v308
      %v354 = vmul.f32 %v283, %v308
      %v355 = vmul.f32 %v284, %v308
      %v356 = vmul.f32 %v285, %v308
      %v357 = vmul.f32 %v286, %v308
      %v358 = vmul.f32 %v287, %v308
      %v359 = vmul.f32 %v288, %v308
      %v360 = vmul.f32 %v289, %v308
      %v361 = vmul.f32 %v290, %v308
      %v362 = vmul.f32 %v291, %v308
      %v363 = vmul.f32 %v292, %v308
      %v364 = vmul.f32 %v293, %v308
      %v365 = vmul.f32 %v294, %v308
      %v366 = vmul.f32 %v295, %v308
      %v367 = vmul.f32 %v296, %v308
      %v368 = vmul.f32 %v297, %v308
      %v369 = vmul.f32 %v298, %v308
      %v370 = vmul.f32 %v299, %v308
      %v371 = vmul.f32 %v300, %v308
      %v372 = vmul.f32 %v301, %v308
      %v373 = vmul.f32 %v302, %v308
      %v374 = vld [vmem:[%s2] sm:$0x1]
      %v376 = vlaneseq
      %v377 = vshrl.u32 %v376, 7
      %v378 = vsub.s32 0, %v377
      %v379 = vrot.slane %v374, %v378
      %v381 = vadd.f32 %v310, %v379
      %v382 = vadd.f32 %v311, %v379
      %v383 = vadd.f32 %v312, %v379
      %v384 = vadd.f32 %v313, %v379
      %v385 = vadd.f32 %v314, %v379
      %v386 = vadd.f32 %v315, %v379
      %v387 = vadd.f32 %v316, %v379
      %v388 = vadd.f32 %v317, %v379
      %v389 = vadd.f32 %v318, %v379
      %v390 = vadd.f32 %v319, %v379
      %v391 = vadd.f32 %v320, %v379
      %v392 = vadd.f32 %v321, %v379
      %v393 = vadd.f32 %v322, %v379
      %v394 = vadd.f32 %v323, %v379
      %v395 = vadd.f32 %v324, %v379
      %v396 = vadd.f32 %v325, %v379
      %v397 = vadd.f32 %v326, %v379
      %v398 = vadd.f32 %v327, %v379
      %v399 = vadd.f32 %v328, %v379
      %v400 = vadd.f32 %v329, %v379
      %v401 = vadd.f32 %v330, %v379
      %v402 = vadd.f32 %v331, %v379
      %v403 = vadd.f32 %v332, %v379
      %v404 = vadd.f32 %v333, %v379
      %v405 = vadd.f32 %v334, %v379
      %v406 = vadd.f32 %v335, %v379
      %v407 = vadd.f32 %v336, %v379
      %v408 = vadd.f32 %v337, %v379
      %v409 = vadd.f32 %v338, %v379
      %v410 = vadd.f32 %v339, %v379
      %v411 = vadd.f32 %v340, %v379
      %v412 = vadd.f32 %v341, %v379
      %v413 = vadd.f32 %v342, %v379
      %v414 = vadd.f32 %v343, %v379
      %v415 = vadd.f32 %v344, %v379
      %v416 = vadd.f32 %v345, %v379
      %v417 = vadd.f32 %v346, %v379
      %v418 = vadd.f32 %v347, %v379
      %v419 = vadd.f32 %v348, %v379
      %v420 = vadd.f32 %v349, %v379
      %v421 = vadd.f32 %v350, %v379
      %v422 = vadd.f32 %v351, %v379
      %v423 = vadd.f32 %v352, %v379
      %v424 = vadd.f32 %v353, %v379
      %v425 = vadd.f32 %v354, %v379
      %v426 = vadd.f32 %v355, %v379
      %v427 = vadd.f32 %v356, %v379
      %v428 = vadd.f32 %v357, %v379
      %v429 = vadd.f32 %v358, %v379
      %v430 = vadd.f32 %v359, %v379
      %v431 = vadd.f32 %v360, %v379
      %v432 = vadd.f32 %v361, %v379
      %v433 = vadd.f32 %v362, %v379
      %v434 = vadd.f32 %v363, %v379
      %v435 = vadd.f32 %v364, %v379
      %v436 = vadd.f32 %v365, %v379
      %v437 = vadd.f32 %v366, %v379
      %v438 = vadd.f32 %v367, %v379
      %v439 = vadd.f32 %v368, %v379
      %v440 = vadd.f32 %v369, %v379
      %v441 = vadd.f32 %v370, %v379
      %v442 = vadd.f32 %v371, %v379
      %v443 = vadd.f32 %v372, %v379
      %v444 = vadd.f32 %v373, %v379
      %v445 = vmax.f32 %v381, 0.0
      %v446 = vmax.f32 %v382, 0.0
      %v447 = vmax.f32 %v383, 0.0
      %v448 = vmax.f32 %v384, 0.0
      %v449 = vmax.f32 %v385, 0.0
      %v450 = vmax.f32 %v386, 0.0
      %v451 = vmax.f32 %v387, 0.0
      %v452 = vmax.f32 %v388, 0.0
      %v453 = vmax.f32 %v389, 0.0
      %v454 = vmax.f32 %v390, 0.0
      %v455 = vmax.f32 %v391, 0.0
      %v456 = vmax.f32 %v392, 0.0
      %v457 = vmax.f32 %v393, 0.0
      %v458 = vmax.f32 %v394, 0.0
      %v459 = vmax.f32 %v395, 0.0
      %v460 = vmax.f32 %v396, 0.0
      %v461 = vmax.f32 %v397, 0.0
      %v462 = vmax.f32 %v398, 0.0
      %v463 = vmax.f32 %v399, 0.0
      %v464 = vmax.f32 %v400, 0.0
      %v465 = vmax.f32 %v401, 0.0
      %v466 = vmax.f32 %v402, 0.0
      %v467 = vmax.f32 %v403, 0.0
      %v468 = vmax.f32 %v404, 0.0
      %v469 = vmax.f32 %v405, 0.0
      %v470 = vmax.f32 %v406, 0.0
      %v471 = vmax.f32 %v407, 0.0
      %v472 = vmax.f32 %v408, 0.0
      %v473 = vmax.f32 %v409, 0.0
      %v474 = vmax.f32 %v410, 0.0
      %v475 = vmax.f32 %v411, 0.0
      %v476 = vmax.f32 %v412, 0.0
      %v477 = vmax.f32 %v413, 0.0
      %v478 = vmax.f32 %v414, 0.0
      %v479 = vmax.f32 %v415, 0.0
      %v480 = vmax.f32 %v416, 0.0
      %v481 = vmax.f32 %v417, 0.0
      %v482 = vmax.f32 %v418, 0.0
      %v483 = vmax.f32 %v419, 0.0
      %v484 = vmax.f32 %v420, 0.0
      %v485 = vmax.f32 %v421, 0.0
      %v486 = vmax.f32 %v422, 0.0
      %v487 = vmax.f32 %v423, 0.0
      %v488 = vmax.f32 %v424, 0.0
      %v489 = vmax.f32 %v425, 0.0
      %v490 = vmax.f32 %v426, 0.0
      %v491 = vmax.f32 %v427, 0.0
      %v492 = vmax.f32 %v428, 0.0
      %v493 = vmax.f32 %v429, 0.0
      %v494 = vmax.f32 %v430, 0.0
      %v495 = vmax.f32 %v431, 0.0
      %v496 = vmax.f32 %v432, 0.0
      %v497 = vmax.f32 %v433, 0.0
      %v498 = vmax.f32 %v434, 0.0
      %v499 = vmax.f32 %v435, 0.0
      %v500 = vmax.f32 %v436, 0.0
      %v501 = vmax.f32 %v437, 0.0
      %v502 = vmax.f32 %v438, 0.0
      %v503 = vmax.f32 %v439, 0.0
      %v504 = vmax.f32 %v440, 0.0
      %v505 = vmax.f32 %v441, 0.0
      %v506 = vmax.f32 %v442, 0.0
      %v507 = vmax.f32 %v443, 0.0
      %v508 = vmax.f32 %v444, 0.0
      %s509 = smul.u32 %s17, 512
      %v510 = vlaneseq
      %v511 = vshrl.u32 %v510, 7
      %v512 = vadd.s32 %v511, 8
      %v513 = vadd.s32 %v511, 16
      %v514 = vadd.s32 %v511, 24
      %v515 = vadd.s32 %v511, 32
      %v516 = vadd.s32 %v511, 40
      %v517 = vadd.s32 %v511, 48
      %v518 = vadd.s32 %v511, 56
      %v519 = vadd.s32 %v511, 64
      %v520 = vadd.s32 %v511, 72
      %v521 = vadd.s32 %v511, 80
      %v522 = vadd.s32 %v511, 88
      %v523 = vadd.s32 %v511, 96
      %v524 = vadd.s32 %v511, 104
      %v525 = vadd.s32 %v511, 112
      %v526 = vadd.s32 %v511, 120
      %v527 = vadd.s32 %v511, 128
      %v528 = vadd.s32 %v511, 136
      %v529 = vadd.s32 %v511, 144
      %v530 = vadd.s32 %v511, 152
      %v531 = vadd.s32 %v511, 160
      %v532 = vadd.s32 %v511, 168
      %v533 = vadd.s32 %v511, 176
      %v534 = vadd.s32 %v511, 184
      %v535 = vadd.s32 %v511, 192
      %v536 = vadd.s32 %v511, 200
      %v537 = vadd.s32 %v511, 208
      %v538 = vadd.s32 %v511, 216
      %v539 = vadd.s32 %v511, 224
      %v540 = vadd.s32 %v511, 232
      %v541 = vadd.s32 %v511, 240
      %v542 = vadd.s32 %v511, 248
      %v543 = vadd.s32 %v511, 256
      %v544 = vadd.s32 %v511, 264
      %v545 = vadd.s32 %v511, 272
      %v546 = vadd.s32 %v511, 280
      %v547 = vadd.s32 %v511, 288
      %v548 = vadd.s32 %v511, 296
      %v549 = vadd.s32 %v511, 304
      %v550 = vadd.s32 %v511, 312
      %v551 = vadd.s32 %v511, 320
      %v552 = vadd.s32 %v511, 328
      %v553 = vadd.s32 %v511, 336
      %v554 = vadd.s32 %v511, 344
      %v555 = vadd.s32 %v511, 352
      %v556 = vadd.s32 %v511, 360
      %v557 = vadd.s32 %v511, 368
      %v558 = vadd.s32 %v511, 376
      %v559 = vadd.s32 %v511, 384
      %v560 = vadd.s32 %v511, 392
      %v561 = vadd.s32 %v511, 400
      %v562 = vadd.s32 %v511, 408
      %v563 = vadd.s32 %v511, 416
      %v564 = vadd.s32 %v511, 424
      %v565 = vadd.s32 %v511, 432
      %v566 = vadd.s32 %v511, 440
      %v567 = vadd.s32 %v511, 448
      %v568 = vadd.s32 %v511, 456
      %v569 = vadd.s32 %v511, 464
      %v570 = vadd.s32 %v511, 472
      %v571 = vadd.s32 %v511, 480
      %v572 = vadd.s32 %v511, 488
      %v573 = vadd.s32 %v511, 496
      %v574 = vadd.s32 %v511, 504
      %v575 = vstv %s509
      %v576 = vadd.s32 %v575, %v511
      %v577 = vadd.s32 %v575, %v512
      %v578 = vadd.s32 %v575, %v513
      %v579 = vadd.s32 %v575, %v514
      %v580 = vadd.s32 %v575, %v515
      %v581 = vadd.s32 %v575, %v516
      %v582 = vadd.s32 %v575, %v517
      %v583 = vadd.s32 %v575, %v518
      %v584 = vadd.s32 %v575, %v519
      %v585 = vadd.s32 %v575, %v520
      %v586 = vadd.s32 %v575, %v521
      %v587 = vadd.s32 %v575, %v522
      %v588 = vadd.s32 %v575, %v523
      %v589 = vadd.s32 %v575, %v524
      %v590 = vadd.s32 %v575, %v525
      %v591 = vadd.s32 %v575, %v526
      %v592 = vadd.s32 %v575, %v527
      %v593 = vadd.s32 %v575, %v528
      %v594 = vadd.s32 %v575, %v529
      %v595 = vadd.s32 %v575, %v530
      %v596 = vadd.s32 %v575, %v531
      %v597 = vadd.s32 %v575, %v532
      %v598 = vadd.s32 %v575, %v533
      %v599 = vadd.s32 %v575, %v534
      %v600 = vadd.s32 %v575, %v535
      %v601 = vadd.s32 %v575, %v536
      %v602 = vadd.s32 %v575, %v537
      %v603 = vadd.s32 %v575, %v538
      %v604 = vadd.s32 %v575, %v539
      %v605 = vadd.s32 %v575, %v540
      %v606 = vadd.s32 %v575, %v541
      %v607 = vadd.s32 %v575, %v542
      %v608 = vadd.s32 %v575, %v543
      %v609 = vadd.s32 %v575, %v544
      %v610 = vadd.s32 %v575, %v545
      %v611 = vadd.s32 %v575, %v546
      %v612 = vadd.s32 %v575, %v547
      %v613 = vadd.s32 %v575, %v548
      %v614 = vadd.s32 %v575, %v549
      %v615 = vadd.s32 %v575, %v550
      %v616 = vadd.s32 %v575, %v551
      %v617 = vadd.s32 %v575, %v552
      %v618 = vadd.s32 %v575, %v553
      %v619 = vadd.s32 %v575, %v554
      %v620 = vadd.s32 %v575, %v555
      %v621 = vadd.s32 %v575, %v556
      %v622 = vadd.s32 %v575, %v557
      %v623 = vadd.s32 %v575, %v558
      %v624 = vadd.s32 %v575, %v559
      %v625 = vadd.s32 %v575, %v560
      %v626 = vadd.s32 %v575, %v561
      %v627 = vadd.s32 %v575, %v562
      %v628 = vadd.s32 %v575, %v563
      %v629 = vadd.s32 %v575, %v564
      %v630 = vadd.s32 %v575, %v565
      %v631 = vadd.s32 %v575, %v566
      %v632 = vadd.s32 %v575, %v567
      %v633 = vadd.s32 %v575, %v568
      %v634 = vadd.s32 %v575, %v569
      %v635 = vadd.s32 %v575, %v570
      %v636 = vadd.s32 %v575, %v571
      %v637 = vadd.s32 %v575, %v572
      %v638 = vadd.s32 %v575, %v573
      %v639 = vadd.s32 %v575, %v574
      %vm640 = vcmp.lt.s32.totalorder %v576, 2048
      %vm641 = vcmp.lt.s32.totalorder %v577, 2048
      %vm642 = vcmp.lt.s32.totalorder %v578, 2048
      %vm643 = vcmp.lt.s32.totalorder %v579, 2048
      %vm644 = vcmp.lt.s32.totalorder %v580, 2048
      %vm645 = vcmp.lt.s32.totalorder %v581, 2048
      %vm646 = vcmp.lt.s32.totalorder %v582, 2048
      %vm647 = vcmp.lt.s32.totalorder %v583, 2048
      %vm648 = vcmp.lt.s32.totalorder %v584, 2048
      %vm649 = vcmp.lt.s32.totalorder %v585, 2048
      %vm650 = vcmp.lt.s32.totalorder %v586, 2048
      %vm651 = vcmp.lt.s32.totalorder %v587, 2048
      %vm652 = vcmp.lt.s32.totalorder %v588, 2048
      %vm653 = vcmp.lt.s32.totalorder %v589, 2048
      %vm654 = vcmp.lt.s32.totalorder %v590, 2048
      %vm655 = vcmp.lt.s32.totalorder %v591, 2048
      %vm656 = vcmp.lt.s32.totalorder %v592, 2048
      %vm657 = vcmp.lt.s32.totalorder %v593, 2048
      %vm658 = vcmp.lt.s32.totalorder %v594, 2048
      %vm659 = vcmp.lt.s32.totalorder %v595, 2048
      %vm660 = vcmp.lt.s32.totalorder %v596, 2048
      %vm661 = vcmp.lt.s32.totalorder %v597, 2048
      %vm662 = vcmp.lt.s32.totalorder %v598, 2048
      %vm663 = vcmp.lt.s32.totalorder %v599, 2048
      %vm664 = vcmp.lt.s32.totalorder %v600, 2048
      %vm665 = vcmp.lt.s32.totalorder %v601, 2048
      %vm666 = vcmp.lt.s32.totalorder %v602, 2048
      %vm667 = vcmp.lt.s32.totalorder %v603, 2048
      %vm668 = vcmp.lt.s32.totalorder %v604, 2048
      %vm669 = vcmp.lt.s32.totalorder %v605, 2048
      %vm670 = vcmp.lt.s32.totalorder %v606, 2048
      %vm671 = vcmp.lt.s32.totalorder %v607, 2048
      %vm672 = vcmp.lt.s32.totalorder %v608, 2048
      %vm673 = vcmp.lt.s32.totalorder %v609, 2048
      %vm674 = vcmp.lt.s32.totalorder %v610, 2048
      %vm675 = vcmp.lt.s32.totalorder %v611, 2048
      %vm676 = vcmp.lt.s32.totalorder %v612, 2048
      %vm677 = vcmp.lt.s32.totalorder %v613, 2048
      %vm678 = vcmp.lt.s32.totalorder %v614, 2048
      %vm679 = vcmp.lt.s32.totalorder %v615, 2048
      %vm680 = vcmp.lt.s32.totalorder %v616, 2048
      %vm681 = vcmp.lt.s32.totalorder %v617, 2048
      %vm682 = vcmp.lt.s32.totalorder %v618, 2048
      %vm683 = vcmp.lt.s32.totalorder %v619, 2048
      %vm684 = vcmp.lt.s32.totalorder %v620, 2048
      %vm685 = vcmp.lt.s32.totalorder %v621, 2048
      %vm686 = vcmp.lt.s32.totalorder %v622, 2048
      %vm687 = vcmp.lt.s32.totalorder %v623, 2048
      %vm688 = vcmp.lt.s32.totalorder %v624, 2048
      %vm689 = vcmp.lt.s32.totalorder %v625, 2048
      %vm690 = vcmp.lt.s32.totalorder %v626, 2048
      %vm691 = vcmp.lt.s32.totalorder %v627, 2048
      %vm692 = vcmp.lt.s32.totalorder %v628, 2048
      %vm693 = vcmp.lt.s32.totalorder %v629, 2048
      %vm694 = vcmp.lt.s32.totalorder %v630, 2048
      %vm695 = vcmp.lt.s32.totalorder %v631, 2048
      %vm696 = vcmp.lt.s32.totalorder %v632, 2048
      %vm697 = vcmp.lt.s32.totalorder %v633, 2048
      %vm698 = vcmp.lt.s32.totalorder %v634, 2048
      %vm699 = vcmp.lt.s32.totalorder %v635, 2048
      %vm700 = vcmp.lt.s32.totalorder %v636, 2048
      %vm701 = vcmp.lt.s32.totalorder %v637, 2048
      %vm702 = vcmp.lt.s32.totalorder %v638, 2048
      %vm703 = vcmp.lt.s32.totalorder %v639, 2048
      %v704 = vsel %vm640, 1, 0
      %v705 = vsel %vm641, 1, 0
      %v706 = vsel %vm642, 1, 0
      %v707 = vsel %vm643, 1, 0
      %v708 = vsel %vm644, 1, 0
      %v709 = vsel %vm645, 1, 0
      %v710 = vsel %vm646, 1, 0
      %v711 = vsel %vm647, 1, 0
      %v712 = vsel %vm648, 1, 0
      %v713 = vsel %vm649, 1, 0
      %v714 = vsel %vm650, 1, 0
      %v715 = vsel %vm651, 1, 0
      %v716 = vsel %vm652, 1, 0
      %v717 = vsel %vm653, 1, 0
      %v718 = vsel %vm654, 1, 0
      %v719 = vsel %vm655, 1, 0
      %v720 = vsel %vm656, 1, 0
      %v721 = vsel %vm657, 1, 0
      %v722 = vsel %vm658, 1, 0
      %v723 = vsel %vm659, 1, 0
      %v724 = vsel %vm660, 1, 0
      %v725 = vsel %vm661, 1, 0
      %v726 = vsel %vm662, 1, 0
      %v727 = vsel %vm663, 1, 0
      %v728 = vsel %vm664, 1, 0
      %v729 = vsel %vm665, 1, 0
      %v730 = vsel %vm666, 1, 0
      %v731 = vsel %vm667, 1, 0
      %v732 = vsel %vm668, 1, 0
      %v733 = vsel %vm669, 1, 0
      %v734 = vsel %vm670, 1, 0
      %v735 = vsel %vm671, 1, 0
      %v736 = vsel %vm672, 1, 0
      %v737 = vsel %vm673, 1, 0
      %v738 = vsel %vm674, 1, 0
      %v739 = vsel %vm675, 1, 0
      %v740 = vsel %vm676, 1, 0
      %v741 = vsel %vm677, 1, 0
      %v742 = vsel %vm678, 1, 0
      %v743 = vsel %vm679, 1, 0
      %v744 = vsel %vm680, 1, 0
      %v745 = vsel %vm681, 1, 0
      %v746 = vsel %vm682, 1, 0
      %v747 = vsel %vm683, 1, 0
      %v748 = vsel %vm684, 1, 0
      %v749 = vsel %vm685, 1, 0
      %v750 = vsel %vm686, 1, 0
      %v751 = vsel %vm687, 1, 0
      %v752 = vsel %vm688, 1, 0
      %v753 = vsel %vm689, 1, 0
      %v754 = vsel %vm690, 1, 0
      %v755 = vsel %vm691, 1, 0
      %v756 = vsel %vm692, 1, 0
      %v757 = vsel %vm693, 1, 0
      %v758 = vsel %vm694, 1, 0
      %v759 = vsel %vm695, 1, 0
      %v760 = vsel %vm696, 1, 0
      %v761 = vsel %vm697, 1, 0
      %v762 = vsel %vm698, 1, 0
      %v763 = vsel %vm699, 1, 0
      %v764 = vsel %vm700, 1, 0
      %v765 = vsel %vm701, 1, 0
      %v766 = vsel %vm702, 1, 0
      %v767 = vsel %vm703, 1, 0
      %v768 = vcvt.s32.f32 %v704
      %v769 = vcvt.s32.f32 %v705
      %v770 = vcvt.s32.f32 %v706
      %v771 = vcvt.s32.f32 %v707
      %v772 = vcvt.s32.f32 %v708
      %v773 = vcvt.s32.f32 %v709
      %v774 = vcvt.s32.f32 %v710
      %v775 = vcvt.s32.f32 %v711
      %v776 = vcvt.s32.f32 %v712
      %v777 = vcvt.s32.f32 %v713
      %v778 = vcvt.s32.f32 %v714
      %v779 = vcvt.s32.f32 %v715
      %v780 = vcvt.s32.f32 %v716
      %v781 = vcvt.s32.f32 %v717
      %v782 = vcvt.s32.f32 %v718
      %v783 = vcvt.s32.f32 %v719
      %v784 = vcvt.s32.f32 %v720
      %v785 = vcvt.s32.f32 %v721
      %v786 = vcvt.s32.f32 %v722
      %v787 = vcvt.s32.f32 %v723
      %v788 = vcvt.s32.f32 %v724
      %v789 = vcvt.s32.f32 %v725
      %v790 = vcvt.s32.f32 %v726
      %v791 = vcvt.s32.f32 %v727
      %v792 = vcvt.s32.f32 %v728
      %v793 = vcvt.s32.f32 %v729
      %v794 = vcvt.s32.f32 %v730
      %v795 = vcvt.s32.f32 %v731
      %v796 = vcvt.s32.f32 %v732
      %v797 = vcvt.s32.f32 %v733
      %v798 = vcvt.s32.f32 %v734
      %v799 = vcvt.s32.f32 %v735
      %v800 = vcvt.s32.f32 %v736
      %v801 = vcvt.s32.f32 %v737
      %v802 = vcvt.s32.f32 %v738
      %v803 = vcvt.s32.f32 %v739
      %v804 = vcvt.s32.f32 %v740
      %v805 = vcvt.s32.f32 %v741
      %v806 = vcvt.s32.f32 %v742
      %v807 = vcvt.s32.f32 %v743
      %v808 = vcvt.s32.f32 %v744
      %v809 = vcvt.s32.f32 %v745
      %v810 = vcvt.s32.f32 %v746
      %v811 = vcvt.s32.f32 %v747
      %v812 = vcvt.s32.f32 %v748
      %v813 = vcvt.s32.f32 %v749
      %v814 = vcvt.s32.f32 %v750
      %v815 = vcvt.s32.f32 %v751
      %v816 = vcvt.s32.f32 %v752
      %v817 = vcvt.s32.f32 %v753
      %v818 = vcvt.s32.f32 %v754
      %v819 = vcvt.s32.f32 %v755
      %v820 = vcvt.s32.f32 %v756
      %v821 = vcvt.s32.f32 %v757
      %v822 = vcvt.s32.f32 %v758
      %v823 = vcvt.s32.f32 %v759
      %v824 = vcvt.s32.f32 %v760
      %v825 = vcvt.s32.f32 %v761
      %v826 = vcvt.s32.f32 %v762
      %v827 = vcvt.s32.f32 %v763
      %v828 = vcvt.s32.f32 %v764
      %v829 = vcvt.s32.f32 %v765
      %v830 = vcvt.s32.f32 %v766
      %v831 = vcvt.s32.f32 %v767
      %v832 = vmul.f32 %v445, %v768
      %v833 = vmul.f32 %v446, %v769
      %v834 = vmul.f32 %v447, %v770
      %v835 = vmul.f32 %v448, %v771
      %v836 = vmul.f32 %v449, %v772
      %v837 = vmul.f32 %v450, %v773
      %v838 = vmul.f32 %v451, %v774
      %v839 = vmul.f32 %v452, %v775
      %v840 = vmul.f32 %v453, %v776
      %v841 = vmul.f32 %v454, %v777
      %v842 = vmul.f32 %v455, %v778
      %v843 = vmul.f32 %v456, %v779
      %v844 = vmul.f32 %v457, %v780
      %v845 = vmul.f32 %v458, %v781
      %v846 = vmul.f32 %v459, %v782
      %v847 = vmul.f32 %v460, %v783
      %v848 = vmul.f32 %v461, %v784
      %v849 = vmul.f32 %v462, %v785
      %v850 = vmul.f32 %v463, %v786
      %v851 = vmul.f32 %v464, %v787
      %v852 = vmul.f32 %v465, %v788
      %v853 = vmul.f32 %v466, %v789
      %v854 = vmul.f32 %v467, %v790
      %v855 = vmul.f32 %v468, %v791
      %v856 = vmul.f32 %v469, %v792
      %v857 = vmul.f32 %v470, %v793
      %v858 = vmul.f32 %v471, %v794
      %v859 = vmul.f32 %v472, %v795
      %v860 = vmul.f32 %v473, %v796
      %v861 = vmul.f32 %v474, %v797
      %v862 = vmul.f32 %v475, %v798
      %v863 = vmul.f32 %v476, %v799
      %v864 = vmul.f32 %v477, %v800
      %v865 = vmul.f32 %v478, %v801
      %v866 = vmul.f32 %v479, %v802
      %v867 = vmul.f32 %v480, %v803
      %v868 = vmul.f32 %v481, %v804
      %v869 = vmul.f32 %v482, %v805
      %v870 = vmul.f32 %v483, %v806
      %v871 = vmul.f32 %v484, %v807
      %v872 = vmul.f32 %v485, %v808
      %v873 = vmul.f32 %v486, %v809
      %v874 = vmul.f32 %v487, %v810
      %v875 = vmul.f32 %v488, %v811
      %v876 = vmul.f32 %v489, %v812
      %v877 = vmul.f32 %v490, %v813
      %v878 = vmul.f32 %v491, %v814
      %v879 = vmul.f32 %v492, %v815
      %v880 = vmul.f32 %v493, %v816
      %v881 = vmul.f32 %v494, %v817
      %v882 = vmul.f32 %v495, %v818
      %v883 = vmul.f32 %v496, %v819
      %v884 = vmul.f32 %v497, %v820
      %v885 = vmul.f32 %v498, %v821
      %v886 = vmul.f32 %v499, %v822
      %v887 = vmul.f32 %v500, %v823
      %v888 = vmul.f32 %v501, %v824
      %v889 = vmul.f32 %v502, %v825
      %v890 = vmul.f32 %v503, %v826
      %v891 = vmul.f32 %v504, %v827
      %v892 = vmul.f32 %v505, %v828
      %v893 = vmul.f32 %v506, %v829
      %v894 = vmul.f32 %v507, %v830
      %v895 = vmul.f32 %v508, %v831
      %v896 = vld [vmem:[%s3] sm:$0xf]
      %vm897 = vcmask 31744
      %v899 = vsel %vm897, %v832, 0
      %v902 = vsel %vm897, %v833, 0
      %v905 = vsel %vm897, %v834, 0
      %v908 = vsel %vm897, %v835, 0
      %v911 = vsel %vm897, %v836, 0
      %v914 = vsel %vm897, %v837, 0
      %v917 = vsel %vm897, %v838, 0
      %v920 = vsel %vm897, %v839, 0
      %v923 = vsel %vm897, %v840, 0
      %v926 = vsel %vm897, %v841, 0
      %v929 = vsel %vm897, %v842, 0
      %v932 = vsel %vm897, %v843, 0
      %v935 = vsel %vm897, %v844, 0
      %v938 = vsel %vm897, %v845, 0
      %v941 = vsel %vm897, %v846, 0
      %v944 = vsel %vm897, %v847, 0
      %v947 = vsel %vm897, %v848, 0
      %v950 = vsel %vm897, %v849, 0
      %v953 = vsel %vm897, %v850, 0
      %v956 = vsel %vm897, %v851, 0
      %v959 = vsel %vm897, %v852, 0
      %v962 = vsel %vm897, %v853, 0
      %v965 = vsel %vm897, %v854, 0
      %v968 = vsel %vm897, %v855, 0
      %v971 = vsel %vm897, %v856, 0
      %v974 = vsel %vm897, %v857, 0
      %v977 = vsel %vm897, %v858, 0
      %v980 = vsel %vm897, %v859, 0
      %v983 = vsel %vm897, %v860, 0
      %v986 = vsel %vm897, %v861, 0
      %v989 = vsel %vm897, %v862, 0
      %v992 = vsel %vm897, %v863, 0
      %v995 = vsel %vm897, %v864, 0
      %v998 = vsel %vm897, %v865, 0
      %v1001 = vsel %vm897, %v866, 0
      %v1004 = vsel %vm897, %v867, 0
      %v1007 = vsel %vm897, %v868, 0
      %v1010 = vsel %vm897, %v869, 0
      %v1013 = vsel %vm897, %v870, 0
      %v1016 = vsel %vm897, %v871, 0
      %v1019 = vsel %vm897, %v872, 0
      %v1022 = vsel %vm897, %v873, 0
      %v1025 = vsel %vm897, %v874, 0
      %v1028 = vsel %vm897, %v875, 0
      %v1031 = vsel %vm897, %v876, 0
      %v1034 = vsel %vm897, %v877, 0
      %v1037 = vsel %vm897, %v878, 0
      %v1040 = vsel %vm897, %v879, 0
      %v1043 = vsel %vm897, %v880, 0
      %v1046 = vsel %vm897, %v881, 0
      %v1049 = vsel %vm897, %v882, 0
      %v1052 = vsel %vm897, %v883, 0
      %v1055 = vsel %vm897, %v884, 0
      %v1058 = vsel %vm897, %v885, 0
      %v1061 = vsel %vm897, %v886, 0
      %v1064 = vsel %vm897, %v887, 0
      %v1067 = vsel %vm897, %v888, 0
      %v1070 = vsel %vm897, %v889, 0
      %v1073 = vsel %vm897, %v890, 0
      %v1076 = vsel %vm897, %v891, 0
      %v1079 = vsel %vm897, %v892, 0
      %v1082 = vsel %vm897, %v893, 0
      %v1085 = vsel %vm897, %v894, 0
      %v1088 = vsel %vm897, %v895, 0
      %vm1090 = vcmask 1043456
      %v1092 = vsel %vm1090, %v896, 0
      %1094 = vmatprep.subr.mxu0 0.0
      %1095 = vmatpush1.msra.mxu0 %v1092
      %1096 = vmatprep.subr.mxu0 0.0
      %1097 = vmatpush1.msra.mxu0 0.0
      %1098 = vmatprep.subr.mxu0 0.0
      %1099 = vmatpush1.msra.mxu0 0.0
      %1100 = vmatprep.subr.mxu0 0.0
      %1101 = vmatpush1.msra.mxu0 0.0
      %1102 = vmatprep.subr.mxu0 0.0
      %1103 = vmatpush1.msra.mxu0 0.0
      %1104 = vmatprep.subr.mxu0 0.0
      %1105 = vmatpush1.msra.mxu0 0.0
      %1106 = vmatprep.subr.mxu0 0.0
      %1107 = vmatpush1.msra.mxu0 0.0
      %1108 = vmatprep.subr.mxu0 0.0
      %1109 = vmatpush1.msra.mxu0 0.0
      %1110 = vmatprep.subr.mxu0 0.0
      %1111 = vmatpush1.msra.mxu0 0.0
      %1112 = vmatprep.subr.mxu0 0.0
      %1113 = vmatpush1.msra.mxu0 0.0
      %1114 = vmatprep.subr.mxu0 0.0
      %1115 = vmatpush1.msra.mxu0 0.0
      %1116 = vmatprep.subr.mxu0 0.0
      %1117 = vmatpush1.msra.mxu0 0.0
      %1118 = vmatprep.subr.mxu0 0.0
      %1119 = vmatpush1.msra.mxu0 0.0
      %1120 = vmatprep.subr.mxu0 0.0
      %1121 = vmatpush1.msra.mxu0 0.0
      %1122 = vmatprep.subr.mxu0 0.0
      %1123 = vmatpush1.msra.mxu0 0.0
      %1124 = vmatprep.subr.mxu0 0.0
      %1125 = vmatpush1.msra.mxu0 0.0
      %1126 = vmatprep.subr.mxu0 0.0
      %1127 = vmatpush1.msra.mxu0 0.0
      %1128 = vmatprep.subr.mxu0 0.0
      %1129 = vmatpush1.msra.mxu0 0.0
      %1130 = vmatprep.subr.mxu0 0.0
      %1131 = vmatpush1.msra.mxu0 0.0
      %1132 = vmatprep.subr.mxu0 0.0
      %1133 = vmatpush1.msra.mxu0 0.0
      %1134 = vmatprep.subr.mxu0 0.0
      %1135 = vmatpush1.msra.mxu0 0.0
      %1136 = vmatprep.subr.mxu0 0.0
      %1137 = vmatpush1.msra.mxu0 0.0
      %1138 = vmatprep.subr.mxu0 0.0
      %1139 = vmatpush1.msra.mxu0 0.0
      %1140 = vmatprep.subr.mxu0 0.0
      %1141 = vmatpush1.msra.mxu0 0.0
      %1142 = vmatprep.subr.mxu0 0.0
      %1143 = vmatpush1.msra.mxu0 0.0
      %1144 = vmatprep.subr.mxu0 0.0
      %1145 = vmatpush1.msra.mxu0 0.0
      %1146 = vmatprep.subr.mxu0 0.0
      %1147 = vmatpush1.msra.mxu0 0.0
      %1148 = vmatprep.subr.mxu0 0.0
      %1149 = vmatpush1.msra.mxu0 0.0
      %1150 = vmatprep.subr.mxu0 0.0
      %1151 = vmatpush1.msra.mxu0 0.0
      %1152 = vmatprep.subr.mxu0 0.0
      %1153 = vmatpush1.msra.mxu0 0.0
      %1154 = vmatprep.subr.mxu0 0.0
      %1155 = vmatpush1.msra.mxu0 0.0
      %1156 = vmatprep.subr.mxu0 0.0
      %1157 = vmatpush1.msra.mxu0 0.0
      %1158 = vmatprep.mubr.f32.mxu0 0.0
      %1159 = vmatmul.mubr.f32.gmra.mrb[0].mxu0 %v899
      %v1160 = vpop.f32.mrb[0].mxu0
      %v1161 = vadd.f32 0.0, %v1160
      %v1162 = vpop.f32.mrb[0].mxu0
      %1163 = vmatprep.mubr.f32.mxu0 0.0
      %1164 = vmatmul.mubr.f32.gmra.mrb[0].mxu0 %v902
      %v1165 = vpop.f32.mrb[0].mxu0
      %v1166 = vadd.f32 0.0, %v1165
      %v1167 = vpop.f32.mrb[0].mxu0
      %1168 = vmatprep.mubr.f32.mxu0 0.0
      %1169 = vmatmul.mubr.f32.gmra.mrb[0].mxu0 %v905
      %v1170 = vpop.f32.mrb[0].mxu0
      %v1171 = vadd.f32 0.0, %v1170
      %v1172 = vpop.f32.mrb[0].mxu0
      %1173 = vmatprep.mubr.f32.mxu0 0.0
      %1174 = vmatmul.mubr.f32.gmra.mrb[0].mxu0 %v908
      %v1175 = vpop.f32.mrb[0].mxu0
      %v1176 = vadd.f32 0.0, %v1175
      %v1177 = vpop.f32.mrb[0].mxu0
      %1178 = vmatprep.mubr.f32.mxu0 0.0
      %1179 = vmatmul.mubr.f32.gmra.mrb[0].mxu0 %v911
      %v1180 = vpop.f32.mrb[0].mxu0
      %v1181 = vadd.f32 0.0, %v1180
      %v1182 = vpop.f32.mrb[0].mxu0
      %1183 = vmatprep.mubr.f32.mxu0 0.0
      %1184 = vmatmul.mubr.f32.gmra.mrb[0].mxu0 %v914
      %v1185 = vpop.f32.mrb[0].mxu0
      %v1186 = vadd.f32 0.0, %v1185
      %v1187 = vpop.f32.mrb[0].mxu0
      %1188 = vmatprep.mubr.f32.mxu0 0.0
      %1189 = vmatmul.mubr.f32.gmra.mrb[0].mxu0 %v917
      %v1190 = vpop.f32.mrb[0].mxu0
      %v1191 = vadd.f32 0.0, %v1190
      %v1192 = vpop.f32.mrb[0].mxu0
      %1193 = vmatprep.mubr.f32.mxu0 0.0
      %1194 = vmatmul.mubr.f32.gmra.mrb[0].mxu0 %v920
      %v1195 = vpop.f32.mrb[0].mxu0
      %v1196 = vadd.f32 0.0, %v1195
      %v1197 = vpop.f32.mrb[0].mxu0
      %1198 = vmatprep.mubr.f32.mxu0 0.0
      %1199 = vmatmul.mubr.f32.gmra.mrb[0].mxu0 %v923
      %v1200 = vpop.f32.mrb[0].mxu0
      %v1201 = vadd.f32 0.0, %v1200
      %v1202 = vpop.f32.mrb[0].mxu0
      %1203 = vmatprep.mubr.f32.mxu0 0.0
      %1204 = vmatmul.mubr.f32.gmra.mrb[0].mxu0 %v926
      %v1205 = vpop.f32.mrb[0].mxu0
      %v1206 = vadd.f32 0.0, %v1205
      %v1207 = vpop.f32.mrb[0].mxu0
      %1208 = vmatprep.mubr.f32.mxu0 0.0
      %1209 = vmatmul.mubr.f32.gmra.mrb[0].mxu0 %v929
      %v1210 = vpop.f32.mrb[0].mxu0
      %v1211 = vadd.f32 0.0, %v1210
      %v1212 = vpop.f32.mrb[0].mxu0
      %1213 = vmatprep.mubr.f32.mxu0 0.0
      %1214 = vmatmul.mubr.f32.gmra.mrb[0].mxu0 %v932
      %v1215 = vpop.f32.mrb[0].mxu0
      %v1216 = vadd.f32 0.0, %v1215
      %v1217 = vpop.f32.mrb[0].mxu0
      %1218 = vmatprep.mubr.f32.mxu0 0.0
      %1219 = vmatmul.mubr.f32.gmra.mrb[0].mxu0 %v935
      %v1220 = vpop.f32.mrb[0].mxu0
      %v1221 = vadd.f32 0.0, %v1220
      %v1222 = vpop.f32.mrb[0].mxu0
      %1223 = vmatprep.mubr.f32.mxu0 0.0
      %1224 = vmatmul.mubr.f32.gmra.mrb[0].mxu0 %v938
      %v1225 = vpop.f32.mrb[0].mxu0
      %v1226 = vadd.f32 0.0, %v1225
      %v1227 = vpop.f32.mrb[0].mxu0
      %1228 = vmatprep.mubr.f32.mxu0 0.0
      %1229 = vmatmul.mubr.f32.gmra.mrb[0].mxu0 %v941
      %v1230 = vpop.f32.mrb[0].mxu0
      %v1231 = vadd.f32 0.0, %v1230
      %v1232 = vpop.f32.mrb[0].mxu0
      %1233 = vmatprep.mubr.f32.mxu0 0.0
      %1234 = vmatmul.mubr.f32.gmra.mrb[0].mxu0 %v944
      %v1235 = vpop.f32.mrb[0].mxu0
      %v1236 = vadd.f32 0.0, %v1235
      %v1237 = vpop.f32.mrb[0].mxu0
      %1238 = vmatprep.mubr.f32.mxu0 0.0
      %1239 = vmatmul.mubr.f32.gmra.mrb[0].mxu0 %v947
      %v1240 = vpop.f32.mrb[0].mxu0
      %v1241 = vadd.f32 0.0, %v1240
      %v1242 = vpop.f32.mrb[0].mxu0
      %1243 = vmatprep.mubr.f32.mxu0 0.0
      %1244 = vmatmul.mubr.f32.gmra.mrb[0].mxu0 %v950
      %v1245 = vpop.f32.mrb[0].mxu0
      %v1246 = vadd.f32 0.0, %v1245
      %v1247 = vpop.f32.mrb[0].mxu0
      %1248 = vmatprep.mubr.f32.mxu0 0.0
      %1249 = vmatmul.mubr.f32.gmra.mrb[0].mxu0 %v953
      %v1250 = vpop.f32.mrb[0].mxu0
      %v1251 = vadd.f32 0.0, %v1250
      %v1252 = vpop.f32.mrb[0].mxu0
      %1253 = vmatprep.mubr.f32.mxu0 0.0
      %1254 = vmatmul.mubr.f32.gmra.mrb[0].mxu0 %v956
      %v1255 = vpop.f32.mrb[0].mxu0
      %v1256 = vadd.f32 0.0, %v1255
      %v1257 = vpop.f32.mrb[0].mxu0
      %1258 = vmatprep.mubr.f32.mxu0 0.0
      %1259 = vmatmul.mubr.f32.gmra.mrb[0].mxu0 %v959
      %v1260 = vpop.f32.mrb[0].mxu0
      %v1261 = vadd.f32 0.0, %v1260
      %v1262 = vpop.f32.mrb[0].mxu0
      %1263 = vmatprep.mubr.f32.mxu0 0.0
      %1264 = vmatmul.mubr.f32.gmra.mrb[0].mxu0 %v962
      %v1265 = vpop.f32.mrb[0].mxu0
      %v1266 = vadd.f32 0.0, %v1265
      %v1267 = vpop.f32.mrb[0].mxu0
      %1268 = vmatprep.mubr.f32.mxu0 0.0
      %1269 = vmatmul.mubr.f32.gmra.mrb[0].mxu0 %v965
      %v1270 = vpop.f32.mrb[0].mxu0
      %v1271 = vadd.f32 0.0, %v1270
      %v1272 = vpop.f32.mrb[0].mxu0
      %1273 = vmatprep.mubr.f32.mxu0 0.0
      %1274 = vmatmul.mubr.f32.gmra.mrb[0].mxu0 %v968
      %v1275 = vpop.f32.mrb[0].mxu0
      %v1276 = vadd.f32 0.0, %v1275
      %v1277 = vpop.f32.mrb[0].mxu0
      %1278 = vmatprep.mubr.f32.mxu0 0.0
      %1279 = vmatmul.mubr.f32.gmra.mrb[0].mxu0 %v971
      %v1280 = vpop.f32.mrb[0].mxu0
      %v1281 = vadd.f32 0.0, %v1280
      %v1282 = vpop.f32.mrb[0].mxu0
      %1283 = vmatprep.mubr.f32.mxu0 0.0
      %1284 = vmatmul.mubr.f32.gmra.mrb[0].mxu0 %v974
      %v1285 = vpop.f32.mrb[0].mxu0
      %v1286 = vadd.f32 0.0, %v1285
      %v1287 = vpop.f32.mrb[0].mxu0
      %1288 = vmatprep.mubr.f32.mxu0 0.0
      %1289 = vmatmul.mubr.f32.gmra.mrb[0].mxu0 %v977
      %v1290 = vpop.f32.mrb[0].mxu0
      %v1291 = vadd.f32 0.0, %v1290
      %v1292 = vpop.f32.mrb[0].mxu0
      %1293 = vmatprep.mubr.f32.mxu0 0.0
      %1294 = vmatmul.mubr.f32.gmra.mrb[0].mxu0 %v980
      %v1295 = vpop.f32.mrb[0].mxu0
      %v1296 = vadd.f32 0.0, %v1295
      %v1297 = vpop.f32.mrb[0].mxu0
      %1298 = vmatprep.mubr.f32.mxu0 0.0
      %1299 = vmatmul.mubr.f32.gmra.mrb[0].mxu0 %v983
      %v1300 = vpop.f32.mrb[0].mxu0
      %v1301 = vadd.f32 0.0, %v1300
      %v1302 = vpop.f32.mrb[0].mxu0
      %1303 = vmatprep.mubr.f32.mxu0 0.0
      %1304 = vmatmul.mubr.f32.gmra.mrb[0].mxu0 %v986
      %v1305 = vpop.f32.mrb[0].mxu0
      %v1306 = vadd.f32 0.0, %v1305
      %v1307 = vpop.f32.mrb[0].mxu0
      %1308 = vmatprep.mubr.f32.mxu0 0.0
      %1309 = vmatmul.mubr.f32.gmra.mrb[0].mxu0 %v989
      %v1310 = vpop.f32.mrb[0].mxu0
      %v1311 = vadd.f32 0.0, %v1310
      %v1312 = vpop.f32.mrb[0].mxu0
      %1313 = vmatprep.mubr.f32.mxu0 0.0
      %1314 = vmatmul.mubr.f32.gmra.mrb[0].mxu0 %v992
      %v1315 = vpop.f32.mrb[0].mxu0
      %v1316 = vadd.f32 0.0, %v1315
      %v1317 = vpop.f32.mrb[0].mxu0
      %1318 = vmatprep.mubr.f32.mxu0 0.0
      %1319 = vmatmul.mubr.f32.gmra.mrb[0].mxu0 %v995
      %v1320 = vpop.f32.mrb[0].mxu0
      %v1321 = vadd.f32 0.0, %v1320
      %v1322 = vpop.f32.mrb[0].mxu0
      %1323 = vmatprep.mubr.f32.mxu0 0.0
      %1324 = vmatmul.mubr.f32.gmra.mrb[0].mxu0 %v998
      %v1325 = vpop.f32.mrb[0].mxu0
      %v1326 = vadd.f32 0.0, %v1325
      %v1327 = vpop.f32.mrb[0].mxu0
      %1328 = vmatprep.mubr.f32.mxu0 0.0
      %1329 = vmatmul.mubr.f32.gmra.mrb[0].mxu0 %v1001
      %v1330 = vpop.f32.mrb[0].mxu0
      %v1331 = vadd.f32 0.0, %v1330
      %v1332 = vpop.f32.mrb[0].mxu0
      %1333 = vmatprep.mubr.f32.mxu0 0.0
      %1334 = vmatmul.mubr.f32.gmra.mrb[0].mxu0 %v1004
      %v1335 = vpop.f32.mrb[0].mxu0
      %v1336 = vadd.f32 0.0, %v1335
      %v1337 = vpop.f32.mrb[0].mxu0
      %1338 = vmatprep.mubr.f32.mxu0 0.0
      %1339 = vmatmul.mubr.f32.gmra.mrb[0].mxu0 %v1007
      %v1340 = vpop.f32.mrb[0].mxu0
      %v1341 = vadd.f32 0.0, %v1340
      %v1342 = vpop.f32.mrb[0].mxu0
      %1343 = vmatprep.mubr.f32.mxu0 0.0
      %1344 = vmatmul.mubr.f32.gmra.mrb[0].mxu0 %v1010
      %v1345 = vpop.f32.mrb[0].mxu0
      %v1346 = vadd.f32 0.0, %v1345
      %v1347 = vpop.f32.mrb[0].mxu0
      %1348 = vmatprep.mubr.f32.mxu0 0.0
      %1349 = vmatmul.mubr.f32.gmra.mrb[0].mxu0 %v1013
      %v1350 = vpop.f32.mrb[0].mxu0
      %v1351 = vadd.f32 0.0, %v1350
      %v1352 = vpop.f32.mrb[0].mxu0
      %1353 = vmatprep.mubr.f32.mxu0 0.0
      %1354 = vmatmul.mubr.f32.gmra.mrb[0].mxu0 %v1016
      %v1355 = vpop.f32.mrb[0].mxu0
      %v1356 = vadd.f32 0.0, %v1355
      %v1357 = vpop.f32.mrb[0].mxu0
      %1358 = vmatprep.mubr.f32.mxu0 0.0
      %1359 = vmatmul.mubr.f32.gmra.mrb[0].mxu0 %v1019
      %v1360 = vpop.f32.mrb[0].mxu0
      %v1361 = vadd.f32 0.0, %v1360
      %v1362 = vpop.f32.mrb[0].mxu0
      %1363 = vmatprep.mubr.f32.mxu0 0.0
      %1364 = vmatmul.mubr.f32.gmra.mrb[0].mxu0 %v1022
      %v1365 = vpop.f32.mrb[0].mxu0
      %v1366 = vadd.f32 0.0, %v1365
      %v1367 = vpop.f32.mrb[0].mxu0
      %1368 = vmatprep.mubr.f32.mxu0 0.0
      %1369 = vmatmul.mubr.f32.gmra.mrb[0].mxu0 %v1025
      %v1370 = vpop.f32.mrb[0].mxu0
      %v1371 = vadd.f32 0.0, %v1370
      %v1372 = vpop.f32.mrb[0].mxu0
      %1373 = vmatprep.mubr.f32.mxu0 0.0
      %1374 = vmatmul.mubr.f32.gmra.mrb[0].mxu0 %v1028
      %v1375 = vpop.f32.mrb[0].mxu0
      %v1376 = vadd.f32 0.0, %v1375
      %v1377 = vpop.f32.mrb[0].mxu0
      %1378 = vmatprep.mubr.f32.mxu0 0.0
      %1379 = vmatmul.mubr.f32.gmra.mrb[0].mxu0 %v1031
      %v1380 = vpop.f32.mrb[0].mxu0
      %v1381 = vadd.f32 0.0, %v1380
      %v1382 = vpop.f32.mrb[0].mxu0
      %1383 = vmatprep.mubr.f32.mxu0 0.0
      %1384 = vmatmul.mubr.f32.gmra.mrb[0].mxu0 %v1034
      %v1385 = vpop.f32.mrb[0].mxu0
      %v1386 = vadd.f32 0.0, %v1385
      %v1387 = vpop.f32.mrb[0].mxu0
      %1388 = vmatprep.mubr.f32.mxu0 0.0
      %1389 = vmatmul.mubr.f32.gmra.mrb[0].mxu0 %v1037
      %v1390 = vpop.f32.mrb[0].mxu0
      %v1391 = vadd.f32 0.0, %v1390
      %v1392 = vpop.f32.mrb[0].mxu0
      %1393 = vmatprep.mubr.f32.mxu0 0.0
      %1394 = vmatmul.mubr.f32.gmra.mrb[0].mxu0 %v1040
      %v1395 = vpop.f32.mrb[0].mxu0
      %v1396 = vadd.f32 0.0, %v1395
      %v1397 = vpop.f32.mrb[0].mxu0
      %1398 = vmatprep.mubr.f32.mxu0 0.0
      %1399 = vmatmul.mubr.f32.gmra.mrb[0].mxu0 %v1043
      %v1400 = vpop.f32.mrb[0].mxu0
      %v1401 = vadd.f32 0.0, %v1400
      %v1402 = vpop.f32.mrb[0].mxu0
      %1403 = vmatprep.mubr.f32.mxu0 0.0
      %1404 = vmatmul.mubr.f32.gmra.mrb[0].mxu0 %v1046
      %v1405 = vpop.f32.mrb[0].mxu0
      %v1406 = vadd.f32 0.0, %v1405
      %v1407 = vpop.f32.mrb[0].mxu0
      %1408 = vmatprep.mubr.f32.mxu0 0.0
      %1409 = vmatmul.mubr.f32.gmra.mrb[0].mxu0 %v1049
      %v1410 = vpop.f32.mrb[0].mxu0
      %v1411 = vadd.f32 0.0, %v1410
      %v1412 = vpop.f32.mrb[0].mxu0
      %1413 = vmatprep.mubr.f32.mxu0 0.0
      %1414 = vmatmul.mubr.f32.gmra.mrb[0].mxu0 %v1052
      %v1415 = vpop.f32.mrb[0].mxu0
      %v1416 = vadd.f32 0.0, %v1415
      %v1417 = vpop.f32.mrb[0].mxu0
      %1418 = vmatprep.mubr.f32.mxu0 0.0
      %1419 = vmatmul.mubr.f32.gmra.mrb[0].mxu0 %v1055
      %v1420 = vpop.f32.mrb[0].mxu0
      %v1421 = vadd.f32 0.0, %v1420
      %v1422 = vpop.f32.mrb[0].mxu0
      %1423 = vmatprep.mubr.f32.mxu0 0.0
      %1424 = vmatmul.mubr.f32.gmra.mrb[0].mxu0 %v1058
      %v1425 = vpop.f32.mrb[0].mxu0
      %v1426 = vadd.f32 0.0, %v1425
      %v1427 = vpop.f32.mrb[0].mxu0
      %1428 = vmatprep.mubr.f32.mxu0 0.0
      %1429 = vmatmul.mubr.f32.gmra.mrb[0].mxu0 %v1061
      %v1430 = vpop.f32.mrb[0].mxu0
      %v1431 = vadd.f32 0.0, %v1430
      %v1432 = vpop.f32.mrb[0].mxu0
      %1433 = vmatprep.mubr.f32.mxu0 0.0
      %1434 = vmatmul.mubr.f32.gmra.mrb[0].mxu0 %v1064
      %v1435 = vpop.f32.mrb[0].mxu0
      %v1436 = vadd.f32 0.0, %v1435
      %v1437 = vpop.f32.mrb[0].mxu0
      %1438 = vmatprep.mubr.f32.mxu0 0.0
      %1439 = vmatmul.mubr.f32.gmra.mrb[0].mxu0 %v1067
      %v1440 = vpop.f32.mrb[0].mxu0
      %v1441 = vadd.f32 0.0, %v1440
      %v1442 = vpop.f32.mrb[0].mxu0
      %1443 = vmatprep.mubr.f32.mxu0 0.0
      %1444 = vmatmul.mubr.f32.gmra.mrb[0].mxu0 %v1070
      %v1445 = vpop.f32.mrb[0].mxu0
      %v1446 = vadd.f32 0.0, %v1445
      %v1447 = vpop.f32.mrb[0].mxu0
      %1448 = vmatprep.mubr.f32.mxu0 0.0
      %1449 = vmatmul.mubr.f32.gmra.mrb[0].mxu0 %v1073
      %v1450 = vpop.f32.mrb[0].mxu0
      %v1451 = vadd.f32 0.0, %v1450
      %v1452 = vpop.f32.mrb[0].mxu0
      %1453 = vmatprep.mubr.f32.mxu0 0.0
      %1454 = vmatmul.mubr.f32.gmra.mrb[0].mxu0 %v1076
      %v1455 = vpop.f32.mrb[0].mxu0
      %v1456 = vadd.f32 0.0, %v1455
      %v1457 = vpop.f32.mrb[0].mxu0
      %1458 = vmatprep.mubr.f32.mxu0 0.0
      %1459 = vmatmul.mubr.f32.gmra.mrb[0].mxu0 %v1079
      %v1460 = vpop.f32.mrb[0].mxu0
      %v1461 = vadd.f32 0.0, %v1460
      %v1462 = vpop.f32.mrb[0].mxu0
      %1463 = vmatprep.mubr.f32.mxu0 0.0
      %1464 = vmatmul.mubr.f32.gmra.mrb[0].mxu0 %v1082
      %v1465 = vpop.f32.mrb[0].mxu0
      %v1466 = vadd.f32 0.0, %v1465
      %v1467 = vpop.f32.mrb[0].mxu0
      %1468 = vmatprep.mubr.f32.mxu0 0.0
      %1469 = vmatmul.mubr.f32.gmra.mrb[0].mxu0 %v1085
      %v1470 = vpop.f32.mrb[0].mxu0
      %v1471 = vadd.f32 0.0, %v1470
      %v1472 = vpop.f32.mrb[0].mxu0
      %1473 = vmatprep.mubr.f32.mxu0 0.0
      %1474 = vmatmul.mubr.f32.gmra.mrb[0].mxu0 %v1088
      %v1475 = vpop.f32.mrb[0].mxu0
      %v1476 = vadd.f32 0.0, %v1475
      %v1477 = vpop.f32.mrb[0].mxu0
      %1478 = vdwg.mxu0
      %vm1479 = vcmask 64512
      %1480 = vst.msk [vmem:[%s233] sm:$0xff] %vm1479, %v1161
      %1481 = vst.msk [vmem:[%s233 + $0x8] sm:$0xff] %vm1479, %v1166
      %1482 = vst.msk [vmem:[%s233 + $0x10] sm:$0xff] %vm1479, %v1171
      %1483 = vst.msk [vmem:[%s233 + $0x18] sm:$0xff] %vm1479, %v1176
      %1484 = vst.msk [vmem:[%s233 + $0x20] sm:$0xff] %vm1479, %v1181
      %1485 = vst.msk [vmem:[%s233 + $0x28] sm:$0xff] %vm1479, %v1186
      %1486 = vst.msk [vmem:[%s233 + $0x30] sm:$0xff] %vm1479, %v1191
      %1487 = vst.msk [vmem:[%s233 + $0x38] sm:$0xff] %vm1479, %v1196
      %1488 = vst.msk [vmem:[%s233 + $0x40] sm:$0xff] %vm1479, %v1201
      %1489 = vst.msk [vmem:[%s233 + $0x48] sm:$0xff] %vm1479, %v1206
      %1490 = vst.msk [vmem:[%s233 + $0x50] sm:$0xff] %vm1479, %v1211
      %1491 = vst.msk [vmem:[%s233 + $0x58] sm:$0xff] %vm1479, %v1216
      %1492 = vst.msk [vmem:[%s233 + $0x60] sm:$0xff] %vm1479, %v1221
      %1493 = vst.msk [vmem:[%s233 + $0x68] sm:$0xff] %vm1479, %v1226
      %1494 = vst.msk [vmem:[%s233 + $0x70] sm:$0xff] %vm1479, %v1231
      %1495 = vst.msk [vmem:[%s233 + $0x78] sm:$0xff] %vm1479, %v1236
      %1496 = vst.msk [vmem:[%s233 + $0x80] sm:$0xff] %vm1479, %v1241
      %1497 = vst.msk [vmem:[%s233 + $0x88] sm:$0xff] %vm1479, %v1246
      %1498 = vst.msk [vmem:[%s233 + $0x90] sm:$0xff] %vm1479, %v1251
      %1499 = vst.msk [vmem:[%s233 + $0x98] sm:$0xff] %vm1479, %v1256
      %1500 = vst.msk [vmem:[%s233 + $0xa0] sm:$0xff] %vm1479, %v1261
      %1501 = vst.msk [vmem:[%s233 + $0xa8] sm:$0xff] %vm1479, %v1266
      %1502 = vst.msk [vmem:[%s233 + $0xb0] sm:$0xff] %vm1479, %v1271
      %1503 = vst.msk [vmem:[%s233 + $0xb8] sm:$0xff] %vm1479, %v1276
      %1504 = vst.msk [vmem:[%s233 + $0xc0] sm:$0xff] %vm1479, %v1281
      %1505 = vst.msk [vmem:[%s233 + $0xc8] sm:$0xff] %vm1479, %v1286
      %1506 = vst.msk [vmem:[%s233 + $0xd0] sm:$0xff] %vm1479, %v1291
      %1507 = vst.msk [vmem:[%s233 + $0xd8] sm:$0xff] %vm1479, %v1296
      %1508 = vst.msk [vmem:[%s233 + $0xe0] sm:$0xff] %vm1479, %v1301
      %1509 = vst.msk [vmem:[%s233 + $0xe8] sm:$0xff] %vm1479, %v1306
      %1510 = vst.msk [vmem:[%s233 + $0xf0] sm:$0xff] %vm1479, %v1311
      %1511 = vst.msk [vmem:[%s233 + $0xf8] sm:$0xff] %vm1479, %v1316
      %1512 = vst.msk [vmem:[%s233 + $0x100] sm:$0xff] %vm1479, %v1321
      %1513 = vst.msk [vmem:[%s233 + $0x108] sm:$0xff] %vm1479, %v1326
      %1514 = vst.msk [vmem:[%s233 + $0x110] sm:$0xff] %vm1479, %v1331
      %1515 = vst.msk [vmem:[%s233 + $0x118] sm:$0xff] %vm1479, %v1336
      %1516 = vst.msk [vmem:[%s233 + $0x120] sm:$0xff] %vm1479, %v1341
      %1517 = vst.msk [vmem:[%s233 + $0x128] sm:$0xff] %vm1479, %v1346
      %1518 = vst.msk [vmem:[%s233 + $0x130] sm:$0xff] %vm1479, %v1351
      %1519 = vst.msk [vmem:[%s233 + $0x138] sm:$0xff] %vm1479, %v1356
      %1520 = vst.msk [vmem:[%s233 + $0x140] sm:$0xff] %vm1479, %v1361
      %1521 = vst.msk [vmem:[%s233 + $0x148] sm:$0xff] %vm1479, %v1366
      %1522 = vst.msk [vmem:[%s233 + $0x150] sm:$0xff] %vm1479, %v1371
      %1523 = vst.msk [vmem:[%s233 + $0x158] sm:$0xff] %vm1479, %v1376
      %1524 = vst.msk [vmem:[%s233 + $0x160] sm:$0xff] %vm1479, %v1381
      %1525 = vst.msk [vmem:[%s233 + $0x168] sm:$0xff] %vm1479, %v1386
      %1526 = vst.msk [vmem:[%s233 + $0x170] sm:$0xff] %vm1479, %v1391
      %1527 = vst.msk [vmem:[%s233 + $0x178] sm:$0xff] %vm1479, %v1396
      %1528 = vst.msk [vmem:[%s233 + $0x180] sm:$0xff] %vm1479, %v1401
      %1529 = vst.msk [vmem:[%s233 + $0x188] sm:$0xff] %vm1479, %v1406
      %1530 = vst.msk [vmem:[%s233 + $0x190] sm:$0xff] %vm1479, %v1411
      %1531 = vst.msk [vmem:[%s233 + $0x198] sm:$0xff] %vm1479, %v1416
      %1532 = vst.msk [vmem:[%s233 + $0x1a0] sm:$0xff] %vm1479, %v1421
      %1533 = vst.msk [vmem:[%s233 + $0x1a8] sm:$0xff] %vm1479, %v1426
      %1534 = vst.msk [vmem:[%s233 + $0x1b0] sm:$0xff] %vm1479, %v1431
      %1535 = vst.msk [vmem:[%s233 + $0x1b8] sm:$0xff] %vm1479, %v1436
      %1536 = vst.msk [vmem:[%s233 + $0x1c0] sm:$0xff] %vm1479, %v1441
      %1537 = vst.msk [vmem:[%s233 + $0x1c8] sm:$0xff] %vm1479, %v1446
      %1538 = vst.msk [vmem:[%s233 + $0x1d0] sm:$0xff] %vm1479, %v1451
      %1539 = vst.msk [vmem:[%s233 + $0x1d8] sm:$0xff] %vm1479, %v1456
      %1540 = vst.msk [vmem:[%s233 + $0x1e0] sm:$0xff] %vm1479, %v1461
      %1541 = vst.msk [vmem:[%s233 + $0x1e8] sm:$0xff] %vm1479, %v1466
      %1542 = vst.msk [vmem:[%s233 + $0x1f0] sm:$0xff] %vm1479, %v1471
      %1543 = vst.msk [vmem:[%s233 + $0x1f8] sm:$0xff] %vm1479, %v1476
      %v1544 = vsel %vm1479, %v1161, 0.0
      %v1545 = vsel %vm1479, %v1166, 0.0
      %v1546 = vadd.f32 %v1544, %v1545
      %v1547 = vsel %vm1479, %v1171, 0.0
      %v1548 = vadd.f32 %v1546, %v1547
      %v1549 = vsel %vm1479, %v1176, 0.0
      %v1550 = vadd.f32 %v1548, %v1549
      %v1551 = vsel %vm1479, %v1181, 0.0
      %v1552 = vadd.f32 %v1550, %v1551
      %v1553 = vsel %vm1479, %v1186, 0.0
      %v1554 = vadd.f32 %v1552, %v1553
      %v1555 = vsel %vm1479, %v1191, 0.0
      %v1556 = vadd.f32 %v1554, %v1555
      %v1557 = vsel %vm1479, %v1196, 0.0
      %v1558 = vadd.f32 %v1556, %v1557
      %v1559 = vsel %vm1479, %v1201, 0.0
      %v1560 = vadd.f32 %v1558, %v1559
      %v1561 = vsel %vm1479, %v1206, 0.0
      %v1562 = vadd.f32 %v1560, %v1561
      %v1563 = vsel %vm1479, %v1211, 0.0
      %v1564 = vadd.f32 %v1562, %v1563
      %v1565 = vsel %vm1479, %v1216, 0.0
      %v1566 = vadd.f32 %v1564, %v1565
      %v1567 = vsel %vm1479, %v1221, 0.0
      %v1568 = vadd.f32 %v1566, %v1567
      %v1569 = vsel %vm1479, %v1226, 0.0
      %v1570 = vadd.f32 %v1568, %v1569
      %v1571 = vsel %vm1479, %v1231, 0.0
      %v1572 = vadd.f32 %v1570, %v1571
      %v1573 = vsel %vm1479, %v1236, 0.0
      %v1574 = vadd.f32 %v1572, %v1573
      %v1575 = vsel %vm1479, %v1241, 0.0
      %v1576 = vadd.f32 %v1574, %v1575
      %v1577 = vsel %vm1479, %v1246, 0.0
      %v1578 = vadd.f32 %v1576, %v1577
      %v1579 = vsel %vm1479, %v1251, 0.0
      %v1580 = vadd.f32 %v1578, %v1579
      %v1581 = vsel %vm1479, %v1256, 0.0
      %v1582 = vadd.f32 %v1580, %v1581
      %v1583 = vsel %vm1479, %v1261, 0.0
      %v1584 = vadd.f32 %v1582, %v1583
      %v1585 = vsel %vm1479, %v1266, 0.0
      %v1586 = vadd.f32 %v1584, %v1585
      %v1587 = vsel %vm1479, %v1271, 0.0
      %v1588 = vadd.f32 %v1586, %v1587
      %v1589 = vsel %vm1479, %v1276, 0.0
      %v1590 = vadd.f32 %v1588, %v1589
      %v1591 = vsel %vm1479, %v1281, 0.0
      %v1592 = vadd.f32 %v1590, %v1591
      %v1593 = vsel %vm1479, %v1286, 0.0
      %v1594 = vadd.f32 %v1592, %v1593
      %v1595 = vsel %vm1479, %v1291, 0.0
      %v1596 = vadd.f32 %v1594, %v1595
      %v1597 = vsel %vm1479, %v1296, 0.0
      %v1598 = vadd.f32 %v1596, %v1597
      %v1599 = vsel %vm1479, %v1301, 0.0
      %v1600 = vadd.f32 %v1598, %v1599
      %v1601 = vsel %vm1479, %v1306, 0.0
      %v1602 = vadd.f32 %v1600, %v1601
      %v1603 = vsel %vm1479, %v1311, 0.0
      %v1604 = vadd.f32 %v1602, %v1603
      %v1605 = vsel %vm1479, %v1316, 0.0
      %v1606 = vadd.f32 %v1604, %v1605
      %v1607 = vsel %vm1479, %v1321, 0.0
      %v1608 = vadd.f32 %v1606, %v1607
      %v1609 = vsel %vm1479, %v1326, 0.0
      %v1610 = vadd.f32 %v1608, %v1609
      %v1611 = vsel %vm1479, %v1331, 0.0
      %v1612 = vadd.f32 %v1610, %v1611
      %v1613 = vsel %vm1479, %v1336, 0.0
      %v1614 = vadd.f32 %v1612, %v1613
      %v1615 = vsel %vm1479, %v1341, 0.0
      %v1616 = vadd.f32 %v1614, %v1615
      %v1617 = vsel %vm1479, %v1346, 0.0
      %v1618 = vadd.f32 %v1616, %v1617
      %v1619 = vsel %vm1479, %v1351, 0.0
      %v1620 = vadd.f32 %v1618, %v1619
      %v1621 = vsel %vm1479, %v1356, 0.0
      %v1622 = vadd.f32 %v1620, %v1621
      %v1623 = vsel %vm1479, %v1361, 0.0
      %v1624 = vadd.f32 %v1622, %v1623
      %v1625 = vsel %vm1479, %v1366, 0.0
      %v1626 = vadd.f32 %v1624, %v1625
      %v1627 = vsel %vm1479, %v1371, 0.0
      %v1628 = vadd.f32 %v1626, %v1627
      %v1629 = vsel %vm1479, %v1376, 0.0
      %v1630 = vadd.f32 %v1628, %v1629
      %v1631 = vsel %vm1479, %v1381, 0.0
      %v1632 = vadd.f32 %v1630, %v1631
      %v1633 = vsel %vm1479, %v1386, 0.0
      %v1634 = vadd.f32 %v1632, %v1633
      %v1635 = vsel %vm1479, %v1391, 0.0
      %v1636 = vadd.f32 %v1634, %v1635
      %v1637 = vsel %vm1479, %v1396, 0.0
      %v1638 = vadd.f32 %v1636, %v1637
      %v1639 = vsel %vm1479, %v1401, 0.0
      %v1640 = vadd.f32 %v1638, %v1639
      %v1641 = vsel %vm1479, %v1406, 0.0
      %v1642 = vadd.f32 %v1640, %v1641
      %v1643 = vsel %vm1479, %v1411, 0.0
      %v1644 = vadd.f32 %v1642, %v1643
      %v1645 = vsel %vm1479, %v1416, 0.0
      %v1646 = vadd.f32 %v1644, %v1645
      %v1647 = vsel %vm1479, %v1421, 0.0
      %v1648 = vadd.f32 %v1646, %v1647
      %v1649 = vsel %vm1479, %v1426, 0.0
      %v1650 = vadd.f32 %v1648, %v1649
      %v1651 = vsel %vm1479, %v1431, 0.0
      %v1652 = vadd.f32 %v1650, %v1651
      %v1653 = vsel %vm1479, %v1436, 0.0
      %v1654 = vadd.f32 %v1652, %v1653
      %v1655 = vsel %vm1479, %v1441, 0.0
      %v1656 = vadd.f32 %v1654, %v1655
      %v1657 = vsel %vm1479, %v1446, 0.0
      %v1658 = vadd.f32 %v1656, %v1657
      %v1659 = vsel %vm1479, %v1451, 0.0
      %v1660 = vadd.f32 %v1658, %v1659
      %v1661 = vsel %vm1479, %v1456, 0.0
      %v1662 = vadd.f32 %v1660, %v1661
      %v1663 = vsel %vm1479, %v1461, 0.0
      %v1664 = vadd.f32 %v1662, %v1663
      %v1665 = vsel %vm1479, %v1466, 0.0
      %v1666 = vadd.f32 %v1664, %v1665
      %v1667 = vsel %vm1479, %v1471, 0.0
      %v1668 = vadd.f32 %v1666, %v1667
      %v1669 = vsel %vm1479, %v1476, 0.0
      %v1670 = vadd.f32 %v1668, %v1669
      %v1671 = vrot.slane %v1670, 4
      %v1672 = vadd.f32 %v1670, %v1671
      %v1673 = vrot.slane %v1672, 2
      %v1674 = vadd.f32 %v1672, %v1673
      %v1675 = vrot.slane %v1674, 1
      %v1676 = vadd.f32 %v1674, %v1675
      %v1677 = vmul.f32 %v1161, %v1161
      %v1678 = vmul.f32 %v1166, %v1166
      %v1679 = vmul.f32 %v1171, %v1171
      %v1680 = vmul.f32 %v1176, %v1176
      %v1681 = vmul.f32 %v1181, %v1181
      %v1682 = vmul.f32 %v1186, %v1186
      %v1683 = vmul.f32 %v1191, %v1191
      %v1684 = vmul.f32 %v1196, %v1196
      %v1685 = vmul.f32 %v1201, %v1201
      %v1686 = vmul.f32 %v1206, %v1206
      %v1687 = vmul.f32 %v1211, %v1211
      %v1688 = vmul.f32 %v1216, %v1216
      %v1689 = vmul.f32 %v1221, %v1221
      %v1690 = vmul.f32 %v1226, %v1226
      %v1691 = vmul.f32 %v1231, %v1231
      %v1692 = vmul.f32 %v1236, %v1236
      %v1693 = vmul.f32 %v1241, %v1241
      %v1694 = vmul.f32 %v1246, %v1246
      %v1695 = vmul.f32 %v1251, %v1251
      %v1696 = vmul.f32 %v1256, %v1256
      %v1697 = vmul.f32 %v1261, %v1261
      %v1698 = vmul.f32 %v1266, %v1266
      %v1699 = vmul.f32 %v1271, %v1271
      %v1700 = vmul.f32 %v1276, %v1276
      %v1701 = vmul.f32 %v1281, %v1281
      %v1702 = vmul.f32 %v1286, %v1286
      %v1703 = vmul.f32 %v1291, %v1291
      %v1704 = vmul.f32 %v1296, %v1296
      %v1705 = vmul.f32 %v1301, %v1301
      %v1706 = vmul.f32 %v1306, %v1306
      %v1707 = vmul.f32 %v1311, %v1311
      %v1708 = vmul.f32 %v1316, %v1316
      %v1709 = vmul.f32 %v1321, %v1321
      %v1710 = vmul.f32 %v1326, %v1326
      %v1711 = vmul.f32 %v1331, %v1331
      %v1712 = vmul.f32 %v1336, %v1336
      %v1713 = vmul.f32 %v1341, %v1341
      %v1714 = vmul.f32 %v1346, %v1346
      %v1715 = vmul.f32 %v1351, %v1351
      %v1716 = vmul.f32 %v1356, %v1356
      %v1717 = vmul.f32 %v1361, %v1361
      %v1718 = vmul.f32 %v1366, %v1366
      %v1719 = vmul.f32 %v1371, %v1371
      %v1720 = vmul.f32 %v1376, %v1376
      %v1721 = vmul.f32 %v1381, %v1381
      %v1722 = vmul.f32 %v1386, %v1386
      %v1723 = vmul.f32 %v1391, %v1391
      %v1724 = vmul.f32 %v1396, %v1396
      %v1725 = vmul.f32 %v1401, %v1401
      %v1726 = vmul.f32 %v1406, %v1406
      %v1727 = vmul.f32 %v1411, %v1411
      %v1728 = vmul.f32 %v1416, %v1416
      %v1729 = vmul.f32 %v1421, %v1421
      %v1730 = vmul.f32 %v1426, %v1426
      %v1731 = vmul.f32 %v1431, %v1431
      %v1732 = vmul.f32 %v1436, %v1436
      %v1733 = vmul.f32 %v1441, %v1441
      %v1734 = vmul.f32 %v1446, %v1446
      %v1735 = vmul.f32 %v1451, %v1451
      %v1736 = vmul.f32 %v1456, %v1456
      %v1737 = vmul.f32 %v1461, %v1461
      %v1738 = vmul.f32 %v1466, %v1466
      %v1739 = vmul.f32 %v1471, %v1471
      %v1740 = vmul.f32 %v1476, %v1476
      %v1741 = vsel %vm1479, %v1677, 0.0
      %v1742 = vsel %vm1479, %v1678, 0.0
      %v1743 = vadd.f32 %v1741, %v1742
      %v1744 = vsel %vm1479, %v1679, 0.0
      %v1745 = vadd.f32 %v1743, %v1744
      %v1746 = vsel %vm1479, %v1680, 0.0
      %v1747 = vadd.f32 %v1745, %v1746
      %v1748 = vsel %vm1479, %v1681, 0.0
      %v1749 = vadd.f32 %v1747, %v1748
      %v1750 = vsel %vm1479, %v1682, 0.0
      %v1751 = vadd.f32 %v1749, %v1750
      %v1752 = vsel %vm1479, %v1683, 0.0
      %v1753 = vadd.f32 %v1751, %v1752
      %v1754 = vsel %vm1479, %v1684, 0.0
      %v1755 = vadd.f32 %v1753, %v1754
      %v1756 = vsel %vm1479, %v1685, 0.0
      %v1757 = vadd.f32 %v1755, %v1756
      %v1758 = vsel %vm1479, %v1686, 0.0
      %v1759 = vadd.f32 %v1757, %v1758
      %v1760 = vsel %vm1479, %v1687, 0.0
      %v1761 = vadd.f32 %v1759, %v1760
      %v1762 = vsel %vm1479, %v1688, 0.0
      %v1763 = vadd.f32 %v1761, %v1762
      %v1764 = vsel %vm1479, %v1689, 0.0
      %v1765 = vadd.f32 %v1763, %v1764
      %v1766 = vsel %vm1479, %v1690, 0.0
      %v1767 = vadd.f32 %v1765, %v1766
      %v1768 = vsel %vm1479, %v1691, 0.0
      %v1769 = vadd.f32 %v1767, %v1768
      %v1770 = vsel %vm1479, %v1692, 0.0
      %v1771 = vadd.f32 %v1769, %v1770
      %v1772 = vsel %vm1479, %v1693, 0.0
      %v1773 = vadd.f32 %v1771, %v1772
      %v1774 = vsel %vm1479, %v1694, 0.0
      %v1775 = vadd.f32 %v1773, %v1774
      %v1776 = vsel %vm1479, %v1695, 0.0
      %v1777 = vadd.f32 %v1775, %v1776
      %v1778 = vsel %vm1479, %v1696, 0.0
      %v1779 = vadd.f32 %v1777, %v1778
      %v1780 = vsel %vm1479, %v1697, 0.0
      %v1781 = vadd.f32 %v1779, %v1780
      %v1782 = vsel %vm1479, %v1698, 0.0
      %v1783 = vadd.f32 %v1781, %v1782
      %v1784 = vsel %vm1479, %v1699, 0.0
      %v1785 = vadd.f32 %v1783, %v1784
      %v1786 = vsel %vm1479, %v1700, 0.0
      %v1787 = vadd.f32 %v1785, %v1786
      %v1788 = vsel %vm1479, %v1701, 0.0
      %v1789 = vadd.f32 %v1787, %v1788
      %v1790 = vsel %vm1479, %v1702, 0.0
      %v1791 = vadd.f32 %v1789, %v1790
      %v1792 = vsel %vm1479, %v1703, 0.0
      %v1793 = vadd.f32 %v1791, %v1792
      %v1794 = vsel %vm1479, %v1704, 0.0
      %v1795 = vadd.f32 %v1793, %v1794
      %v1796 = vsel %vm1479, %v1705, 0.0
      %v1797 = vadd.f32 %v1795, %v1796
      %v1798 = vsel %vm1479, %v1706, 0.0
      %v1799 = vadd.f32 %v1797, %v1798
      %v1800 = vsel %vm1479, %v1707, 0.0
      %v1801 = vadd.f32 %v1799, %v1800
      %v1802 = vsel %vm1479, %v1708, 0.0
      %v1803 = vadd.f32 %v1801, %v1802
      %v1804 = vsel %vm1479, %v1709, 0.0
      %v1805 = vadd.f32 %v1803, %v1804
      %v1806 = vsel %vm1479, %v1710, 0.0
      %v1807 = vadd.f32 %v1805, %v1806
      %v1808 = vsel %vm1479, %v1711, 0.0
      %v1809 = vadd.f32 %v1807, %v1808
      %v1810 = vsel %vm1479, %v1712, 0.0
      %v1811 = vadd.f32 %v1809, %v1810
      %v1812 = vsel %vm1479, %v1713, 0.0
      %v1813 = vadd.f32 %v1811, %v1812
      %v1814 = vsel %vm1479, %v1714, 0.0
      %v1815 = vadd.f32 %v1813, %v1814
      %v1816 = vsel %vm1479, %v1715, 0.0
      %v1817 = vadd.f32 %v1815, %v1816
      %v1818 = vsel %vm1479, %v1716, 0.0
      %v1819 = vadd.f32 %v1817, %v1818
      %v1820 = vsel %vm1479, %v1717, 0.0
      %v1821 = vadd.f32 %v1819, %v1820
      %v1822 = vsel %vm1479, %v1718, 0.0
      %v1823 = vadd.f32 %v1821, %v1822
      %v1824 = vsel %vm1479, %v1719, 0.0
      %v1825 = vadd.f32 %v1823, %v1824
      %v1826 = vsel %vm1479, %v1720, 0.0
      %v1827 = vadd.f32 %v1825, %v1826
      %v1828 = vsel %vm1479, %v1721, 0.0
      %v1829 = vadd.f32 %v1827, %v1828
      %v1830 = vsel %vm1479, %v1722, 0.0
      %v1831 = vadd.f32 %v1829, %v1830
      %v1832 = vsel %vm1479, %v1723, 0.0
      %v1833 = vadd.f32 %v1831, %v1832
      %v1834 = vsel %vm1479, %v1724, 0.0
      %v1835 = vadd.f32 %v1833, %v1834
      %v1836 = vsel %vm1479, %v1725, 0.0
      %v1837 = vadd.f32 %v1835, %v1836
      %v1838 = vsel %vm1479, %v1726, 0.0
      %v1839 = vadd.f32 %v1837, %v1838
      %v1840 = vsel %vm1479, %v1727, 0.0
      %v1841 = vadd.f32 %v1839, %v1840
      %v1842 = vsel %vm1479, %v1728, 0.0
      %v1843 = vadd.f32 %v1841, %v1842
      %v1844 = vsel %vm1479, %v1729, 0.0
      %v1845 = vadd.f32 %v1843, %v1844
      %v1846 = vsel %vm1479, %v1730, 0.0
      %v1847 = vadd.f32 %v1845, %v1846
      %v1848 = vsel %vm1479, %v1731, 0.0
      %v1849 = vadd.f32 %v1847, %v1848
      %v1850 = vsel %vm1479, %v1732, 0.0
      %v1851 = vadd.f32 %v1849, %v1850
      %v1852 = vsel %vm1479, %v1733, 0.0
      %v1853 = vadd.f32 %v1851, %v1852
      %v1854 = vsel %vm1479, %v1734, 0.0
      %v1855 = vadd.f32 %v1853, %v1854
      %v1856 = vsel %vm1479, %v1735, 0.0
      %v1857 = vadd.f32 %v1855, %v1856
      %v1858 = vsel %vm1479, %v1736, 0.0
      %v1859 = vadd.f32 %v1857, %v1858
      %v1860 = vsel %vm1479, %v1737, 0.0
      %v1861 = vadd.f32 %v1859, %v1860
      %v1862 = vsel %vm1479, %v1738, 0.0
      %v1863 = vadd.f32 %v1861, %v1862
      %v1864 = vsel %vm1479, %v1739, 0.0
      %v1865 = vadd.f32 %v1863, %v1864
      %v1866 = vsel %vm1479, %v1740, 0.0
      %v1867 = vadd.f32 %v1865, %v1866
      %v1868 = vrot.slane %v1867, 4
      %v1869 = vadd.f32 %v1867, %v1868
      %v1870 = vrot.slane %v1869, 2
      %v1871 = vadd.f32 %v1869, %v1870
      %v1872 = vrot.slane %v1871, 1
      %v1873 = vadd.f32 %v1871, %v1872
      %vm1874 = vcmask 1040384
      %v1875 = vsel %vm1874, %v1676, %v1873
      %vm1876 = vcmask 58368
      %1877 = vst.msk [vmem:[%s238] sm:$0x3] %vm1876, %v1875
      %s1878 = smul.u32 64, %s17
      %p1879 = scmp.lt.s32.totalorder %s1878, 255
      %s1880 = scalar_select %p1879, %s1878, 255
      %s1881 = smul.addr %s1880, 8
      %s1882 = scalar_lea.vmem %s4, %s1881
      %p1883 = scmp.lt.s32.totalorder %s17, 3
      %s1884 = scalar_select %p1883, %s17, 3
      %s1885 = smul.addr %s1884, 2
      %s1886 = scalar_lea.vmem %s5, %s1885
      // Predicated region
      $region37: #{deconv_block.6} parent=35 // pred_check
        %p1887 = pneg %p124
      $region38: #{deconv_block.6} parent=35 // pred_check_branch
        %1889 = sbr.rel (%p1887) target = $region40
      $region39: #{deconv_block.6} parent=35 // pred_region
        %s1890 = smul.u32 64, %s17
      $region40: #{deconv_block.6} parent=35 // pred_fallthru
        _
      // Predicated region
      $region41: #{deconv_block.6} parent=35 // pred_check
        %p1891 = pneg %p150
      $region42: #{deconv_block.6} parent=35 // pred_check_branch
        %1893 = sbr.rel (%p1891) target = $region44
      $region43: #{deconv_block.6} parent=35 // pred_region
        _
      $region44: #{deconv_block.6} parent=35 // pred_fallthru
        _
    $region36: #{deconv_block.6} parent=5 // pred_fallthru
      _
    %p1894 = scmp.le.s32.totalorder 2, %s12
    // Predicated region
    $region45: #{deconv_block.6} parent=5 // pred_check
      %p1895 = pneg %p1894
    $region46: #{deconv_block.6} parent=5 // pred_check_branch
      %1897 = sbr.rel (%p1895) target = $region48
    $region47: #{deconv_block.6} parent=5 // pred_region
      %s1898 = ssub.s32 %s12, 2
      // Predicated region
      $region49: #{deconv_block.6} parent=47 // pred_check
        %p1899 = pneg %p130
      $region50: #{deconv_block.6} parent=47 // pred_check_branch
        %1901 = sbr.rel (%p1899) target = $region52
      $region51: #{deconv_block.6} parent=47 // pred_region
        %s1902 = smul.u32 64, %s18
        %p1903 = scmp.lt.s32.totalorder %s1902, 255
        %s1904 = scalar_select %p1903, %s1902, 255
        %s1905 = smul.addr %s1904, 8
        %s1906 = scalar_lea.vmem %s4, %s1905
      $region52: #{deconv_block.6} parent=47 // pred_fallthru
        _
      // Predicated region
      $region53: #{deconv_block.6} parent=47 // pred_check
        %p1907 = pneg %p156
      $region54: #{deconv_block.6} parent=47 // pred_check_branch
        %1909 = sbr.rel (%p1907) target = $region56
      $region55: #{deconv_block.6} parent=47 // pred_region
        %p1910 = scmp.lt.s32.totalorder %s18, 3
        %s1911 = scalar_select %p1910, %s18, 3
        %s1912 = smul.addr %s1911, 2
        %s1913 = scalar_lea.vmem %s5, %s1912
      $region56: #{deconv_block.6} parent=47 // pred_fallthru
        _
    $region48: #{deconv_block.6} parent=5 // pred_fallthru
      _
  $region6: #{deconv_block.6} parent=0 // loop_footer
    %s16 = sadd.s32 1, %s12
  $region7: #{deconv_block.6} parent=0 // loop_footer_branch
    %11 = sbr.rel target = $region3
  $region8: #{deconv_block.6} parent=0 // loop_exit
    _

// kernel: deconv_block.7
$region0: #{deconv_block.7}
  #allocation0 [shape = 'u32[]', space=smem, size = 0x4, offset = 0x4, fixed_abs, tag = 'smem constant byte address 0x4 - core index']
  #allocation1 [shape = 'u32[144,128]{1,0:T(1,128)}', space=vmem, size = 0x12000, scoped, tag = 'internal scratch']
  %s0 = inlined_call_operand.vmem [shape: f32[2048,8], index: 0, kind: input, shape index: {}]
  %s1 = inlined_call_operand.vmem [shape: f32[1,8], index: 1, kind: input, shape index: {}]
  %s2 = inlined_call_operand.vmem [shape: f32[1,8], index: 2, kind: input, shape index: {}]
  %s3 = inlined_call_operand.vmem [shape: f32[2048,8], index: 3, kind: output, shape index: {}]
  %s4 = sld [smem:[#allocation0]]
  $region45: #{deconv_block.7} parent=0
    _
  %s6 = ssub.s32 1, %s4
  %s7 = scalar_select 0, %s6, %s4
  loop: start=0, step=1, limit=6
  $region2: #{deconv_block.7} parent=0 // loop_pre_header
    _
  $region3: #{deconv_block.7} parent=0 // loop_header
    %s9 = sphi 0, %s13
    %p10 = scmp.ge.s32.totalorder %s9, 6
    %s19 = sphi 0, %s21
    %s22 = sphi 0, %s19
    %s23 = sphi 0, %s22
    %s39 = sphi 0, %s23
    %s43 = sphi 0, %s43
    %s45 = sphi 0, %s43
    %s46 = sphi 0, %s45
    %s60 = sphi 0, %s46
    %s64 = sphi 0, %s64
    %s66 = sphi 0, %s64
    %s67 = sphi 0, %s66
    %s81 = sphi 0, %s67
    %s87 = sphi 0, %s89
    %s90 = sphi 0, %s87
    %s91 = sphi 0, %s90
    %s107 = sphi 0, %s91
  $region4: #{deconv_block.7} parent=0 // loop_header_branch
    %12 = sbr.rel (%p10) target = $region8
  $region5: #{deconv_block.7} parent=0 // loop_body
    %s14 = ssub.s32 %s9, 1
    %s15 = ssub.s32 %s9, 2
    %s16 = sadd.s32 %s9, 1
    %s17 = ssub.s32 %s9, %s16
    %p18 = scmp.eq.s32.totalorder %s17, 0
    %s20 = sadd.s32 %s19, 1
    %s21 = scalar_select %p18, %s19, %s20
    %p24 = pneg %p18
    %p25 = scmp.eq.s32.totalorder %s9, 3
    %p26 = por %p24, %p25
    %p27 = scmp.ne.s32.totalorder %s19, %s22
    %p28 = scmp.eq.s32.totalorder %s9, 0
    %p29 = por %p27, %p28
    %p30 = scmp.ne.s32.totalorder %s19, %s22
    %p31 = scmp.eq.s32.totalorder %s14, 3
    %p32 = por %p30, %p31
    %p33 = scmp.ne.s32.totalorder %s22, %s23
    %p34 = scmp.eq.s32.totalorder %s14, 0
    %p35 = por %p33, %p34
    %p36 = scmp.ne.s32.totalorder %s22, %s23
    %p37 = scmp.eq.s32.totalorder %s15, 3
    %p38 = por %p36, %p37
    %p40 = scmp.ne.s32.totalorder %s23, %s39
    %p41 = scmp.eq.s32.totalorder %s15, 0
    %p42 = por %p40, %p41
    %s44 = sadd.s32 %s43, 1
    %p47 = scmp.eq.s32.totalorder %s9, 3
    %p48 = scmp.ne.s32.totalorder %s43, %s45
    %p49 = scmp.eq.s32.totalorder %s9, 0
    %p50 = por %p48, %p49
    %p51 = scmp.ne.s32.totalorder %s43, %s45
    %p52 = scmp.eq.s32.totalorder %s14, 3
    %p53 = por %p51, %p52
    %p54 = scmp.ne.s32.totalorder %s45, %s46
    %p55 = scmp.eq.s32.totalorder %s14, 0
    %p56 = por %p54, %p55
    %p57 = scmp.ne.s32.totalorder %s45, %s46
    %p58 = scmp.eq.s32.totalorder %s15, 3
    %p59 = por %p57, %p58
    %p61 = scmp.ne.s32.totalorder %s46, %s60
    %p62 = scmp.eq.s32.totalorder %s15, 0
    %p63 = por %p61, %p62
    %s65 = sadd.s32 %s64, 1
    %p68 = scmp.eq.s32.totalorder %s9, 3
    %p69 = scmp.ne.s32.totalorder %s64, %s66
    %p70 = scmp.eq.s32.totalorder %s9, 0
    %p71 = por %p69, %p70
    %p72 = scmp.ne.s32.totalorder %s64, %s66
    %p73 = scmp.eq.s32.totalorder %s14, 3
    %p74 = por %p72, %p73
    %p75 = scmp.ne.s32.totalorder %s66, %s67
    %p76 = scmp.eq.s32.totalorder %s14, 0
    %p77 = por %p75, %p76
    %p78 = scmp.ne.s32.totalorder %s66, %s67
    %p79 = scmp.eq.s32.totalorder %s15, 3
    %p80 = por %p78, %p79
    %p82 = scmp.ne.s32.totalorder %s67, %s81
    %p83 = scmp.eq.s32.totalorder %s15, 0
    %p84 = por %p82, %p83
    %s85 = ssub.s32 %s9, %s16
    %p86 = scmp.eq.s32.totalorder %s85, 0
    %s88 = sadd.s32 %s87, 1
    %s89 = scalar_select %p86, %s87, %s88
    %p92 = pneg %p86
    %p93 = scmp.eq.s32.totalorder %s9, 3
    %p94 = por %p92, %p93
    %p95 = scmp.ne.s32.totalorder %s87, %s90
    %p96 = scmp.eq.s32.totalorder %s9, 0
    %p97 = por %p95, %p96
    %p98 = scmp.ne.s32.totalorder %s87, %s90
    %p99 = scmp.eq.s32.totalorder %s14, 3
    %p100 = por %p98, %p99
    %p101 = scmp.ne.s32.totalorder %s90, %s91
    %p102 = scmp.eq.s32.totalorder %s14, 0
    %p103 = por %p101, %p102
    %p104 = scmp.ne.s32.totalorder %s90, %s91
    %p105 = scmp.eq.s32.totalorder %s15, 3
    %p106 = por %p104, %p105
    %p108 = scmp.ne.s32.totalorder %s91, %s107
    %p109 = scmp.eq.s32.totalorder %s15, 0
    %p110 = por %p108, %p109
    %p111 = scmp.le.s32.totalorder 1, %s9
    %p112 = scmp.lt.s32.totalorder %s9, 5
    %p113 = pnand %p111, %p112
    %p114 = pneg %p113
    // Predicated region
    $region9: #{deconv_block.7} parent=5 // pred_check
      _
    $region10: #{deconv_block.7} parent=5 // pred_check_branch
      %116 = sbr.rel (%p113) target = $region12
    $region11: #{deconv_block.7} parent=5 // pred_region
      %s117 = ssub.s32 %s9, 1
      // Predicated region
      $region13: #{deconv_block.7} parent=11 // pred_check
        %p118 = pneg %p56
      $region14: #{deconv_block.7} parent=11 // pred_check_branch
        %120 = sbr.rel (%p118) target = $region16
      $region15: #{deconv_block.7} parent=11 // pred_region
        _
      $region16: #{deconv_block.7} parent=11 // pred_fallthru
        _
      // Predicated region
      $region17: #{deconv_block.7} parent=11 // pred_check
        %p121 = pneg %p77
      $region18: #{deconv_block.7} parent=11 // pred_check_branch
        %123 = sbr.rel (%p121) target = $region20
      $region19: #{deconv_block.7} parent=11 // pred_region
        _
      $region20: #{deconv_block.7} parent=11 // pred_fallthru
        _
    $region12: #{deconv_block.7} parent=5 // pred_fallthru
      _
    %p124 = scmp.lt.s32.totalorder %s9, 4
    // Predicated region
    $region21: #{deconv_block.7} parent=5 // pred_check
      %p125 = pneg %p124
    $region22: #{deconv_block.7} parent=5 // pred_check_branch
      %127 = sbr.rel (%p125) target = $region24
    $region23: #{deconv_block.7} parent=5 // pred_region
      // Predicated region
      $region25: #{deconv_block.7} parent=23 // pred_check
        %p128 = pneg %p29
      $region26: #{deconv_block.7} parent=23 // pred_check_branch
        %130 = sbr.rel (%p128) target = $region28
      $region27: #{deconv_block.7} parent=23 // pred_region
        %s131 = smul.u32 64, %s9
        %p132 = scmp.lt.s32.totalorder %s131, 255
        %s133 = scalar_select %p132, %s131, 255
        %s134 = smul.addr %s133, 8
        %s135 = scalar_lea.vmem %s0, %s134
        %s136 = smul.u32 64, %s9
      $region28: #{deconv_block.7} parent=23 // pred_fallthru
        _
    $region24: #{deconv_block.7} parent=5 // pred_fallthru
      _
    %p137 = scmp.le.s32.totalorder 1, %s9
    %p138 = scmp.lt.s32.totalorder %s9, 5
    %p139 = pnand %p137, %p138
    %p140 = pneg %p139
    // Predicated region
    $region29: #{deconv_block.7} parent=5 // pred_check
      _
    $region30: #{deconv_block.7} parent=5 // pred_check_branch
      %142 = sbr.rel (%p139) target = $region32
    $region31: #{deconv_block.7} parent=5 // pred_region
      %s143 = ssub.s32 %s9, 1
      %s144 = smul.u32 64, %s14
      %p145 = scmp.lt.s32.totalorder %s144, 255
      %s146 = scalar_select %p145, %s144, 255
      %s147 = smul.addr %s146, 8
      %s148 = scalar_lea.vmem %s0, %s147
      %p149 = pneg %p35
      %p150 = pneg %p32
      %p151 = pneg %p56
      %p152 = pneg %p53
      %p153 = pneg %p77
      %p154 = pneg %p74
      %p155 = pneg %p103
      %p156 = pneg %p100
      %s157 = smul.u32 64, %s14
      %p158 = scmp.lt.s32.totalorder %s157, 255
      %s159 = scalar_select %p158, %s157, 255
      %s160 = smul.addr %s159, 8
      %s161 = scalar_lea.vmem %s3, %s160
      %s162 = smul.u32 64, %s14
      %p163 = scmp.lt.s32.totalorder %s162, 255
      %s164 = scalar_select %p163, %s162, 255
      %s165 = smul.addr %s164, 8
      %s166 = scalar_lea.vmem %s0, %s165
      %s167 = smul.u32 64, %s14
      %s168 = smul.u32 64, %s14
      %p169 = scmp.lt.s32.totalorder %s168, 255
      %s170 = scalar_select %p169, %s168, 255
      %s171 = smul.addr %s170, 8
      %s172 = scalar_lea.vmem %s3, %s171
      %s173 = smul.u32 64, %s14
      %v174 = vld [vmem:[%s166] sm:$0xff]
      %v175 = vld [vmem:[%s166 + $0x8] sm:$0xff]
      %v176 = vld [vmem:[%s166 + $0x10] sm:$0xff]
      %v177 = vld [vmem:[%s166 + $0x18] sm:$0xff]
      %v178 = vld [vmem:[%s166 + $0x20] sm:$0xff]
      %v179 = vld [vmem:[%s166 + $0x28] sm:$0xff]
      %v180 = vld [vmem:[%s166 + $0x30] sm:$0xff]
      %v181 = vld [vmem:[%s166 + $0x38] sm:$0xff]
      %v182 = vld [vmem:[%s166 + $0x40] sm:$0xff]
      %v183 = vld [vmem:[%s166 + $0x48] sm:$0xff]
      %v184 = vld [vmem:[%s166 + $0x50] sm:$0xff]
      %v185 = vld [vmem:[%s166 + $0x58] sm:$0xff]
      %v186 = vld [vmem:[%s166 + $0x60] sm:$0xff]
      %v187 = vld [vmem:[%s166 + $0x68] sm:$0xff]
      %v188 = vld [vmem:[%s166 + $0x70] sm:$0xff]
      %v189 = vld [vmem:[%s166 + $0x78] sm:$0xff]
      %v190 = vld [vmem:[%s166 + $0x80] sm:$0xff]
      %v191 = vld [vmem:[%s166 + $0x88] sm:$0xff]
      %v192 = vld [vmem:[%s166 + $0x90] sm:$0xff]
      %v193 = vld [vmem:[%s166 + $0x98] sm:$0xff]
      %v194 = vld [vmem:[%s166 + $0xa0] sm:$0xff]
      %v195 = vld [vmem:[%s166 + $0xa8] sm:$0xff]
      %v196 = vld [vmem:[%s166 + $0xb0] sm:$0xff]
      %v197 = vld [vmem:[%s166 + $0xb8] sm:$0xff]
      %v198 = vld [vmem:[%s166 + $0xc0] sm:$0xff]
      %v199 = vld [vmem:[%s166 + $0xc8] sm:$0xff]
      %v200 = vld [vmem:[%s166 + $0xd0] sm:$0xff]
      %v201 = vld [vmem:[%s166 + $0xd8] sm:$0xff]
      %v202 = vld [vmem:[%s166 + $0xe0] sm:$0xff]
      %v203 = vld [vmem:[%s166 + $0xe8] sm:$0xff]
      %v204 = vld [vmem:[%s166 + $0xf0] sm:$0xff]
      %v205 = vld [vmem:[%s166 + $0xf8] sm:$0xff]
      %v206 = vld [vmem:[%s166 + $0x100] sm:$0xff]
      %v207 = vld [vmem:[%s166 + $0x108] sm:$0xff]
      %v208 = vld [vmem:[%s166 + $0x110] sm:$0xff]
      %v209 = vld [vmem:[%s166 + $0x118] sm:$0xff]
      %v210 = vld [vmem:[%s166 + $0x120] sm:$0xff]
      %v211 = vld [vmem:[%s166 + $0x128] sm:$0xff]
      %v212 = vld [vmem:[%s166 + $0x130] sm:$0xff]
      %v213 = vld [vmem:[%s166 + $0x138] sm:$0xff]
      %v214 = vld [vmem:[%s166 + $0x140] sm:$0xff]
      %v215 = vld [vmem:[%s166 + $0x148] sm:$0xff]
      %v216 = vld [vmem:[%s166 + $0x150] sm:$0xff]
      %v217 = vld [vmem:[%s166 + $0x158] sm:$0xff]
      %v218 = vld [vmem:[%s166 + $0x160] sm:$0xff]
      %v219 = vld [vmem:[%s166 + $0x168] sm:$0xff]
      %v220 = vld [vmem:[%s166 + $0x170] sm:$0xff]
      %v221 = vld [vmem:[%s166 + $0x178] sm:$0xff]
      %v222 = vld [vmem:[%s166 + $0x180] sm:$0xff]
      %v223 = vld [vmem:[%s166 + $0x188] sm:$0xff]
      %v224 = vld [vmem:[%s166 + $0x190] sm:$0xff]
      %v225 = vld [vmem:[%s166 + $0x198] sm:$0xff]
      %v226 = vld [vmem:[%s166 + $0x1a0] sm:$0xff]
      %v227 = vld [vmem:[%s166 + $0x1a8] sm:$0xff]
      %v228 = vld [vmem:[%s166 + $0x1b0] sm:$0xff]
      %v229 = vld [vmem:[%s166 + $0x1b8] sm:$0xff]
      %v230 = vld [vmem:[%s166 + $0x1c0] sm:$0xff]
      %v231 = vld [vmem:[%s166 + $0x1c8] sm:$0xff]
      %v232 = vld [vmem:[%s166 + $0x1d0] sm:$0xff]
      %v233 = vld [vmem:[%s166 + $0x1d8] sm:$0xff]
      %v234 = vld [vmem:[%s166 + $0x1e0] sm:$0xff]
      %v235 = vld [vmem:[%s166 + $0x1e8] sm:$0xff]
      %v236 = vld [vmem:[%s166 + $0x1f0] sm:$0xff]
      %v237 = vld [vmem:[%s166 + $0x1f8] sm:$0xff]
      %v238 = vld [vmem:[%s1] sm:$0x1]
      %v240 = vlaneseq
      %v241 = vshrl.u32 %v240, 7
      %v242 = vsub.s32 0, %v241
      %v243 = vrot.slane %v238, %v242
      %v245 = vmul.f32 %v174, %v243
      %v246 = vmul.f32 %v175, %v243
      %v247 = vmul.f32 %v176, %v243
      %v248 = vmul.f32 %v177, %v243
      %v249 = vmul.f32 %v178, %v243
      %v250 = vmul.f32 %v179, %v243
      %v251 = vmul.f32 %v180, %v243
      %v252 = vmul.f32 %v181, %v243
      %v253 = vmul.f32 %v182, %v243
      %v254 = vmul.f32 %v183, %v243
      %v255 = vmul.f32 %v184, %v243
      %v256 = vmul.f32 %v185, %v243
      %v257 = vmul.f32 %v186, %v243
      %v258 = vmul.f32 %v187, %v243
      %v259 = vmul.f32 %v188, %v243
      %v260 = vmul.f32 %v189, %v243
      %v261 = vmul.f32 %v190, %v243
      %v262 = vmul.f32 %v191, %v243
      %v263 = vmul.f32 %v192, %v243
      %v264 = vmul.f32 %v193, %v243
      %v265 = vmul.f32 %v194, %v243
      %v266 = vmul.f32 %v195, %v243
      %v267 = vmul.f32 %v196, %v243
      %v268 = vmul.f32 %v197, %v243
      %v269 = vmul.f32 %v198, %v243
      %v270 = vmul.f32 %v199, %v243
      %v271 = vmul.f32 %v200, %v243
      %v272 = vmul.f32 %v201, %v243
      %v273 = vmul.f32 %v202, %v243
      %v274 = vmul.f32 %v203, %v243
      %v275 = vmul.f32 %v204, %v243
      %v276 = vmul.f32 %v205, %v243
      %v277 = vmul.f32 %v206, %v243
      %v278 = vmul.f32 %v207, %v243
      %v279 = vmul.f32 %v208, %v243
      %v280 = vmul.f32 %v209, %v243
      %v281 = vmul.f32 %v210, %v243
      %v282 = vmul.f32 %v211, %v243
      %v283 = vmul.f32 %v212, %v243
      %v284 = vmul.f32 %v213, %v243
      %v285 = vmul.f32 %v214, %v243
      %v286 = vmul.f32 %v215, %v243
      %v287 = vmul.f32 %v216, %v243
      %v288 = vmul.f32 %v217, %v243
      %v289 = vmul.f32 %v218, %v243
      %v290 = vmul.f32 %v219, %v243
      %v291 = vmul.f32 %v220, %v243
      %v292 = vmul.f32 %v221, %v243
      %v293 = vmul.f32 %v222, %v243
      %v294 = vmul.f32 %v223, %v243
      %v295 = vmul.f32 %v224, %v243
      %v296 = vmul.f32 %v225, %v243
      %v297 = vmul.f32 %v226, %v243
      %v298 = vmul.f32 %v227, %v243
      %v299 = vmul.f32 %v228, %v243
      %v300 = vmul.f32 %v229, %v243
      %v301 = vmul.f32 %v230, %v243
      %v302 = vmul.f32 %v231, %v243
      %v303 = vmul.f32 %v232, %v243
      %v304 = vmul.f32 %v233, %v243
      %v305 = vmul.f32 %v234, %v243
      %v306 = vmul.f32 %v235, %v243
      %v307 = vmul.f32 %v236, %v243
      %v308 = vmul.f32 %v237, %v243
      %v309 = vld [vmem:[%s2] sm:$0x1]
      %v311 = vlaneseq
      %v312 = vshrl.u32 %v311, 7
      %v313 = vsub.s32 0, %v312
      %v314 = vrot.slane %v309, %v313
      %v316 = vadd.f32 %v245, %v314
      %v317 = vadd.f32 %v246, %v314
      %v318 = vadd.f32 %v247, %v314
      %v319 = vadd.f32 %v248, %v314
      %v320 = vadd.f32 %v249, %v314
      %v321 = vadd.f32 %v250, %v314
      %v322 = vadd.f32 %v251, %v314
      %v323 = vadd.f32 %v252, %v314
      %v324 = vadd.f32 %v253, %v314
      %v325 = vadd.f32 %v254, %v314
      %v326 = vadd.f32 %v255, %v314
      %v327 = vadd.f32 %v256, %v314
      %v328 = vadd.f32 %v257, %v314
      %v329 = vadd.f32 %v258, %v314
      %v330 = vadd.f32 %v259, %v314
      %v331 = vadd.f32 %v260, %v314
      %v332 = vadd.f32 %v261, %v314
      %v333 = vadd.f32 %v262, %v314
      %v334 = vadd.f32 %v263, %v314
      %v335 = vadd.f32 %v264, %v314
      %v336 = vadd.f32 %v265, %v314
      %v337 = vadd.f32 %v266, %v314
      %v338 = vadd.f32 %v267, %v314
      %v339 = vadd.f32 %v268, %v314
      %v340 = vadd.f32 %v269, %v314
      %v341 = vadd.f32 %v270, %v314
      %v342 = vadd.f32 %v271, %v314
      %v343 = vadd.f32 %v272, %v314
      %v344 = vadd.f32 %v273, %v314
      %v345 = vadd.f32 %v274, %v314
      %v346 = vadd.f32 %v275, %v314
      %v347 = vadd.f32 %v276, %v314
      %v348 = vadd.f32 %v277, %v314
      %v349 = vadd.f32 %v278, %v314
      %v350 = vadd.f32 %v279, %v314
      %v351 = vadd.f32 %v280, %v314
      %v352 = vadd.f32 %v281, %v314
      %v353 = vadd.f32 %v282, %v314
      %v354 = vadd.f32 %v283, %v314
      %v355 = vadd.f32 %v284, %v314
      %v356 = vadd.f32 %v285, %v314
      %v357 = vadd.f32 %v286, %v314
      %v358 = vadd.f32 %v287, %v314
      %v359 = vadd.f32 %v288, %v314
      %v360 = vadd.f32 %v289, %v314
      %v361 = vadd.f32 %v290, %v314
      %v362 = vadd.f32 %v291, %v314
      %v363 = vadd.f32 %v292, %v314
      %v364 = vadd.f32 %v293, %v314
      %v365 = vadd.f32 %v294, %v314
      %v366 = vadd.f32 %v295, %v314
      %v367 = vadd.f32 %v296, %v314
      %v368 = vadd.f32 %v297, %v314
      %v369 = vadd.f32 %v298, %v314
      %v370 = vadd.f32 %v299, %v314
      %v371 = vadd.f32 %v300, %v314
      %v372 = vadd.f32 %v301, %v314
      %v373 = vadd.f32 %v302, %v314
      %v374 = vadd.f32 %v303, %v314
      %v375 = vadd.f32 %v304, %v314
      %v376 = vadd.f32 %v305, %v314
      %v377 = vadd.f32 %v306, %v314
      %v378 = vadd.f32 %v307, %v314
      %v379 = vadd.f32 %v308, %v314
      %v380 = vmax.f32 %v316, 0.0
      %v381 = vmax.f32 %v317, 0.0
      %v382 = vmax.f32 %v318, 0.0
      %v383 = vmax.f32 %v319, 0.0
      %v384 = vmax.f32 %v320, 0.0
      %v385 = vmax.f32 %v321, 0.0
      %v386 = vmax.f32 %v322, 0.0
      %v387 = vmax.f32 %v323, 0.0
      %v388 = vmax.f32 %v324, 0.0
      %v389 = vmax.f32 %v325, 0.0
      %v390 = vmax.f32 %v326, 0.0
      %v391 = vmax.f32 %v327, 0.0
      %v392 = vmax.f32 %v328, 0.0
      %v393 = vmax.f32 %v329, 0.0
      %v394 = vmax.f32 %v330, 0.0
      %v395 = vmax.f32 %v331, 0.0
      %v396 = vmax.f32 %v332, 0.0
      %v397 = vmax.f32 %v333, 0.0
      %v398 = vmax.f32 %v334, 0.0
      %v399 = vmax.f32 %v335, 0.0
      %v400 = vmax.f32 %v336, 0.0
      %v401 = vmax.f32 %v337, 0.0
      %v402 = vmax.f32 %v338, 0.0
      %v403 = vmax.f32 %v339, 0.0
      %v404 = vmax.f32 %v340, 0.0
      %v405 = vmax.f32 %v341, 0.0
      %v406 = vmax.f32 %v342, 0.0
      %v407 = vmax.f32 %v343, 0.0
      %v408 = vmax.f32 %v344, 0.0
      %v409 = vmax.f32 %v345, 0.0
      %v410 = vmax.f32 %v346, 0.0
      %v411 = vmax.f32 %v347, 0.0
      %v412 = vmax.f32 %v348, 0.0
      %v413 = vmax.f32 %v349, 0.0
      %v414 = vmax.f32 %v350, 0.0
      %v415 = vmax.f32 %v351, 0.0
      %v416 = vmax.f32 %v352, 0.0
      %v417 = vmax.f32 %v353, 0.0
      %v418 = vmax.f32 %v354, 0.0
      %v419 = vmax.f32 %v355, 0.0
      %v420 = vmax.f32 %v356, 0.0
      %v421 = vmax.f32 %v357, 0.0
      %v422 = vmax.f32 %v358, 0.0
      %v423 = vmax.f32 %v359, 0.0
      %v424 = vmax.f32 %v360, 0.0
      %v425 = vmax.f32 %v361, 0.0
      %v426 = vmax.f32 %v362, 0.0
      %v427 = vmax.f32 %v363, 0.0
      %v428 = vmax.f32 %v364, 0.0
      %v429 = vmax.f32 %v365, 0.0
      %v430 = vmax.f32 %v366, 0.0
      %v431 = vmax.f32 %v367, 0.0
      %v432 = vmax.f32 %v368, 0.0
      %v433 = vmax.f32 %v369, 0.0
      %v434 = vmax.f32 %v370, 0.0
      %v435 = vmax.f32 %v371, 0.0
      %v436 = vmax.f32 %v372, 0.0
      %v437 = vmax.f32 %v373, 0.0
      %v438 = vmax.f32 %v374, 0.0
      %v439 = vmax.f32 %v375, 0.0
      %v440 = vmax.f32 %v376, 0.0
      %v441 = vmax.f32 %v377, 0.0
      %v442 = vmax.f32 %v378, 0.0
      %v443 = vmax.f32 %v379, 0.0
      %vm444 = vcmask 64512
      %445 = vst.msk [vmem:[%s172] sm:$0xff] %vm444, %v380
      %446 = vst.msk [vmem:[%s172 + $0x8] sm:$0xff] %vm444, %v381
      %447 = vst.msk [vmem:[%s172 + $0x10] sm:$0xff] %vm444, %v382
      %448 = vst.msk [vmem:[%s172 + $0x18] sm:$0xff] %vm444, %v383
      %449 = vst.msk [vmem:[%s172 + $0x20] sm:$0xff] %vm444, %v384
      %450 = vst.msk [vmem:[%s172 + $0x28] sm:$0xff] %vm444, %v385
      %451 = vst.msk [vmem:[%s172 + $0x30] sm:$0xff] %vm444, %v386
      %452 = vst.msk [vmem:[%s172 + $0x38] sm:$0xff] %vm444, %v387
      %453 = vst.msk [vmem:[%s172 + $0x40] sm:$0xff] %vm444, %v388
      %454 = vst.msk [vmem:[%s172 + $0x48] sm:$0xff] %vm444, %v389
      %455 = vst.msk [vmem:[%s172 + $0x50] sm:$0xff] %vm444, %v390
      %456 = vst.msk [vmem:[%s172 + $0x58] sm:$0xff] %vm444, %v391
      %457 = vst.msk [vmem:[%s172 + $0x60] sm:$0xff] %vm444, %v392
      %458 = vst.msk [vmem:[%s172 + $0x68] sm:$0xff] %vm444, %v393
      %459 = vst.msk [vmem:[%s172 + $0x70] sm:$0xff] %vm444, %v394
      %460 = vst.msk [vmem:[%s172 + $0x78] sm:$0xff] %vm444, %v395
      %461 = vst.msk [vmem:[%s172 + $0x80] sm:$0xff] %vm444, %v396
      %462 = vst.msk [vmem:[%s172 + $0x88] sm:$0xff] %vm444, %v397
      %463 = vst.msk [vmem:[%s172 + $0x90] sm:$0xff] %vm444, %v398
      %464 = vst.msk [vmem:[%s172 + $0x98] sm:$0xff] %vm444, %v399
      %465 = vst.msk [vmem:[%s172 + $0xa0] sm:$0xff] %vm444, %v400
      %466 = vst.msk [vmem:[%s172 + $0xa8] sm:$0xff] %vm444, %v401
      %467 = vst.msk [vmem:[%s172 + $0xb0] sm:$0xff] %vm444, %v402
      %468 = vst.msk [vmem:[%s172 + $0xb8] sm:$0xff] %vm444, %v403
      %469 = vst.msk [vmem:[%s172 + $0xc0] sm:$0xff] %vm444, %v404
      %470 = vst.msk [vmem:[%s172 + $0xc8] sm:$0xff] %vm444, %v405
      %471 = vst.msk [vmem:[%s172 + $0xd0] sm:$0xff] %vm444, %v406
      %472 = vst.msk [vmem:[%s172 + $0xd8] sm:$0xff] %vm444, %v407
      %473 = vst.msk [vmem:[%s172 + $0xe0] sm:$0xff] %vm444, %v408
      %474 = vst.msk [vmem:[%s172 + $0xe8] sm:$0xff] %vm444, %v409
      %475 = vst.msk [vmem:[%s172 + $0xf0] sm:$0xff] %vm444, %v410
      %476 = vst.msk [vmem:[%s172 + $0xf8] sm:$0xff] %vm444, %v411
      %477 = vst.msk [vmem:[%s172 + $0x100] sm:$0xff] %vm444, %v412
      %478 = vst.msk [vmem:[%s172 + $0x108] sm:$0xff] %vm444, %v413
      %479 = vst.msk [vmem:[%s172 + $0x110] sm:$0xff] %vm444, %v414
      %480 = vst.msk [vmem:[%s172 + $0x118] sm:$0xff] %vm444, %v415
      %481 = vst.msk [vmem:[%s172 + $0x120] sm:$0xff] %vm444, %v416
      %482 = vst.msk [vmem:[%s172 + $0x128] sm:$0xff] %vm444, %v417
      %483 = vst.msk [vmem:[%s172 + $0x130] sm:$0xff] %vm444, %v418
      %484 = vst.msk [vmem:[%s172 + $0x138] sm:$0xff] %vm444, %v419
      %485 = vst.msk [vmem:[%s172 + $0x140] sm:$0xff] %vm444, %v420
      %486 = vst.msk [vmem:[%s172 + $0x148] sm:$0xff] %vm444, %v421
      %487 = vst.msk [vmem:[%s172 + $0x150] sm:$0xff] %vm444, %v422
      %488 = vst.msk [vmem:[%s172 + $0x158] sm:$0xff] %vm444, %v423
      %489 = vst.msk [vmem:[%s172 + $0x160] sm:$0xff] %vm444, %v424
      %490 = vst.msk [vmem:[%s172 + $0x168] sm:$0xff] %vm444, %v425
      %491 = vst.msk [vmem:[%s172 + $0x170] sm:$0xff] %vm444, %v426
      %492 = vst.msk [vmem:[%s172 + $0x178] sm:$0xff] %vm444, %v427
      %493 = vst.msk [vmem:[%s172 + $0x180] sm:$0xff] %vm444, %v428
      %494 = vst.msk [vmem:[%s172 + $0x188] sm:$0xff] %vm444, %v429
      %495 = vst.msk [vmem:[%s172 + $0x190] sm:$0xff] %vm444, %v430
      %496 = vst.msk [vmem:[%s172 + $0x198] sm:$0xff] %vm444, %v431
      %497 = vst.msk [vmem:[%s172 + $0x1a0] sm:$0xff] %vm444, %v432
      %498 = vst.msk [vmem:[%s172 + $0x1a8] sm:$0xff] %vm444, %v433
      %499 = vst.msk [vmem:[%s172 + $0x1b0] sm:$0xff] %vm444, %v434
      %500 = vst.msk [vmem:[%s172 + $0x1b8] sm:$0xff] %vm444, %v435
      %501 = vst.msk [vmem:[%s172 + $0x1c0] sm:$0xff] %vm444, %v436
      %502 = vst.msk [vmem:[%s172 + $0x1c8] sm:$0xff] %vm444, %v437
      %503 = vst.msk [vmem:[%s172 + $0x1d0] sm:$0xff] %vm444, %v438
      %504 = vst.msk [vmem:[%s172 + $0x1d8] sm:$0xff] %vm444, %v439
      %505 = vst.msk [vmem:[%s172 + $0x1e0] sm:$0xff] %vm444, %v440
      %506 = vst.msk [vmem:[%s172 + $0x1e8] sm:$0xff] %vm444, %v441
      %507 = vst.msk [vmem:[%s172 + $0x1f0] sm:$0xff] %vm444, %v442
      %508 = vst.msk [vmem:[%s172 + $0x1f8] sm:$0xff] %vm444, %v443
      %s509 = smul.u32 64, %s14
      %p510 = scmp.lt.s32.totalorder %s509, 255
      %s511 = scalar_select %p510, %s509, 255
      %s512 = smul.addr %s511, 8
      %s513 = scalar_lea.vmem %s3, %s512
      // Predicated region
      $region33: #{deconv_block.7} parent=31 // pred_check
        %p514 = pneg %p100
      $region34: #{deconv_block.7} parent=31 // pred_check_branch
        %516 = sbr.rel (%p514) target = $region36
      $region35: #{deconv_block.7} parent=31 // pred_region
        %s517 = smul.u32 64, %s14
      $region36: #{deconv_block.7} parent=31 // pred_fallthru
        _
    $region32: #{deconv_block.7} parent=5 // pred_fallthru
      _
    %p518 = scmp.le.s32.totalorder 2, %s9
    // Predicated region
    $region37: #{deconv_block.7} parent=5 // pred_check
      %p519 = pneg %p518
    $region38: #{deconv_block.7} parent=5 // pred_check_branch
      %521 = sbr.rel (%p519) target = $region40
    $region39: #{deconv_block.7} parent=5 // pred_region
      %s522 = ssub.s32 %s9, 2
      // Predicated region
      $region41: #{deconv_block.7} parent=39 // pred_check
        %p523 = pneg %p106
      $region42: #{deconv_block.7} parent=39 // pred_check_branch
        %525 = sbr.rel (%p523) target = $region44
      $region43: #{deconv_block.7} parent=39 // pred_region
        %s526 = smul.u32 64, %s15
        %p527 = scmp.lt.s32.totalorder %s526, 255
        %s528 = scalar_select %p527, %s526, 255
        %s529 = smul.addr %s528, 8
        %s530 = scalar_lea.vmem %s3, %s529
      $region44: #{deconv_block.7} parent=39 // pred_fallthru
        _
    $region40: #{deconv_block.7} parent=5 // pred_fallthru
      _
  $region6: #{deconv_block.7} parent=0 // loop_footer
    %s13 = sadd.s32 1, %s9
  $region7: #{deconv_block.7} parent=0 // loop_footer_branch
    %8 = sbr.rel target = $region3
  $region8: #{deconv_block.7} parent=0 // loop_exit
    _

</llo_original>
